<compile_context>
chip_gen: v7x
topology: tpu7x:2x2x1
jax: 0.10.0
libtpu: 0.0.40
codegen_flags: <defaults>
</compile_context>

<pallas_src>
import functools

import jax
import jax.numpy as jnp
from jax.experimental import pallas as pl
from jax.experimental.pallas import tpu as pltpu

GN_GROUPS = 4
GN_EPS = 1e-5
SHUFFLE_GROUPS = 3


# ----------------------------------------------------------------------------
# helpers
# ----------------------------------------------------------------------------
def _round_up(x, m):
    return (x + m - 1) // m * m


def _choose_tb(batch, per_batch_bytes, target_bytes=2 * 1024 * 1024):
    """Batch elements per grid step: biggest block <= ~2 MiB (double-buffered
    in+out blocks stay well inside v7x VMEM).  The branch grid axis already
    gives >= 3 parallel steps, so no extra splitting for megacore is needed."""
    cap = max(1, min(batch, target_bytes // max(per_batch_bytes, 1)))
    for tb in range(cap, 0, -1):
        if batch % tb == 0:
            return tb
    return 1


def _activation(z):
    # torch.where((z>=-3)&(z<=3), Hardswish(z), clamp(z,0,6) + 0.01*clamp(z,max=0))
    hsw = z * jnp.clip(z + 3.0, 0.0, 6.0) * (1.0 / 6.0)
    oth = jnp.clip(z, 0.0, 6.0) + 0.01 * jnp.minimum(z, 0.0)
    return jnp.where((z >= -3.0) & (z <= 3.0), hsw, oth)


def _shuffle_perm(c, groups=SHUFFLE_GROUPS):
    """channel_shuffle(groups) as a static row permutation: out[i] = in[perm[i]]."""
    if c % groups:
        return jnp.arange(c)
    return jnp.arange(c).reshape(groups, c // groups).T.reshape(-1)


# ----------------------------------------------------------------------------
# Pallas kernel 1: fused 1x1 conv + GroupNorm + activation (all branches)
# ----------------------------------------------------------------------------
def _pw_gn_act_kernel(x_ref, pk_ref, o_ref, *, cin, groups, cpg, hw_true, eps):
    # x_ref: (TB, cin, HWp)  -- shared across branches
    # pk_ref: (1, cout, cin+3+groups) = [W | b | gamma | beta | G]  -- per branch
    # o_ref: (1, TB, cout, HWp)
    tb = x_ref.shape[0]
    hwp = x_ref.shape[2]

    pk = pk_ref[0]
    wmat = pk[:, 0:cin]                           # (cout, cin)
    bcol = pk[:, cin:cin + 1]                     # (cout, 1)
    gam = pk[:, cin + 1:cin + 2]                  # (cout, 1)
    bet = pk[:, cin + 2:cin + 3]                  # (cout, 1)
    gmat = pk[:, cin + 3:cin + 3 + groups]        # (cout, groups) one-hot group map

    inv_n = 1.0 / (cpg * hw_true)
    need_mask = hwp != hw_true
    if need_mask:
        lane = jax.lax.broadcasted_iota(jnp.int32, (1, hwp), 1)
        lane_ok = lane < hw_true

    for t in range(tb):                           # TB batch elems per grid step
        x = x_ref[t]                              # (cin, HWp)

        # 1x1 conv as broadcast-FMA on the VPU (K = cin is tiny; MXU not worth it)
        acc = wmat[:, 0:1] * x[0:1, :]
        for c in range(1, cin):
            acc = acc + wmat[:, c:c + 1] * x[c:c + 1, :]
        y = acc + bcol                            # (cout, HWp)

        if need_mask:                             # zero padded lanes for exact GN stats
            y = jnp.where(lane_ok, y, 0.0)

        # GroupNorm: per-channel sums -> per-group stats via one-hot map -> back per-channel
        csum = jnp.sum(y, axis=1, keepdims=True)                       # (cout, 1)
        c2sum = jnp.sum(y * y, axis=1, keepdims=True)                  # (cout, 1)
        gmean = jnp.sum(gmat * csum, axis=0, keepdims=True) * inv_n    # (1, groups)
        gms = jnp.sum(gmat * c2sum, axis=0, keepdims=True) * inv_n     # (1, groups)
        ginv = jax.lax.rsqrt(gms - gmean * gmean + eps)                # (1, groups)
        mean_c = jnp.sum(gmat * gmean, axis=1, keepdims=True)          # (cout, 1)
        inv_c = jnp.sum(gmat * ginv, axis=1, keepdims=True)            # (cout, 1)

        z = (y - mean_c) * (inv_c * gam) + bet
        o_ref[0, t] = _activation(z)


def pointwise_gn_act_branches(x_nchw, w_list, b_list, g_list, be_list,
                              *, groups=GN_GROUPS, eps=GN_EPS):
    """Stage 1 for all branches in ONE pallas_call.  Returns (nbr, B, cout, H, W)."""
    B, cin, H, Wd = x_nchw.shape
    nbr = len(w_list)
    cout = w_list[0].shape[0]
    hw = H * Wd
    hwp = _round_up(hw, 128)                      # keep lanes 128-aligned (no masked vst)

    x = x_nchw.reshape(B, cin, hw).astype(jnp.float32)
    if hwp != hw:
        x = jnp.pad(x, ((0, 0), (0, 0), (0, hwp - hw)))

    cpg = cout // groups
    gmat = (jnp.arange(cout)[:, None] // cpg ==
            jnp.arange(groups)[None, :]).astype(jnp.float32)

    pks = []
    for w, b, g, be in zip(w_list, b_list, g_list, be_list):
        pks.append(jnp.concatenate(
            [w.astype(jnp.float32),
             b.reshape(cout, 1).astype(jnp.float32),
             g.reshape(cout, 1).astype(jnp.float32),
             be.reshape(cout, 1).astype(jnp.float32),
             gmat], axis=1))
    pk = jnp.stack(pks, axis=0)                   # (nbr, cout, cin+3+groups)
    pw = pk.shape[-1]

    tb = _choose_tb(B, (cin + cout) * hwp * 4)
    kern = functools.partial(_pw_gn_act_kernel, cin=cin, groups=groups,
                             cpg=cpg, hw_true=hw, eps=eps)

    out = pl.pallas_call(
        kern,
        out_shape=jax.ShapeDtypeStruct((nbr, B, cout, hwp), jnp.float32),
        grid_spec=pltpu.PrefetchScalarGridSpec(
            num_scalar_prefetch=0,
            grid=(nbr, B // tb),
            in_specs=[pl.BlockSpec((tb, cin, hwp), lambda br, bi: (bi, 0, 0)),
                      pl.BlockSpec((1, cout, pw), lambda br, bi: (br, 0, 0))],
            out_specs=pl.BlockSpec((1, tb, cout, hwp),
                                   lambda br, bi: (br, bi, 0, 0))),
        compiler_params=pltpu.CompilerParams(
            dimension_semantics=("parallel", "parallel")),
    )(x, pk)

    if hwp != hw:
        out = out[..., :hw]
    return out.reshape(nbr, B, cout, H, Wd)


# ----------------------------------------------------------------------------
# Pallas kernel 2: fused 1x1 conv + GroupNorm + act + channel_shuffle + scSE
# ----------------------------------------------------------------------------
def _pw_gn_act_shuffle_scse_kernel(h_ref, pk_ref, o_ref, *, cmid, groups, cpg,
                                   c_red, hw_true, eps):
    # h_ref: (1, TB, C, HWp)
    # pk_ref: (1, C, C+3+groups+2*c_red+1)
    #         = [W_l2[perm] | b[perm] | gamma[perm] | beta[perm] | G[perm]
    #            | fc1.T | fc2 | sSE 1x1 conv]
    #   (the channel_shuffle permutation is folded into the first five blocks,
    #    so the conv/GN/act output below is already in shuffled channel order)
    # o_ref: (1, TB, C, HWp)
    tb = h_ref.shape[1]
    hwp = h_ref.shape[3]

    pk = pk_ref[0]
    off = 0
    wmat = pk[:, off:off + cmid]; off += cmid      # (C, C) permuted layer2 weight
    bcol = pk[:, off:off + 1]; off += 1
    gam = pk[:, off:off + 1]; off += 1
    bet = pk[:, off:off + 1]; off += 1
    gmat = pk[:, off:off + groups]; off += groups  # permuted one-hot group map
    w1t = pk[:, off:off + c_red]; off += c_red     # fc1.T   (C, c_red)
    w2 = pk[:, off:off + c_red]; off += c_red      # fc2     (C, c_red)
    ws = pk[:, off:off + 1]                        # sSE 1x1 conv (C, 1)

    inv_n = 1.0 / (cpg * hw_true)
    inv_hw = 1.0 / hw_true
    need_mask = hwp != hw_true
    if need_mask:
        lane = jax.lax.broadcasted_iota(jnp.int32, (1, hwp), 1)
        lane_ok = lane < hw_true

    for t in range(tb):
        x = h_ref[0, t]                            # (C, HWp)

        # 1x1 conv as broadcast-FMA (K = C is tiny)
        acc = wmat[:, 0:1] * x[0:1, :]
        for c in range(1, cmid):
            acc = acc + wmat[:, c:c + 1] * x[c:c + 1, :]
        y = acc + bcol
        if need_mask:
            y = jnp.where(lane_ok, y, 0.0)

        # GroupNorm (group stats are permutation-invariant)
        csum = jnp.sum(y, axis=1, keepdims=True)
        c2sum = jnp.sum(y * y, axis=1, keepdims=True)
        gmean = jnp.sum(gmat * csum, axis=0, keepdims=True) * inv_n
        gms = jnp.sum(gmat * c2sum, axis=0, keepdims=True) * inv_n
        ginv = jax.lax.rsqrt(gms - gmean * gmean + eps)
        mean_c = jnp.sum(gmat * gmean, axis=1, keepdims=True)
        inv_c = jnp.sum(gmat * ginv, axis=1, keepdims=True)

        u = _activation((y - mean_c) * (inv_c * gam) + bet)   # shuffled-channel order
        if need_mask:
            u = jnp.where(lane_ok, u, 0.0)

        # cSE: spatial mean -> fc1(no bias)+ReLU -> fc2(no bias)+Hardsigmoid
        mean_u = jnp.sum(u, axis=1, keepdims=True) * inv_hw                     # (C, 1)
        hred = jnp.maximum(jnp.sum(w1t * mean_u, axis=0, keepdims=True), 0.0)   # (1, c_red)
        ycse = jnp.clip(jnp.sum(w2 * hred, axis=1, keepdims=True) * (1.0 / 6.0)
                        + 0.5, 0.0, 1.0)                                        # (C, 1)
        # sSE: 1x1 conv (C->1, no bias) + sigmoid (kept on the reduced row only)
        q = jax.nn.sigmoid(jnp.sum(ws * u, axis=0, keepdims=True))              # (1, HWp)
        # fused combine: u*(y+q) == u*y + u*q (one fewer full-slab multiply)
        o_ref[0, t] = u * (ycse + q)


def fused_stage2_branches(h_stack, params, *, groups=GN_GROUPS,
                          shuffle_groups=SHUFFLE_GROUPS, eps=GN_EPS):
    """layer2 + GN + act + channel_shuffle + scSE for all branches, one pallas_call.

    h_stack: (nbr, B, C, H, W) depthwise-conv outputs.  Returns same shape."""
    nbr, B, C, H, Wd = h_stack.shape
    hw = H * Wd
    hwp = _round_up(hw, 128)
    c_red = params[0]["se_fc1"].shape[0]

    h = h_stack.reshape(nbr, B, C, hw).astype(jnp.float32)
    if hwp != hw:
        h = jnp.pad(h, ((0, 0), (0, 0), (0, 0), (0, hwp - hw)))

    cpg = C // groups
    gmat = (jnp.arange(C)[:, None] // cpg ==
            jnp.arange(groups)[None, :]).astype(jnp.float32)
    perm = _shuffle_perm(C, shuffle_groups)       # channel_shuffle folded into weights

    pks = []
    for p in params:
        pks.append(jnp.concatenate(
            [p["w_l2"].astype(jnp.float32)[perm],
             p["b_l2"].astype(jnp.float32)[perm].reshape(C, 1),
             p["gn_g"].astype(jnp.float32)[perm].reshape(C, 1),
             p["gn_b"].astype(jnp.float32)[perm].reshape(C, 1),
             gmat[perm],
             p["se_fc1"].T.astype(jnp.float32),
             p["se_fc2"].astype(jnp.float32),
             p["se_conv"].reshape(C, 1).astype(jnp.float32)], axis=1))
    pk = jnp.stack(pks, axis=0)                   # (nbr, C, C+3+groups+2*c_red+1)
    pw = pk.shape[-1]

    tb = _choose_tb(B, 2 * C * hwp * 4)
    kern = functools.partial(_pw_gn_act_shuffle_scse_kernel, cmid=C, groups=groups,
                             cpg=cpg, c_red=c_red, hw_true=hw, eps=eps)

    out = pl.pallas_call(
        kern,
        out_shape=jax.ShapeDtypeStruct((nbr, B, C, hwp), jnp.float32),
        grid_spec=pltpu.PrefetchScalarGridSpec(
            num_scalar_prefetch=0,
            grid=(nbr, B // tb),
            in_specs=[pl.BlockSpec((1, tb, C, hwp), lambda br, bi: (br, bi, 0, 0)),
                      pl.BlockSpec((1, C, pw), lambda br, bi: (br, 0, 0))],
            out_specs=pl.BlockSpec((1, tb, C, hwp),
                                   lambda br, bi: (br, bi, 0, 0))),
        compiler_params=pltpu.CompilerParams(
            dimension_semantics=("parallel", "parallel")),
    )(h, pk)

    if hwp != hw:
        out = out[..., :hw]
    return out.reshape(nbr, B, C, H, Wd)


# ----------------------------------------------------------------------------
# non-Pallas pieces
# ----------------------------------------------------------------------------
def _depthwise_conv(x, w, b, stride, padding, dilation):
    # TODO(synk): depthwise dilated (strided) Conv2d stays on XLA's
    # lax.conv_general_dilated; no clean single-BlockSpec Pallas tiling at these shapes.
    out = jax.lax.conv_general_dilated(
        x, w, window_strides=(stride, stride),
        padding=[(padding, padding), (padding, padding)],
        rhs_dilation=(dilation, dilation),
        dimension_numbers=("NCHW", "OIHW", "NCHW"),
        feature_group_count=x.shape[1])
    return out + b[None, :, None, None]


def _channel_shuffle(x, groups=SHUFFLE_GROUPS):
    # pure channel permutation (only used by the pure-JAX reference)
    B, C, H, Wd = x.shape
    if C % groups:
        return x
    return (x.reshape(B, groups, C // groups, H, Wd)
             .transpose(0, 2, 1, 3, 4)
             .reshape(B, C, H, Wd))


# ----------------------------------------------------------------------------
# module forward (Pallas pipeline)
# ----------------------------------------------------------------------------
def basic_block_downsample_down_forward(x, params, ss, ps):
    dils = (3, 2, 1)
    nbr = len(params)

    # stage 1: layer1 + GN + activation, all branches in one kernel
    h1 = pointwise_gn_act_branches(
        x,
        [p["w_l1"] for p in params], [p["b_l1"] for p in params],
        [p["gn_g"] for p in params], [p["gn_b"] for p in params])

    # depthwise dilated conv per branch (XLA)
    h2 = [_depthwise_conv(h1[i], params[i]["w_l3"], params[i]["b_l3"],
                          ss[i], ps[i], dils[i]) for i in range(nbr)]
    assert len({tuple(h.shape) for h in h2}) == 1, \
        "branch outputs must share a spatial shape for the channel concat"
    h2 = jnp.stack(h2, axis=0)                       # (nbr, B, C, H2, W2)

    # stage 2: layer2 + GN + act + channel_shuffle + scSE, all branches, one kernel
    out = fused_stage2_branches(h2, params)          # (nbr, B, C, H2, W2)

    nbr_, B, C, H2, W2 = out.shape
    # concat([d1, d2, d3], dim=1)
    return out.transpose(1, 0, 2, 3, 4).reshape(B, nbr_ * C, H2, W2)


# ----------------------------------------------------------------------------
# pure-JAX reference (mirrors PyTorch semantics)
# ----------------------------------------------------------------------------
def _ref_pointwise_gn_act(x, w, b, gamma, beta, groups=GN_GROUPS, eps=GN_EPS):
    B, cin, H, Wd = x.shape
    cout = w.shape[0]
    y = jnp.einsum("oc,bchw->bohw", w, x) + b[None, :, None, None]
    yg = y.reshape(B, groups, cout // groups, H, Wd)
    mean = jnp.mean(yg, axis=(2, 3, 4), keepdims=True)
    msq = jnp.mean(yg * yg, axis=(2, 3, 4), keepdims=True)
    inv = jax.lax.rsqrt(msq - mean * mean + eps)
    yn = ((yg - mean) * inv).reshape(B, cout, H, Wd)
    yn = yn * gamma[None, :, None, None] + beta[None, :, None, None]
    return _activation(yn)


def _ref_scse(u, w_fc1, w_fc2, w_conv):
    mean = u.mean(axis=(2, 3))
    h = jnp.maximum(mean @ w_fc1.T, 0.0)
    y = jnp.clip((h @ w_fc2.T) / 6.0 + 0.5, 0.0, 1.0)
    q = jax.nn.sigmoid(jnp.einsum("c,bchw->bhw", w_conv, u))
    return u * y[:, :, None, None] + u * q[:, None, :, :]


def _ref_branch(x, p, *, stride, padding, dilation):
    h = _ref_pointwise_gn_act(x, p["w_l1"], p["b_l1"], p["gn_g"], p["gn_b"])
    h = _depthwise_conv(h, p["w_l3"], p["b_l3"], stride, padding, dilation)
    h = _ref_pointwise_gn_act(h, p["w_l2"], p["b_l2"], p["gn_g"], p["gn_b"])
    h = _channel_shuffle(h, SHUFFLE_GROUPS)
    return _ref_scse(h, p["se_fc1"], p["se_fc2"], p["se_conv"])


def _ref_model(x, params, ss, ps):
    dils = (3, 2, 1)
    return jnp.concatenate(
        [_ref_branch(x, params[i], stride=ss[i], padding=ps[i], dilation=dils[i])
         for i in range(3)], axis=1)


# ----------------------------------------------------------------------------
if __name__ == "__main__":
    # Small shapes; C_OUT=24 is a multiple of 8 (full f32 sublanes), of 4 (GroupNorm)
    # and of 3 (channel_shuffle).  k=3, stride=1, padding=dilation keeps the three
    # branch outputs the same spatial size so the channel concat is valid.
    B, C_IN, C_OUT, H, W = 2, 8, 24, 16, 16
    ks, ss, ps = (3, 3, 3), (1, 1, 1), (3, 2, 1)
    c_red = max(1, C_OUT // 3)   # SeModule reduction=3

    key = jax.random.PRNGKey(0)
    key, x_key = jax.random.split(key)
    x = jax.random.normal(x_key, (B, C_IN, H, W), dtype=jnp.float32)

    params = []
    for i in range(3):
        keys = jax.random.split(key, 12)
        key = keys[0]
        params.append(dict(
            w_l1=jax.random.normal(keys[1], (C_OUT, C_IN), jnp.float32) * 0.3,
            b_l1=jax.random.normal(keys[2], (C_OUT,), jnp.float32) * 0.1,
            w_l2=jax.random.normal(keys[3], (C_OUT, C_OUT), jnp.float32) * 0.2,
            b_l2=jax.random.normal(keys[4], (C_OUT,), jnp.float32) * 0.1,
            w_l3=jax.random.normal(keys[5], (C_OUT, 1, ks[i], ks[i]), jnp.float32) * 0.3,
            b_l3=jax.random.normal(keys[6], (C_OUT,), jnp.float32) * 0.1,
            gn_g=1.0 + 0.1 * jax.random.normal(keys[7], (C_OUT,), jnp.float32),
            gn_b=0.1 * jax.random.normal(keys[8], (C_OUT,), jnp.float32),
            se_fc1=jax.random.normal(keys[9], (c_red, C_OUT), jnp.float32) * 0.3,
            se_fc2=jax.random.normal(keys[10], (C_OUT, c_red), jnp.float32) * 0.3,
            se_conv=jax.random.normal(keys[11], (C_OUT,), jnp.float32) * 0.3,
        ))

    fwd = jax.jit(lambda xx, pp: basic_block_downsample_down_forward(xx, pp, ss, ps))
    out = jax.block_until_ready(fwd(x, params))

    ref = _ref_model(x, params, ss, ps)
    assert out.shape == (B, 3 * C_OUT, H, W), out.shape
    assert bool(jnp.allclose(out, ref, atol=1e-3, rtol=1e-3)), \
        "Pallas BasicBlock_downsample_down mismatch vs reference"

    print("KERNEL_OK")
</pallas_src>

<mosaic_0001>
module attributes {stable_mosaic.version = 11 : i64} {
  func.func @_pw_gn_act_kernel(%arg0: i32, %arg1: i32, %arg2: memref<2x8x256xf32, #tpu.memory_space<vmem>>, %arg3: memref<1x24x15xf32, #tpu.memory_space<vmem>>, %arg4: memref<1x2x24x256xf32, #tpu.memory_space<vmem>>) attributes {dimension_semantics = [#tpu.dimension_semantics<parallel>, #tpu.dimension_semantics<parallel>], iteration_bounds = array<i64: 3, 1>, scalar_prefetch = 0 : i64, scratch_operands = 0 : i64, tpu.core_type = #tpu.core_type<tc>, window_params = [{transform_indices = @transform_0, window_bounds = array<i64: 2, 8, 256>}, {transform_indices = @transform_1, window_bounds = array<i64: 1, 24, 15>}, {transform_indices = @transform_2, window_bounds = array<i64: 1, 2, 24, 256>}]} {
    %c0 = arith.constant 0 : index
    %c0_0 = arith.constant 0 : index
    %c0_1 = arith.constant 0 : index
    %0 = vector.load %arg3[%c0, %c0_0, %c0_1] : memref<1x24x15xf32, #tpu.memory_space<vmem>>, vector<1x24x15xf32>
    %1 = vector.shape_cast %0 : vector<1x24x15xf32> to vector<24x15xf32>
    %2 = vector.extract_strided_slice %1 {offsets = [0, 0], sizes = [24, 8], strides = [1, 1]} : vector<24x15xf32> to vector<24x8xf32>
    %3 = vector.extract_strided_slice %1 {offsets = [0, 8], sizes = [24, 1], strides = [1, 1]} : vector<24x15xf32> to vector<24x1xf32>
    %4 = vector.extract_strided_slice %1 {offsets = [0, 9], sizes = [24, 1], strides = [1, 1]} : vector<24x15xf32> to vector<24x1xf32>
    %5 = vector.extract_strided_slice %1 {offsets = [0, 10], sizes = [24, 1], strides = [1, 1]} : vector<24x15xf32> to vector<24x1xf32>
    %6 = vector.extract_strided_slice %1 {offsets = [0, 11], sizes = [24, 4], strides = [1, 1]} : vector<24x15xf32> to vector<24x4xf32>
    %c0_2 = arith.constant 0 : index
    %c0_3 = arith.constant 0 : index
    %c0_4 = arith.constant 0 : index
    %7 = vector.load %arg2[%c0_2, %c0_3, %c0_4] : memref<2x8x256xf32, #tpu.memory_space<vmem>>, vector<1x8x256xf32>
    %8 = vector.shape_cast %7 : vector<1x8x256xf32> to vector<8x256xf32>
    %9 = vector.extract_strided_slice %2 {offsets = [0, 0], sizes = [24, 1], strides = [1, 1]} : vector<24x8xf32> to vector<24x1xf32>
    %10 = vector.extract_strided_slice %8 {offsets = [0, 0], sizes = [1, 256], strides = [1, 1]} : vector<8x256xf32> to vector<1x256xf32>
    %11 = vector.broadcast %9 : vector<24x1xf32> to vector<24x256xf32>
    %12 = vector.broadcast %10 : vector<1x256xf32> to vector<24x256xf32>
    %13 = arith.mulf %11, %12 : vector<24x256xf32>
    %14 = vector.extract_strided_slice %2 {offsets = [0, 1], sizes = [24, 1], strides = [1, 1]} : vector<24x8xf32> to vector<24x1xf32>
    %15 = vector.extract_strided_slice %8 {offsets = [1, 0], sizes = [1, 256], strides = [1, 1]} : vector<8x256xf32> to vector<1x256xf32>
    %16 = vector.broadcast %14 : vector<24x1xf32> to vector<24x256xf32>
    %17 = vector.broadcast %15 : vector<1x256xf32> to vector<24x256xf32>
    %18 = arith.mulf %16, %17 : vector<24x256xf32>
    %19 = arith.addf %13, %18 : vector<24x256xf32>
    %20 = vector.extract_strided_slice %2 {offsets = [0, 2], sizes = [24, 1], strides = [1, 1]} : vector<24x8xf32> to vector<24x1xf32>
    %21 = vector.extract_strided_slice %8 {offsets = [2, 0], sizes = [1, 256], strides = [1, 1]} : vector<8x256xf32> to vector<1x256xf32>
    %22 = vector.broadcast %20 : vector<24x1xf32> to vector<24x256xf32>
    %23 = vector.broadcast %21 : vector<1x256xf32> to vector<24x256xf32>
    %24 = arith.mulf %22, %23 : vector<24x256xf32>
    %25 = arith.addf %19, %24 : vector<24x256xf32>
    %26 = vector.extract_strided_slice %2 {offsets = [0, 3], sizes = [24, 1], strides = [1, 1]} : vector<24x8xf32> to vector<24x1xf32>
    %27 = vector.extract_strided_slice %8 {offsets = [3, 0], sizes = [1, 256], strides = [1, 1]} : vector<8x256xf32> to vector<1x256xf32>
    %28 = vector.broadcast %26 : vector<24x1xf32> to vector<24x256xf32>
    %29 = vector.broadcast %27 : vector<1x256xf32> to vector<24x256xf32>
    %30 = arith.mulf %28, %29 : vector<24x256xf32>
    %31 = arith.addf %25, %30 : vector<24x256xf32>
    %32 = vector.extract_strided_slice %2 {offsets = [0, 4], sizes = [24, 1], strides = [1, 1]} : vector<24x8xf32> to vector<24x1xf32>
    %33 = vector.extract_strided_slice %8 {offsets = [4, 0], sizes = [1, 256], strides = [1, 1]} : vector<8x256xf32> to vector<1x256xf32>
    %34 = vector.broadcast %32 : vector<24x1xf32> to vector<24x256xf32>
    %35 = vector.broadcast %33 : vector<1x256xf32> to vector<24x256xf32>
    %36 = arith.mulf %34, %35 : vector<24x256xf32>
    %37 = arith.addf %31, %36 : vector<24x256xf32>
    %38 = vector.extract_strided_slice %2 {offsets = [0, 5], sizes = [24, 1], strides = [1, 1]} : vector<24x8xf32> to vector<24x1xf32>
    %39 = vector.extract_strided_slice %8 {offsets = [5, 0], sizes = [1, 256], strides = [1, 1]} : vector<8x256xf32> to vector<1x256xf32>
    %40 = vector.broadcast %38 : vector<24x1xf32> to vector<24x256xf32>
    %41 = vector.broadcast %39 : vector<1x256xf32> to vector<24x256xf32>
    %42 = arith.mulf %40, %41 : vector<24x256xf32>
    %43 = arith.addf %37, %42 : vector<24x256xf32>
    %44 = vector.extract_strided_slice %2 {offsets = [0, 6], sizes = [24, 1], strides = [1, 1]} : vector<24x8xf32> to vector<24x1xf32>
    %45 = vector.extract_strided_slice %8 {offsets = [6, 0], sizes = [1, 256], strides = [1, 1]} : vector<8x256xf32> to vector<1x256xf32>
    %46 = vector.broadcast %44 : vector<24x1xf32> to vector<24x256xf32>
    %47 = vector.broadcast %45 : vector<1x256xf32> to vector<24x256xf32>
    %48 = arith.mulf %46, %47 : vector<24x256xf32>
    %49 = arith.addf %43, %48 : vector<24x256xf32>
    %50 = vector.extract_strided_slice %2 {offsets = [0, 7], sizes = [24, 1], strides = [1, 1]} : vector<24x8xf32> to vector<24x1xf32>
    %51 = vector.extract_strided_slice %8 {offsets = [7, 0], sizes = [1, 256], strides = [1, 1]} : vector<8x256xf32> to vector<1x256xf32>
    %52 = vector.broadcast %50 : vector<24x1xf32> to vector<24x256xf32>
    %53 = vector.broadcast %51 : vector<1x256xf32> to vector<24x256xf32>
    %54 = arith.mulf %52, %53 : vector<24x256xf32>
    %55 = arith.addf %49, %54 : vector<24x256xf32>
    %56 = vector.broadcast %3 : vector<24x1xf32> to vector<24x256xf32>
    %57 = arith.addf %55, %56 : vector<24x256xf32>
    %cst = arith.constant dense<0.000000e+00> : vector<24xf32>
    %58 = vector.multi_reduction <add>, %57, %cst [1] : vector<24x256xf32> to vector<24xf32>
    %59 = vector.shape_cast %58 : vector<24xf32> to vector<24x1xf32>
    %60 = arith.mulf %57, %57 : vector<24x256xf32>
    %cst_5 = arith.constant dense<0.000000e+00> : vector<24xf32>
    %61 = vector.multi_reduction <add>, %60, %cst_5 [1] : vector<24x256xf32> to vector<24xf32>
    %62 = vector.shape_cast %61 : vector<24xf32> to vector<24x1xf32>
    %63 = vector.broadcast %59 : vector<24x1xf32> to vector<24x4xf32>
    %64 = arith.mulf %6, %63 : vector<24x4xf32>
    %cst_6 = arith.constant dense<0.000000e+00> : vector<4xf32>
    %65 = vector.multi_reduction <add>, %64, %cst_6 [0] : vector<24x4xf32> to vector<4xf32>
    %66 = vector.shape_cast %65 : vector<4xf32> to vector<1x4xf32>
    %cst_7 = arith.constant 6.51041686E-4 : f32
    %67 = vector.broadcast %cst_7 : f32 to vector<1x4xf32>
    %68 = arith.mulf %66, %67 : vector<1x4xf32>
    %69 = vector.broadcast %62 : vector<24x1xf32> to vector<24x4xf32>
    %70 = arith.mulf %6, %69 : vector<24x4xf32>
    %cst_8 = arith.constant dense<0.000000e+00> : vector<4xf32>
    %71 = vector.multi_reduction <add>, %70, %cst_8 [0] : vector<24x4xf32> to vector<4xf32>
    %72 = vector.shape_cast %71 : vector<4xf32> to vector<1x4xf32>
    %cst_9 = arith.constant 6.51041686E-4 : f32
    %73 = vector.broadcast %cst_9 : f32 to vector<1x4xf32>
    %74 = arith.mulf %72, %73 : vector<1x4xf32>
    %75 = arith.mulf %68, %68 : vector<1x4xf32>
    %76 = arith.subf %74, %75 : vector<1x4xf32>
    %cst_10 = arith.constant 9.99999974E-6 : f32
    %77 = vector.broadcast %cst_10 : f32 to vector<1x4xf32>
    %78 = arith.addf %76, %77 : vector<1x4xf32>
    %79 = math.rsqrt %78 : vector<1x4xf32>
    %80 = vector.broadcast %68 : vector<1x4xf32> to vector<24x4xf32>
    %81 = arith.mulf %6, %80 : vector<24x4xf32>
    %cst_11 = arith.constant dense<0.000000e+00> : vector<24xf32>
    %82 = vector.multi_reduction <add>, %81, %cst_11 [1] : vector<24x4xf32> to vector<24xf32>
    %83 = vector.shape_cast %82 : vector<24xf32> to vector<24x1xf32>
    %84 = vector.broadcast %79 : vector<1x4xf32> to vector<24x4xf32>
    %85 = arith.mulf %6, %84 : vector<24x4xf32>
    %cst_12 = arith.constant dense<0.000000e+00> : vector<24xf32>
    %86 = vector.multi_reduction <add>, %85, %cst_12 [1] : vector<24x4xf32> to vector<24xf32>
    %87 = vector.shape_cast %86 : vector<24xf32> to vector<24x1xf32>
    %88 = vector.broadcast %83 : vector<24x1xf32> to vector<24x256xf32>
    %89 = arith.subf %57, %88 : vector<24x256xf32>
    %90 = arith.mulf %87, %4 : vector<24x1xf32>
    %91 = vector.broadcast %90 : vector<24x1xf32> to vector<24x256xf32>
    %92 = arith.mulf %89, %91 : vector<24x256xf32>
    %93 = vector.broadcast %5 : vector<24x1xf32> to vector<24x256xf32>
    %94 = arith.addf %92, %93 : vector<24x256xf32>
    %cst_13 = arith.constant 3.000000e+00 : f32
    %95 = vector.broadcast %cst_13 : f32 to vector<24x256xf32>
    %96 = arith.addf %94, %95 : vector<24x256xf32>
    %cst_14 = arith.constant 0.000000e+00 : f32
    %cst_15 = arith.constant 6.000000e+00 : f32
    %97 = vector.broadcast %cst_14 : f32 to vector<24x256xf32>
    %98 = arith.maximumf %97, %96 : vector<24x256xf32>
    %99 = vector.broadcast %cst_15 : f32 to vector<24x256xf32>
    %100 = arith.minimumf %99, %98 : vector<24x256xf32>
    %101 = arith.mulf %94, %100 : vector<24x256xf32>
    %cst_16 = arith.constant 0.166666672 : f32
    %102 = vector.broadcast %cst_16 : f32 to vector<24x256xf32>
    %103 = arith.mulf %101, %102 : vector<24x256xf32>
    %cst_17 = arith.constant 0.000000e+00 : f32
    %cst_18 = arith.constant 6.000000e+00 : f32
    %104 = vector.broadcast %cst_17 : f32 to vector<24x256xf32>
    %105 = arith.maximumf %104, %94 : vector<24x256xf32>
    %106 = vector.broadcast %cst_18 : f32 to vector<24x256xf32>
    %107 = arith.minimumf %106, %105 : vector<24x256xf32>
    %cst_19 = arith.constant 0.000000e+00 : f32
    %108 = vector.broadcast %cst_19 : f32 to vector<24x256xf32>
    %109 = arith.minimumf %94, %108 : vector<24x256xf32>
    %cst_20 = arith.constant 0.00999999977 : f32
    %110 = vector.broadcast %cst_20 : f32 to vector<24x256xf32>
    %111 = arith.mulf %110, %109 : vector<24x256xf32>
    %112 = arith.addf %107, %111 : vector<24x256xf32>
    %cst_21 = arith.constant -3.000000e+00 : f32
    %113 = vector.broadcast %cst_21 : f32 to vector<24x256xf32>
    %114 = arith.cmpf oge, %94, %113 : vector<24x256xf32>
    %cst_22 = arith.constant 3.000000e+00 : f32
    %115 = vector.broadcast %cst_22 : f32 to vector<24x256xf32>
    %116 = arith.cmpf ole, %94, %115 : vector<24x256xf32>
    %117 = arith.andi %114, %116 : vector<24x256xi1>
    %118 = arith.select %117, %103, %112 : vector<24x256xi1>, vector<24x256xf32>
    %c0_23 = arith.constant 0 : index
    %c0_24 = arith.constant 0 : index
    %c0_25 = arith.constant 0 : index
    %c0_26 = arith.constant 0 : index
    %119 = vector.load %arg4[%c0_23, %c0_24, %c0_25, %c0_26] : memref<1x2x24x256xf32, #tpu.memory_space<vmem>>, vector<1x1x24x256xf32>
    %120 = vector.shape_cast %119 : vector<1x1x24x256xf32> to vector<24x256xf32>
    %121 = vector.shape_cast %118 : vector<24x256xf32> to vector<1x1x24x256xf32>
    tpu.vector_store %arg4[%c0_23, %c0_24, %c0_25, %c0_26], %121 {strides = array<i32>} : memref<1x2x24x256xf32, #tpu.memory_space<vmem>>, vector<1x1x24x256xf32>,
    %c1 = arith.constant 1 : index
    %c0_27 = arith.constant 0 : index
    %c0_28 = arith.constant 0 : index
    %122 = vector.load %arg2[%c1, %c0_27, %c0_28] : memref<2x8x256xf32, #tpu.memory_space<vmem>>, vector<1x8x256xf32>
    %123 = vector.shape_cast %122 : vector<1x8x256xf32> to vector<8x256xf32>
    %124 = vector.extract_strided_slice %2 {offsets = [0, 0], sizes = [24, 1], strides = [1, 1]} : vector<24x8xf32> to vector<24x1xf32>
    %125 = vector.extract_strided_slice %123 {offsets = [0, 0], sizes = [1, 256], strides = [1, 1]} : vector<8x256xf32> to vector<1x256xf32>
    %126 = vector.broadcast %124 : vector<24x1xf32> to vector<24x256xf32>
    %127 = vector.broadcast %125 : vector<1x256xf32> to vector<24x256xf32>
    %128 = arith.mulf %126, %127 : vector<24x256xf32>
    %129 = vector.extract_strided_slice %2 {offsets = [0, 1], sizes = [24, 1], strides = [1, 1]} : vector<24x8xf32> to vector<24x1xf32>
    %130 = vector.extract_strided_slice %123 {offsets = [1, 0], sizes = [1, 256], strides = [1, 1]} : vector<8x256xf32> to vector<1x256xf32>
    %131 = vector.broadcast %129 : vector<24x1xf32> to vector<24x256xf32>
    %132 = vector.broadcast %130 : vector<1x256xf32> to vector<24x256xf32>
    %133 = arith.mulf %131, %132 : vector<24x256xf32>
    %134 = arith.addf %128, %133 : vector<24x256xf32>
    %135 = vector.extract_strided_slice %2 {offsets = [0, 2], sizes = [24, 1], strides = [1, 1]} : vector<24x8xf32> to vector<24x1xf32>
    %136 = vector.extract_strided_slice %123 {offsets = [2, 0], sizes = [1, 256], strides = [1, 1]} : vector<8x256xf32> to vector<1x256xf32>
    %137 = vector.broadcast %135 : vector<24x1xf32> to vector<24x256xf32>
    %138 = vector.broadcast %136 : vector<1x256xf32> to vector<24x256xf32>
    %139 = arith.mulf %137, %138 : vector<24x256xf32>
    %140 = arith.addf %134, %139 : vector<24x256xf32>
    %141 = vector.extract_strided_slice %2 {offsets = [0, 3], sizes = [24, 1], strides = [1, 1]} : vector<24x8xf32> to vector<24x1xf32>
    %142 = vector.extract_strided_slice %123 {offsets = [3, 0], sizes = [1, 256], strides = [1, 1]} : vector<8x256xf32> to vector<1x256xf32>
    %143 = vector.broadcast %141 : vector<24x1xf32> to vector<24x256xf32>
    %144 = vector.broadcast %142 : vector<1x256xf32> to vector<24x256xf32>
    %145 = arith.mulf %143, %144 : vector<24x256xf32>
    %146 = arith.addf %140, %145 : vector<24x256xf32>
    %147 = vector.extract_strided_slice %2 {offsets = [0, 4], sizes = [24, 1], strides = [1, 1]} : vector<24x8xf32> to vector<24x1xf32>
    %148 = vector.extract_strided_slice %123 {offsets = [4, 0], sizes = [1, 256], strides = [1, 1]} : vector<8x256xf32> to vector<1x256xf32>
    %149 = vector.broadcast %147 : vector<24x1xf32> to vector<24x256xf32>
    %150 = vector.broadcast %148 : vector<1x256xf32> to vector<24x256xf32>
    %151 = arith.mulf %149, %150 : vector<24x256xf32>
    %152 = arith.addf %146, %151 : vector<24x256xf32>
    %153 = vector.extract_strided_slice %2 {offsets = [0, 5], sizes = [24, 1], strides = [1, 1]} : vector<24x8xf32> to vector<24x1xf32>
    %154 = vector.extract_strided_slice %123 {offsets = [5, 0], sizes = [1, 256], strides = [1, 1]} : vector<8x256xf32> to vector<1x256xf32>
    %155 = vector.broadcast %153 : vector<24x1xf32> to vector<24x256xf32>
    %156 = vector.broadcast %154 : vector<1x256xf32> to vector<24x256xf32>
    %157 = arith.mulf %155, %156 : vector<24x256xf32>
    %158 = arith.addf %152, %157 : vector<24x256xf32>
    %159 = vector.extract_strided_slice %2 {offsets = [0, 6], sizes = [24, 1], strides = [1, 1]} : vector<24x8xf32> to vector<24x1xf32>
    %160 = vector.extract_strided_slice %123 {offsets = [6, 0], sizes = [1, 256], strides = [1, 1]} : vector<8x256xf32> to vector<1x256xf32>
    %161 = vector.broadcast %159 : vector<24x1xf32> to vector<24x256xf32>
    %162 = vector.broadcast %160 : vector<1x256xf32> to vector<24x256xf32>
    %163 = arith.mulf %161, %162 : vector<24x256xf32>
    %164 = arith.addf %158, %163 : vector<24x256xf32>
    %165 = vector.extract_strided_slice %2 {offsets = [0, 7], sizes = [24, 1], strides = [1, 1]} : vector<24x8xf32> to vector<24x1xf32>
    %166 = vector.extract_strided_slice %123 {offsets = [7, 0], sizes = [1, 256], strides = [1, 1]} : vector<8x256xf32> to vector<1x256xf32>
    %167 = vector.broadcast %165 : vector<24x1xf32> to vector<24x256xf32>
    %168 = vector.broadcast %166 : vector<1x256xf32> to vector<24x256xf32>
    %169 = arith.mulf %167, %168 : vector<24x256xf32>
    %170 = arith.addf %164, %169 : vector<24x256xf32>
    %171 = vector.broadcast %3 : vector<24x1xf32> to vector<24x256xf32>
    %172 = arith.addf %170, %171 : vector<24x256xf32>
    %cst_29 = arith.constant dense<0.000000e+00> : vector<24xf32>
    %173 = vector.multi_reduction <add>, %172, %cst_29 [1] : vector<24x256xf32> to vector<24xf32>
    %174 = vector.shape_cast %173 : vector<24xf32> to vector<24x1xf32>
    %175 = arith.mulf %172, %172 : vector<24x256xf32>
    %cst_30 = arith.constant dense<0.000000e+00> : vector<24xf32>
    %176 = vector.multi_reduction <add>, %175, %cst_30 [1] : vector<24x256xf32> to vector<24xf32>
    %177 = vector.shape_cast %176 : vector<24xf32> to vector<24x1xf32>
    %178 = vector.broadcast %174 : vector<24x1xf32> to vector<24x4xf32>
    %179 = arith.mulf %6, %178 : vector<24x4xf32>
    %cst_31 = arith.constant dense<0.000000e+00> : vector<4xf32>
    %180 = vector.multi_reduction <add>, %179, %cst_31 [0] : vector<24x4xf32> to vector<4xf32>
    %181 = vector.shape_cast %180 : vector<4xf32> to vector<1x4xf32>
    %cst_32 = arith.constant 6.51041686E-4 : f32
    %182 = vector.broadcast %cst_32 : f32 to vector<1x4xf32>
    %183 = arith.mulf %181, %182 : vector<1x4xf32>
    %184 = vector.broadcast %177 : vector<24x1xf32> to vector<24x4xf32>
    %185 = arith.mulf %6, %184 : vector<24x4xf32>
    %cst_33 = arith.constant dense<0.000000e+00> : vector<4xf32>
    %186 = vector.multi_reduction <add>, %185, %cst_33 [0] : vector<24x4xf32> to vector<4xf32>
    %187 = vector.shape_cast %186 : vector<4xf32> to vector<1x4xf32>
    %cst_34 = arith.constant 6.51041686E-4 : f32
    %188 = vector.broadcast %cst_34 : f32 to vector<1x4xf32>
    %189 = arith.mulf %187, %188 : vector<1x4xf32>
    %190 = arith.mulf %183, %183 : vector<1x4xf32>
    %191 = arith.subf %189, %190 : vector<1x4xf32>
    %cst_35 = arith.constant 9.99999974E-6 : f32
    %192 = vector.broadcast %cst_35 : f32 to vector<1x4xf32>
    %193 = arith.addf %191, %192 : vector<1x4xf32>
    %194 = math.rsqrt %193 : vector<1x4xf32>
    %195 = vector.broadcast %183 : vector<1x4xf32> to vector<24x4xf32>
    %196 = arith.mulf %6, %195 : vector<24x4xf32>
    %cst_36 = arith.constant dense<0.000000e+00> : vector<24xf32>
    %197 = vector.multi_reduction <add>, %196, %cst_36 [1] : vector<24x4xf32> to vector<24xf32>
    %198 = vector.shape_cast %197 : vector<24xf32> to vector<24x1xf32>
    %199 = vector.broadcast %194 : vector<1x4xf32> to vector<24x4xf32>
    %200 = arith.mulf %6, %199 : vector<24x4xf32>
    %cst_37 = arith.constant dense<0.000000e+00> : vector<24xf32>
    %201 = vector.multi_reduction <add>, %200, %cst_37 [1] : vector<24x4xf32> to vector<24xf32>
    %202 = vector.shape_cast %201 : vector<24xf32> to vector<24x1xf32>
    %203 = vector.broadcast %198 : vector<24x1xf32> to vector<24x256xf32>
    %204 = arith.subf %172, %203 : vector<24x256xf32>
    %205 = arith.mulf %202, %4 : vector<24x1xf32>
    %206 = vector.broadcast %205 : vector<24x1xf32> to vector<24x256xf32>
    %207 = arith.mulf %204, %206 : vector<24x256xf32>
    %208 = vector.broadcast %5 : vector<24x1xf32> to vector<24x256xf32>
    %209 = arith.addf %207, %208 : vector<24x256xf32>
    %cst_38 = arith.constant 3.000000e+00 : f32
    %210 = vector.broadcast %cst_38 : f32 to vector<24x256xf32>
    %211 = arith.addf %209, %210 : vector<24x256xf32>
    %cst_39 = arith.constant 0.000000e+00 : f32
    %cst_40 = arith.constant 6.000000e+00 : f32
    %212 = vector.broadcast %cst_39 : f32 to vector<24x256xf32>
    %213 = arith.maximumf %212, %211 : vector<24x256xf32>
    %214 = vector.broadcast %cst_40 : f32 to vector<24x256xf32>
    %215 = arith.minimumf %214, %213 : vector<24x256xf32>
    %216 = arith.mulf %209, %215 : vector<24x256xf32>
    %cst_41 = arith.constant 0.166666672 : f32
    %217 = vector.broadcast %cst_41 : f32 to vector<24x256xf32>
    %218 = arith.mulf %216, %217 : vector<24x256xf32>
    %cst_42 = arith.constant 0.000000e+00 : f32
    %cst_43 = arith.constant 6.000000e+00 : f32
    %219 = vector.broadcast %cst_42 : f32 to vector<24x256xf32>
    %220 = arith.maximumf %219, %209 : vector<24x256xf32>
    %221 = vector.broadcast %cst_43 : f32 to vector<24x256xf32>
    %222 = arith.minimumf %221, %220 : vector<24x256xf32>
    %cst_44 = arith.constant 0.000000e+00 : f32
    %223 = vector.broadcast %cst_44 : f32 to vector<24x256xf32>
    %224 = arith.minimumf %209, %223 : vector<24x256xf32>
    %cst_45 = arith.constant 0.00999999977 : f32
    %225 = vector.broadcast %cst_45 : f32 to vector<24x256xf32>
    %226 = arith.mulf %225, %224 : vector<24x256xf32>
    %227 = arith.addf %222, %226 : vector<24x256xf32>
    %cst_46 = arith.constant -3.000000e+00 : f32
    %228 = vector.broadcast %cst_46 : f32 to vector<24x256xf32>
    %229 = arith.cmpf oge, %209, %228 : vector<24x256xf32>
    %cst_47 = arith.constant 3.000000e+00 : f32
    %230 = vector.broadcast %cst_47 : f32 to vector<24x256xf32>
    %231 = arith.cmpf ole, %209, %230 : vector<24x256xf32>
    %232 = arith.andi %229, %231 : vector<24x256xi1>
    %233 = arith.select %232, %218, %227 : vector<24x256xi1>, vector<24x256xf32>
    %c0_48 = arith.constant 0 : index
    %c1_49 = arith.constant 1 : index
    %c0_50 = arith.constant 0 : index
    %c0_51 = arith.constant 0 : index
    %234 = vector.load %arg4[%c0_48, %c1_49, %c0_50, %c0_51] : memref<1x2x24x256xf32, #tpu.memory_space<vmem>>, vector<1x1x24x256xf32>
    %235 = vector.shape_cast %234 : vector<1x1x24x256xf32> to vector<24x256xf32>
    %236 = vector.shape_cast %233 : vector<24x256xf32> to vector<1x1x24x256xf32>
    tpu.vector_store %arg4[%c0_48, %c1_49, %c0_50, %c0_51], %236 {strides = array<i32>} : memref<1x2x24x256xf32, #tpu.memory_space<vmem>>, vector<1x1x24x256xf32>,
    return
  }
  func.func @transform_0(%arg0: i32, %arg1: i32) -> (i32, i32, i32) {
    %c0_i32 = arith.constant 0 : i32
    %c0_i32_0 = arith.constant 0 : i32
    %c0_i32_1 = arith.constant 0 : i32
    return %arg1, %c0_i32, %c0_i32_0 : i32, i32, i32
  }
  func.func @transform_1(%arg0: i32, %arg1: i32) -> (i32, i32, i32) {
    %c0_i32 = arith.constant 0 : i32
    %c0_i32_0 = arith.constant 0 : i32
    %c0_i32_1 = arith.constant 0 : i32
    return %arg0, %c0_i32, %c0_i32_0 : i32, i32, i32
  }
  func.func @transform_2(%arg0: i32, %arg1: i32) -> (i32, i32, i32, i32) {
    %c0_i32 = arith.constant 0 : i32
    %c0_i32_0 = arith.constant 0 : i32
    %c0_i32_1 = arith.constant 0 : i32
    return %arg0, %arg1, %c0_i32, %c0_i32_0 : i32, i32, i32, i32
  }
}

module attributes {stable_mosaic.version = 11 : i64} {
  func.func @_pw_gn_act_shuffle_scse_kernel(%arg0: i32, %arg1: i32, %arg2: memref<1x2x24x256xf32, #tpu.memory_space<vmem>>, %arg3: memref<1x24x48xf32, #tpu.memory_space<vmem>>, %arg4: memref<1x2x24x256xf32, #tpu.memory_space<vmem>>) attributes {dimension_semantics = [#tpu.dimension_semantics<parallel>, #tpu.dimension_semantics<parallel>], iteration_bounds = array<i64: 3, 1>, scalar_prefetch = 0 : i64, scratch_operands = 0 : i64, tpu.core_type = #tpu.core_type<tc>, window_params = [{transform_indices = @transform_0, window_bounds = array<i64: 1, 2, 24, 256>}, {transform_indices = @transform_1, window_bounds = array<i64: 1, 24, 48>}, {transform_indices = @transform_2, window_bounds = array<i64: 1, 2, 24, 256>}]} {
    %c0 = arith.constant 0 : index
    %c0_0 = arith.constant 0 : index
    %c0_1 = arith.constant 0 : index
    %0 = vector.load %arg3[%c0, %c0_0, %c0_1] : memref<1x24x48xf32, #tpu.memory_space<vmem>>, vector<1x24x48xf32>
    %1 = vector.shape_cast %0 : vector<1x24x48xf32> to vector<24x48xf32>
    %2 = vector.extract_strided_slice %1 {offsets = [0, 0], sizes = [24, 24], strides = [1, 1]} : vector<24x48xf32> to vector<24x24xf32>
    %3 = vector.extract_strided_slice %1 {offsets = [0, 24], sizes = [24, 1], strides = [1, 1]} : vector<24x48xf32> to vector<24x1xf32>
    %4 = vector.extract_strided_slice %1 {offsets = [0, 25], sizes = [24, 1], strides = [1, 1]} : vector<24x48xf32> to vector<24x1xf32>
    %5 = vector.extract_strided_slice %1 {offsets = [0, 26], sizes = [24, 1], strides = [1, 1]} : vector<24x48xf32> to vector<24x1xf32>
    %6 = vector.extract_strided_slice %1 {offsets = [0, 27], sizes = [24, 4], strides = [1, 1]} : vector<24x48xf32> to vector<24x4xf32>
    %7 = vector.extract_strided_slice %1 {offsets = [0, 31], sizes = [24, 8], strides = [1, 1]} : vector<24x48xf32> to vector<24x8xf32>
    %8 = vector.extract_strided_slice %1 {offsets = [0, 39], sizes = [24, 8], strides = [1, 1]} : vector<24x48xf32> to vector<24x8xf32>
    %9 = vector.extract_strided_slice %1 {offsets = [0, 47], sizes = [24, 1], strides = [1, 1]} : vector<24x48xf32> to vector<24x1xf32>
    %c0_2 = arith.constant 0 : index
    %c0_3 = arith.constant 0 : index
    %c0_4 = arith.constant 0 : index
    %c0_5 = arith.constant 0 : index
    %10 = vector.load %arg2[%c0_2, %c0_3, %c0_4, %c0_5] : memref<1x2x24x256xf32, #tpu.memory_space<vmem>>, vector<1x1x24x256xf32>
    %11 = vector.shape_cast %10 : vector<1x1x24x256xf32> to vector<24x256xf32>
    %12 = vector.extract_strided_slice %2 {offsets = [0, 0], sizes = [24, 1], strides = [1, 1]} : vector<24x24xf32> to vector<24x1xf32>
    %13 = vector.extract_strided_slice %11 {offsets = [0, 0], sizes = [1, 256], strides = [1, 1]} : vector<24x256xf32> to vector<1x256xf32>
    %14 = vector.broadcast %12 : vector<24x1xf32> to vector<24x256xf32>
    %15 = vector.broadcast %13 : vector<1x256xf32> to vector<24x256xf32>
    %16 = arith.mulf %14, %15 : vector<24x256xf32>
    %17 = vector.extract_strided_slice %2 {offsets = [0, 1], sizes = [24, 1], strides = [1, 1]} : vector<24x24xf32> to vector<24x1xf32>
    %18 = vector.extract_strided_slice %11 {offsets = [1, 0], sizes = [1, 256], strides = [1, 1]} : vector<24x256xf32> to vector<1x256xf32>
    %19 = vector.broadcast %17 : vector<24x1xf32> to vector<24x256xf32>
    %20 = vector.broadcast %18 : vector<1x256xf32> to vector<24x256xf32>
    %21 = arith.mulf %19, %20 : vector<24x256xf32>
    %22 = arith.addf %16, %21 : vector<24x256xf32>
    %23 = vector.extract_strided_slice %2 {offsets = [0, 2], sizes = [24, 1], strides = [1, 1]} : vector<24x24xf32> to vector<24x1xf32>
    %24 = vector.extract_strided_slice %11 {offsets = [2, 0], sizes = [1, 256], strides = [1, 1]} : vector<24x256xf32> to vector<1x256xf32>
    %25 = vector.broadcast %23 : vector<24x1xf32> to vector<24x256xf32>
    %26 = vector.broadcast %24 : vector<1x256xf32> to vector<24x256xf32>
    %27 = arith.mulf %25, %26 : vector<24x256xf32>
    %28 = arith.addf %22, %27 : vector<24x256xf32>
    %29 = vector.extract_strided_slice %2 {offsets = [0, 3], sizes = [24, 1], strides = [1, 1]} : vector<24x24xf32> to vector<24x1xf32>
    %30 = vector.extract_strided_slice %11 {offsets = [3, 0], sizes = [1, 256], strides = [1, 1]} : vector<24x256xf32> to vector<1x256xf32>
    %31 = vector.broadcast %29 : vector<24x1xf32> to vector<24x256xf32>
    %32 = vector.broadcast %30 : vector<1x256xf32> to vector<24x256xf32>
    %33 = arith.mulf %31, %32 : vector<24x256xf32>
    %34 = arith.addf %28, %33 : vector<24x256xf32>
    %35 = vector.extract_strided_slice %2 {offsets = [0, 4], sizes = [24, 1], strides = [1, 1]} : vector<24x24xf32> to vector<24x1xf32>
    %36 = vector.extract_strided_slice %11 {offsets = [4, 0], sizes = [1, 256], strides = [1, 1]} : vector<24x256xf32> to vector<1x256xf32>
    %37 = vector.broadcast %35 : vector<24x1xf32> to vector<24x256xf32>
    %38 = vector.broadcast %36 : vector<1x256xf32> to vector<24x256xf32>
    %39 = arith.mulf %37, %38 : vector<24x256xf32>
    %40 = arith.addf %34, %39 : vector<24x256xf32>
    %41 = vector.extract_strided_slice %2 {offsets = [0, 5], sizes = [24, 1], strides = [1, 1]} : vector<24x24xf32> to vector<24x1xf32>
    %42 = vector.extract_strided_slice %11 {offsets = [5, 0], sizes = [1, 256], strides = [1, 1]} : vector<24x256xf32> to vector<1x256xf32>
    %43 = vector.broadcast %41 : vector<24x1xf32> to vector<24x256xf32>
    %44 = vector.broadcast %42 : vector<1x256xf32> to vector<24x256xf32>
    %45 = arith.mulf %43, %44 : vector<24x256xf32>
    %46 = arith.addf %40, %45 : vector<24x256xf32>
    %47 = vector.extract_strided_slice %2 {offsets = [0, 6], sizes = [24, 1], strides = [1, 1]} : vector<24x24xf32> to vector<24x1xf32>
    %48 = vector.extract_strided_slice %11 {offsets = [6, 0], sizes = [1, 256], strides = [1, 1]} : vector<24x256xf32> to vector<1x256xf32>
    %49 = vector.broadcast %47 : vector<24x1xf32> to vector<24x256xf32>
    %50 = vector.broadcast %48 : vector<1x256xf32> to vector<24x256xf32>
    %51 = arith.mulf %49, %50 : vector<24x256xf32>
    %52 = arith.addf %46, %51 : vector<24x256xf32>
    %53 = vector.extract_strided_slice %2 {offsets = [0, 7], sizes = [24, 1], strides = [1, 1]} : vector<24x24xf32> to vector<24x1xf32>
    %54 = vector.extract_strided_slice %11 {offsets = [7, 0], sizes = [1, 256], strides = [1, 1]} : vector<24x256xf32> to vector<1x256xf32>
    %55 = vector.broadcast %53 : vector<24x1xf32> to vector<24x256xf32>
    %56 = vector.broadcast %54 : vector<1x256xf32> to vector<24x256xf32>
    %57 = arith.mulf %55, %56 : vector<24x256xf32>
    %58 = arith.addf %52, %57 : vector<24x256xf32>
    %59 = vector.extract_strided_slice %2 {offsets = [0, 8], sizes = [24, 1], strides = [1, 1]} : vector<24x24xf32> to vector<24x1xf32>
    %60 = vector.extract_strided_slice %11 {offsets = [8, 0], sizes = [1, 256], strides = [1, 1]} : vector<24x256xf32> to vector<1x256xf32>
    %61 = vector.broadcast %59 : vector<24x1xf32> to vector<24x256xf32>
    %62 = vector.broadcast %60 : vector<1x256xf32> to vector<24x256xf32>
    %63 = arith.mulf %61, %62 : vector<24x256xf32>
    %64 = arith.addf %58, %63 : vector<24x256xf32>
    %65 = vector.extract_strided_slice %2 {offsets = [0, 9], sizes = [24, 1], strides = [1, 1]} : vector<24x24xf32> to vector<24x1xf32>
    %66 = vector.extract_strided_slice %11 {offsets = [9, 0], sizes = [1, 256], strides = [1, 1]} : vector<24x256xf32> to vector<1x256xf32>
    %67 = vector.broadcast %65 : vector<24x1xf32> to vector<24x256xf32>
    %68 = vector.broadcast %66 : vector<1x256xf32> to vector<24x256xf32>
    %69 = arith.mulf %67, %68 : vector<24x256xf32>
    %70 = arith.addf %64, %69 : vector<24x256xf32>
    %71 = vector.extract_strided_slice %2 {offsets = [0, 10], sizes = [24, 1], strides = [1, 1]} : vector<24x24xf32> to vector<24x1xf32>
    %72 = vector.extract_strided_slice %11 {offsets = [10, 0], sizes = [1, 256], strides = [1, 1]} : vector<24x256xf32> to vector<1x256xf32>
    %73 = vector.broadcast %71 : vector<24x1xf32> to vector<24x256xf32>
    %74 = vector.broadcast %72 : vector<1x256xf32> to vector<24x256xf32>
    %75 = arith.mulf %73, %74 : vector<24x256xf32>
    %76 = arith.addf %70, %75 : vector<24x256xf32>
    %77 = vector.extract_strided_slice %2 {offsets = [0, 11], sizes = [24, 1], strides = [1, 1]} : vector<24x24xf32> to vector<24x1xf32>
    %78 = vector.extract_strided_slice %11 {offsets = [11, 0], sizes = [1, 256], strides = [1, 1]} : vector<24x256xf32> to vector<1x256xf32>
    %79 = vector.broadcast %77 : vector<24x1xf32> to vector<24x256xf32>
    %80 = vector.broadcast %78 : vector<1x256xf32> to vector<24x256xf32>
    %81 = arith.mulf %79, %80 : vector<24x256xf32>
    %82 = arith.addf %76, %81 : vector<24x256xf32>
    %83 = vector.extract_strided_slice %2 {offsets = [0, 12], sizes = [24, 1], strides = [1, 1]} : vector<24x24xf32> to vector<24x1xf32>
    %84 = vector.extract_strided_slice %11 {offsets = [12, 0], sizes = [1, 256], strides = [1, 1]} : vector<24x256xf32> to vector<1x256xf32>
    %85 = vector.broadcast %83 : vector<24x1xf32> to vector<24x256xf32>
    %86 = vector.broadcast %84 : vector<1x256xf32> to vector<24x256xf32>
    %87 = arith.mulf %85, %86 : vector<24x256xf32>
    %88 = arith.addf %82, %87 : vector<24x256xf32>
    %89 = vector.extract_strided_slice %2 {offsets = [0, 13], sizes = [24, 1], strides = [1, 1]} : vector<24x24xf32> to vector<24x1xf32>
    %90 = vector.extract_strided_slice %11 {offsets = [13, 0], sizes = [1, 256], strides = [1, 1]} : vector<24x256xf32> to vector<1x256xf32>
    %91 = vector.broadcast %89 : vector<24x1xf32> to vector<24x256xf32>
    %92 = vector.broadcast %90 : vector<1x256xf32> to vector<24x256xf32>
    %93 = arith.mulf %91, %92 : vector<24x256xf32>
    %94 = arith.addf %88, %93 : vector<24x256xf32>
    %95 = vector.extract_strided_slice %2 {offsets = [0, 14], sizes = [24, 1], strides = [1, 1]} : vector<24x24xf32> to vector<24x1xf32>
    %96 = vector.extract_strided_slice %11 {offsets = [14, 0], sizes = [1, 256], strides = [1, 1]} : vector<24x256xf32> to vector<1x256xf32>
    %97 = vector.broadcast %95 : vector<24x1xf32> to vector<24x256xf32>
    %98 = vector.broadcast %96 : vector<1x256xf32> to vector<24x256xf32>
    %99 = arith.mulf %97, %98 : vector<24x256xf32>
    %100 = arith.addf %94, %99 : vector<24x256xf32>
    %101 = vector.extract_strided_slice %2 {offsets = [0, 15], sizes = [24, 1], strides = [1, 1]} : vector<24x24xf32> to vector<24x1xf32>
    %102 = vector.extract_strided_slice %11 {offsets = [15, 0], sizes = [1, 256], strides = [1, 1]} : vector<24x256xf32> to vector<1x256xf32>
    %103 = vector.broadcast %101 : vector<24x1xf32> to vector<24x256xf32>
    %104 = vector.broadcast %102 : vector<1x256xf32> to vector<24x256xf32>
    %105 = arith.mulf %103, %104 : vector<24x256xf32>
    %106 = arith.addf %100, %105 : vector<24x256xf32>
    %107 = vector.extract_strided_slice %2 {offsets = [0, 16], sizes = [24, 1], strides = [1, 1]} : vector<24x24xf32> to vector<24x1xf32>
    %108 = vector.extract_strided_slice %11 {offsets = [16, 0], sizes = [1, 256], strides = [1, 1]} : vector<24x256xf32> to vector<1x256xf32>
    %109 = vector.broadcast %107 : vector<24x1xf32> to vector<24x256xf32>
    %110 = vector.broadcast %108 : vector<1x256xf32> to vector<24x256xf32>
    %111 = arith.mulf %109, %110 : vector<24x256xf32>
    %112 = arith.addf %106, %111 : vector<24x256xf32>
    %113 = vector.extract_strided_slice %2 {offsets = [0, 17], sizes = [24, 1], strides = [1, 1]} : vector<24x24xf32> to vector<24x1xf32>
    %114 = vector.extract_strided_slice %11 {offsets = [17, 0], sizes = [1, 256], strides = [1, 1]} : vector<24x256xf32> to vector<1x256xf32>
    %115 = vector.broadcast %113 : vector<24x1xf32> to vector<24x256xf32>
    %116 = vector.broadcast %114 : vector<1x256xf32> to vector<24x256xf32>
    %117 = arith.mulf %115, %116 : vector<24x256xf32>
    %118 = arith.addf %112, %117 : vector<24x256xf32>
    %119 = vector.extract_strided_slice %2 {offsets = [0, 18], sizes = [24, 1], strides = [1, 1]} : vector<24x24xf32> to vector<24x1xf32>
    %120 = vector.extract_strided_slice %11 {offsets = [18, 0], sizes = [1, 256], strides = [1, 1]} : vector<24x256xf32> to vector<1x256xf32>
    %121 = vector.broadcast %119 : vector<24x1xf32> to vector<24x256xf32>
    %122 = vector.broadcast %120 : vector<1x256xf32> to vector<24x256xf32>
    %123 = arith.mulf %121, %122 : vector<24x256xf32>
    %124 = arith.addf %118, %123 : vector<24x256xf32>
    %125 = vector.extract_strided_slice %2 {offsets = [0, 19], sizes = [24, 1], strides = [1, 1]} : vector<24x24xf32> to vector<24x1xf32>
    %126 = vector.extract_strided_slice %11 {offsets = [19, 0], sizes = [1, 256], strides = [1, 1]} : vector<24x256xf32> to vector<1x256xf32>
    %127 = vector.broadcast %125 : vector<24x1xf32> to vector<24x256xf32>
    %128 = vector.broadcast %126 : vector<1x256xf32> to vector<24x256xf32>
    %129 = arith.mulf %127, %128 : vector<24x256xf32>
    %130 = arith.addf %124, %129 : vector<24x256xf32>
    %131 = vector.extract_strided_slice %2 {offsets = [0, 20], sizes = [24, 1], strides = [1, 1]} : vector<24x24xf32> to vector<24x1xf32>
    %132 = vector.extract_strided_slice %11 {offsets = [20, 0], sizes = [1, 256], strides = [1, 1]} : vector<24x256xf32> to vector<1x256xf32>
    %133 = vector.broadcast %131 : vector<24x1xf32> to vector<24x256xf32>
    %134 = vector.broadcast %132 : vector<1x256xf32> to vector<24x256xf32>
    %135 = arith.mulf %133, %134 : vector<24x256xf32>
    %136 = arith.addf %130, %135 : vector<24x256xf32>
    %137 = vector.extract_strided_slice %2 {offsets = [0, 21], sizes = [24, 1], strides = [1, 1]} : vector<24x24xf32> to vector<24x1xf32>
    %138 = vector.extract_strided_slice %11 {offsets = [21, 0], sizes = [1, 256], strides = [1, 1]} : vector<24x256xf32> to vector<1x256xf32>
    %139 = vector.broadcast %137 : vector<24x1xf32> to vector<24x256xf32>
    %140 = vector.broadcast %138 : vector<1x256xf32> to vector<24x256xf32>
    %141 = arith.mulf %139, %140 : vector<24x256xf32>
    %142 = arith.addf %136, %141 : vector<24x256xf32>
    %143 = vector.extract_strided_slice %2 {offsets = [0, 22], sizes = [24, 1], strides = [1, 1]} : vector<24x24xf32> to vector<24x1xf32>
    %144 = vector.extract_strided_slice %11 {offsets = [22, 0], sizes = [1, 256], strides = [1, 1]} : vector<24x256xf32> to vector<1x256xf32>
    %145 = vector.broadcast %143 : vector<24x1xf32> to vector<24x256xf32>
    %146 = vector.broadcast %144 : vector<1x256xf32> to vector<24x256xf32>
    %147 = arith.mulf %145, %146 : vector<24x256xf32>
    %148 = arith.addf %142, %147 : vector<24x256xf32>
    %149 = vector.extract_strided_slice %2 {offsets = [0, 23], sizes = [24, 1], strides = [1, 1]} : vector<24x24xf32> to vector<24x1xf32>
    %150 = vector.extract_strided_slice %11 {offsets = [23, 0], sizes = [1, 256], strides = [1, 1]} : vector<24x256xf32> to vector<1x256xf32>
    %151 = vector.broadcast %149 : vector<24x1xf32> to vector<24x256xf32>
    %152 = vector.broadcast %150 : vector<1x256xf32> to vector<24x256xf32>
    %153 = arith.mulf %151, %152 : vector<24x256xf32>
    %154 = arith.addf %148, %153 : vector<24x256xf32>
    %155 = vector.broadcast %3 : vector<24x1xf32> to vector<24x256xf32>
    %156 = arith.addf %154, %155 : vector<24x256xf32>
    %cst = arith.constant dense<0.000000e+00> : vector<24xf32>
    %157 = vector.multi_reduction <add>, %156, %cst [1] : vector<24x256xf32> to vector<24xf32>
    %158 = vector.shape_cast %157 : vector<24xf32> to vector<24x1xf32>
    %159 = arith.mulf %156, %156 : vector<24x256xf32>
    %cst_6 = arith.constant dense<0.000000e+00> : vector<24xf32>
    %160 = vector.multi_reduction <add>, %159, %cst_6 [1] : vector<24x256xf32> to vector<24xf32>
    %161 = vector.shape_cast %160 : vector<24xf32> to vector<24x1xf32>
    %162 = vector.broadcast %158 : vector<24x1xf32> to vector<24x4xf32>
    %163 = arith.mulf %6, %162 : vector<24x4xf32>
    %cst_7 = arith.constant dense<0.000000e+00> : vector<4xf32>
    %164 = vector.multi_reduction <add>, %163, %cst_7 [0] : vector<24x4xf32> to vector<4xf32>
    %165 = vector.shape_cast %164 : vector<4xf32> to vector<1x4xf32>
    %cst_8 = arith.constant 6.51041686E-4 : f32
    %166 = vector.broadcast %cst_8 : f32 to vector<1x4xf32>
    %167 = arith.mulf %165, %166 : vector<1x4xf32>
    %168 = vector.broadcast %161 : vector<24x1xf32> to vector<24x4xf32>
    %169 = arith.mulf %6, %168 : vector<24x4xf32>
    %cst_9 = arith.constant dense<0.000000e+00> : vector<4xf32>
    %170 = vector.multi_reduction <add>, %169, %cst_9 [0] : vector<24x4xf32> to vector<4xf32>
    %171 = vector.shape_cast %170 : vector<4xf32> to vector<1x4xf32>
    %cst_10 = arith.constant 6.51041686E-4 : f32
    %172 = vector.broadcast %cst_10 : f32 to vector<1x4xf32>
    %173 = arith.mulf %171, %172 : vector<1x4xf32>
    %174 = arith.mulf %167, %167 : vector<1x4xf32>
    %175 = arith.subf %173, %174 : vector<1x4xf32>
    %cst_11 = arith.constant 9.99999974E-6 : f32
    %176 = vector.broadcast %cst_11 : f32 to vector<1x4xf32>
    %177 = arith.addf %175, %176 : vector<1x4xf32>
    %178 = math.rsqrt %177 : vector<1x4xf32>
    %179 = vector.broadcast %167 : vector<1x4xf32> to vector<24x4xf32>
    %180 = arith.mulf %6, %179 : vector<24x4xf32>
    %cst_12 = arith.constant dense<0.000000e+00> : vector<24xf32>
    %181 = vector.multi_reduction <add>, %180, %cst_12 [1] : vector<24x4xf32> to vector<24xf32>
    %182 = vector.shape_cast %181 : vector<24xf32> to vector<24x1xf32>
    %183 = vector.broadcast %178 : vector<1x4xf32> to vector<24x4xf32>
    %184 = arith.mulf %6, %183 : vector<24x4xf32>
    %cst_13 = arith.constant dense<0.000000e+00> : vector<24xf32>
    %185 = vector.multi_reduction <add>, %184, %cst_13 [1] : vector<24x4xf32> to vector<24xf32>
    %186 = vector.shape_cast %185 : vector<24xf32> to vector<24x1xf32>
    %187 = vector.broadcast %182 : vector<24x1xf32> to vector<24x256xf32>
    %188 = arith.subf %156, %187 : vector<24x256xf32>
    %189 = arith.mulf %186, %4 : vector<24x1xf32>
    %190 = vector.broadcast %189 : vector<24x1xf32> to vector<24x256xf32>
    %191 = arith.mulf %188, %190 : vector<24x256xf32>
    %192 = vector.broadcast %5 : vector<24x1xf32> to vector<24x256xf32>
    %193 = arith.addf %191, %192 : vector<24x256xf32>
    %cst_14 = arith.constant 3.000000e+00 : f32
    %194 = vector.broadcast %cst_14 : f32 to vector<24x256xf32>
    %195 = arith.addf %193, %194 : vector<24x256xf32>
    %cst_15 = arith.constant 0.000000e+00 : f32
    %cst_16 = arith.constant 6.000000e+00 : f32
    %196 = vector.broadcast %cst_15 : f32 to vector<24x256xf32>
    %197 = arith.maximumf %196, %195 : vector<24x256xf32>
    %198 = vector.broadcast %cst_16 : f32 to vector<24x256xf32>
    %199 = arith.minimumf %198, %197 : vector<24x256xf32>
    %200 = arith.mulf %193, %199 : vector<24x256xf32>
    %cst_17 = arith.constant 0.166666672 : f32
    %201 = vector.broadcast %cst_17 : f32 to vector<24x256xf32>
    %202 = arith.mulf %200, %201 : vector<24x256xf32>
    %cst_18 = arith.constant 0.000000e+00 : f32
    %cst_19 = arith.constant 6.000000e+00 : f32
    %203 = vector.broadcast %cst_18 : f32 to vector<24x256xf32>
    %204 = arith.maximumf %203, %193 : vector<24x256xf32>
    %205 = vector.broadcast %cst_19 : f32 to vector<24x256xf32>
    %206 = arith.minimumf %205, %204 : vector<24x256xf32>
    %cst_20 = arith.constant 0.000000e+00 : f32
    %207 = vector.broadcast %cst_20 : f32 to vector<24x256xf32>
    %208 = arith.minimumf %193, %207 : vector<24x256xf32>
    %cst_21 = arith.constant 0.00999999977 : f32
    %209 = vector.broadcast %cst_21 : f32 to vector<24x256xf32>
    %210 = arith.mulf %209, %208 : vector<24x256xf32>
    %211 = arith.addf %206, %210 : vector<24x256xf32>
    %cst_22 = arith.constant -3.000000e+00 : f32
    %212 = vector.broadcast %cst_22 : f32 to vector<24x256xf32>
    %213 = arith.cmpf oge, %193, %212 : vector<24x256xf32>
    %cst_23 = arith.constant 3.000000e+00 : f32
    %214 = vector.broadcast %cst_23 : f32 to vector<24x256xf32>
    %215 = arith.cmpf ole, %193, %214 : vector<24x256xf32>
    %216 = arith.andi %213, %215 : vector<24x256xi1>
    %217 = arith.select %216, %202, %211 : vector<24x256xi1>, vector<24x256xf32>
    %cst_24 = arith.constant dense<0.000000e+00> : vector<24xf32>
    %218 = vector.multi_reduction <add>, %217, %cst_24 [1] : vector<24x256xf32> to vector<24xf32>
    %219 = vector.shape_cast %218 : vector<24xf32> to vector<24x1xf32>
    %cst_25 = arith.constant 3.906250e-03 : f32
    %220 = vector.broadcast %cst_25 : f32 to vector<24x1xf32>
    %221 = arith.mulf %219, %220 : vector<24x1xf32>
    %222 = vector.broadcast %221 : vector<24x1xf32> to vector<24x8xf32>
    %223 = arith.mulf %7, %222 : vector<24x8xf32>
    %cst_26 = arith.constant dense<0.000000e+00> : vector<8xf32>
    %224 = vector.multi_reduction <add>, %223, %cst_26 [0] : vector<24x8xf32> to vector<8xf32>
    %225 = vector.shape_cast %224 : vector<8xf32> to vector<1x8xf32>
    %cst_27 = arith.constant 0.000000e+00 : f32
    %226 = vector.broadcast %cst_27 : f32 to vector<1x8xf32>
    %227 = arith.maximumf %225, %226 : vector<1x8xf32>
    %228 = vector.broadcast %227 : vector<1x8xf32> to vector<24x8xf32>
    %229 = arith.mulf %8, %228 : vector<24x8xf32>
    %cst_28 = arith.constant dense<0.000000e+00> : vector<24xf32>
    %230 = vector.multi_reduction <add>, %229, %cst_28 [1] : vector<24x8xf32> to vector<24xf32>
    %231 = vector.shape_cast %230 : vector<24xf32> to vector<24x1xf32>
    %cst_29 = arith.constant 0.166666672 : f32
    %232 = vector.broadcast %cst_29 : f32 to vector<24x1xf32>
    %233 = arith.mulf %231, %232 : vector<24x1xf32>
    %cst_30 = arith.constant 5.000000e-01 : f32
    %234 = vector.broadcast %cst_30 : f32 to vector<24x1xf32>
    %235 = arith.addf %233, %234 : vector<24x1xf32>
    %cst_31 = arith.constant 0.000000e+00 : f32
    %cst_32 = arith.constant 1.000000e+00 : f32
    %236 = vector.broadcast %cst_31 : f32 to vector<24x1xf32>
    %237 = arith.maximumf %236, %235 : vector<24x1xf32>
    %238 = vector.broadcast %cst_32 : f32 to vector<24x1xf32>
    %239 = arith.minimumf %238, %237 : vector<24x1xf32>
    %240 = vector.broadcast %9 : vector<24x1xf32> to vector<24x256xf32>
    %241 = arith.mulf %240, %217 : vector<24x256xf32>
    %cst_33 = arith.constant dense<0.000000e+00> : vector<256xf32>
    %242 = vector.multi_reduction <add>, %241, %cst_33 [0] : vector<24x256xf32> to vector<256xf32>
    %243 = vector.shape_cast %242 : vector<256xf32> to vector<1x256xf32>
    %244 = arith.negf %243 : vector<1x256xf32>
    %245 = math.exp %244 : vector<1x256xf32>
    %cst_34 = arith.constant 1.000000e+00 : f32
    %246 = vector.broadcast %cst_34 : f32 to vector<1x256xf32>
    %247 = arith.addf %246, %245 : vector<1x256xf32>
    %248 = arith.divf %246, %247 : vector<1x256xf32>
    %249 = vector.broadcast %239 : vector<24x1xf32> to vector<24x256xf32>
    %250 = vector.broadcast %248 : vector<1x256xf32> to vector<24x256xf32>
    %251 = arith.addf %249, %250 : vector<24x256xf32>
    %252 = arith.mulf %217, %251 : vector<24x256xf32>
    %c0_35 = arith.constant 0 : index
    %c0_36 = arith.constant 0 : index
    %c0_37 = arith.constant 0 : index
    %c0_38 = arith.constant 0 : index
    %253 = vector.load %arg4[%c0_35, %c0_36, %c0_37, %c0_38] : memref<1x2x24x256xf32, #tpu.memory_space<vmem>>, vector<1x1x24x256xf32>
    %254 = vector.shape_cast %253 : vector<1x1x24x256xf32> to vector<24x256xf32>
    %255 = vector.shape_cast %252 : vector<24x256xf32> to vector<1x1x24x256xf32>
    tpu.vector_store %arg4[%c0_35, %c0_36, %c0_37, %c0_38], %255 {strides = array<i32>} : memref<1x2x24x256xf32, #tpu.memory_space<vmem>>, vector<1x1x24x256xf32>,
    %c0_39 = arith.constant 0 : index
    %c1 = arith.constant 1 : index
    %c0_40 = arith.constant 0 : index
    %c0_41 = arith.constant 0 : index
    %256 = vector.load %arg2[%c0_39, %c1, %c0_40, %c0_41] : memref<1x2x24x256xf32, #tpu.memory_space<vmem>>, vector<1x1x24x256xf32>
    %257 = vector.shape_cast %256 : vector<1x1x24x256xf32> to vector<24x256xf32>
    %258 = vector.extract_strided_slice %2 {offsets = [0, 0], sizes = [24, 1], strides = [1, 1]} : vector<24x24xf32> to vector<24x1xf32>
    %259 = vector.extract_strided_slice %257 {offsets = [0, 0], sizes = [1, 256], strides = [1, 1]} : vector<24x256xf32> to vector<1x256xf32>
    %260 = vector.broadcast %258 : vector<24x1xf32> to vector<24x256xf32>
    %261 = vector.broadcast %259 : vector<1x256xf32> to vector<24x256xf32>
    %262 = arith.mulf %260, %261 : vector<24x256xf32>
    %263 = vector.extract_strided_slice %2 {offsets = [0, 1], sizes = [24, 1], strides = [1, 1]} : vector<24x24xf32> to vector<24x1xf32>
    %264 = vector.extract_strided_slice %257 {offsets = [1, 0], sizes = [1, 256], strides = [1, 1]} : vector<24x256xf32> to vector<1x256xf32>
    %265 = vector.broadcast %263 : vector<24x1xf32> to vector<24x256xf32>
    %266 = vector.broadcast %264 : vector<1x256xf32> to vector<24x256xf32>
    %267 = arith.mulf %265, %266 : vector<24x256xf32>
    %268 = arith.addf %262, %267 : vector<24x256xf32>
    %269 = vector.extract_strided_slice %2 {offsets = [0, 2], sizes = [24, 1], strides = [1, 1]} : vector<24x24xf32> to vector<24x1xf32>
    %270 = vector.extract_strided_slice %257 {offsets = [2, 0], sizes = [1, 256], strides = [1, 1]} : vector<24x256xf32> to vector<1x256xf32>
    %271 = vector.broadcast %269 : vector<24x1xf32> to vector<24x256xf32>
    %272 = vector.broadcast %270 : vector<1x256xf32> to vector<24x256xf32>
    %273 = arith.mulf %271, %272 : vector<24x256xf32>
    %274 = arith.addf %268, %273 : vector<24x256xf32>
    %275 = vector.extract_strided_slice %2 {offsets = [0, 3], sizes = [24, 1], strides = [1, 1]} : vector<24x24xf32> to vector<24x1xf32>
    %276 = vector.extract_strided_slice %257 {offsets = [3, 0], sizes = [1, 256], strides = [1, 1]} : vector<24x256xf32> to vector<1x256xf32>
    %277 = vector.broadcast %275 : vector<24x1xf32> to vector<24x256xf32>
    %278 = vector.broadcast %276 : vector<1x256xf32> to vector<24x256xf32>
    %279 = arith.mulf %277, %278 : vector<24x256xf32>
    %280 = arith.addf %274, %279 : vector<24x256xf32>
    %281 = vector.extract_strided_slice %2 {offsets = [0, 4], sizes = [24, 1], strides = [1, 1]} : vector<24x24xf32> to vector<24x1xf32>
    %282 = vector.extract_strided_slice %257 {offsets = [4, 0], sizes = [1, 256], strides = [1, 1]} : vector<24x256xf32> to vector<1x256xf32>
    %283 = vector.broadcast %281 : vector<24x1xf32> to vector<24x256xf32>
    %284 = vector.broadcast %282 : vector<1x256xf32> to vector<24x256xf32>
    %285 = arith.mulf %283, %284 : vector<24x256xf32>
    %286 = arith.addf %280, %285 : vector<24x256xf32>
    %287 = vector.extract_strided_slice %2 {offsets = [0, 5], sizes = [24, 1], strides = [1, 1]} : vector<24x24xf32> to vector<24x1xf32>
    %288 = vector.extract_strided_slice %257 {offsets = [5, 0], sizes = [1, 256], strides = [1, 1]} : vector<24x256xf32> to vector<1x256xf32>
    %289 = vector.broadcast %287 : vector<24x1xf32> to vector<24x256xf32>
    %290 = vector.broadcast %288 : vector<1x256xf32> to vector<24x256xf32>
    %291 = arith.mulf %289, %290 : vector<24x256xf32>
    %292 = arith.addf %286, %291 : vector<24x256xf32>
    %293 = vector.extract_strided_slice %2 {offsets = [0, 6], sizes = [24, 1], strides = [1, 1]} : vector<24x24xf32> to vector<24x1xf32>
    %294 = vector.extract_strided_slice %257 {offsets = [6, 0], sizes = [1, 256], strides = [1, 1]} : vector<24x256xf32> to vector<1x256xf32>
    %295 = vector.broadcast %293 : vector<24x1xf32> to vector<24x256xf32>
    %296 = vector.broadcast %294 : vector<1x256xf32> to vector<24x256xf32>
    %297 = arith.mulf %295, %296 : vector<24x256xf32>
    %298 = arith.addf %292, %297 : vector<24x256xf32>
    %299 = vector.extract_strided_slice %2 {offsets = [0, 7], sizes = [24, 1], strides = [1, 1]} : vector<24x24xf32> to vector<24x1xf32>
    %300 = vector.extract_strided_slice %257 {offsets = [7, 0], sizes = [1, 256], strides = [1, 1]} : vector<24x256xf32> to vector<1x256xf32>
    %301 = vector.broadcast %299 : vector<24x1xf32> to vector<24x256xf32>
    %302 = vector.broadcast %300 : vector<1x256xf32> to vector<24x256xf32>
    %303 = arith.mulf %301, %302 : vector<24x256xf32>
    %304 = arith.addf %298, %303 : vector<24x256xf32>
    %305 = vector.extract_strided_slice %2 {offsets = [0, 8], sizes = [24, 1], strides = [1, 1]} : vector<24x24xf32> to vector<24x1xf32>
    %306 = vector.extract_strided_slice %257 {offsets = [8, 0], sizes = [1, 256], strides = [1, 1]} : vector<24x256xf32> to vector<1x256xf32>
    %307 = vector.broadcast %305 : vector<24x1xf32> to vector<24x256xf32>
    %308 = vector.broadcast %306 : vector<1x256xf32> to vector<24x256xf32>
    %309 = arith.mulf %307, %308 : vector<24x256xf32>
    %310 = arith.addf %304, %309 : vector<24x256xf32>
    %311 = vector.extract_strided_slice %2 {offsets = [0, 9], sizes = [24, 1], strides = [1, 1]} : vector<24x24xf32> to vector<24x1xf32>
    %312 = vector.extract_strided_slice %257 {offsets = [9, 0], sizes = [1, 256], strides = [1, 1]} : vector<24x256xf32> to vector<1x256xf32>
    %313 = vector.broadcast %311 : vector<24x1xf32> to vector<24x256xf32>
    %314 = vector.broadcast %312 : vector<1x256xf32> to vector<24x256xf32>
    %315 = arith.mulf %313, %314 : vector<24x256xf32>
    %316 = arith.addf %310, %315 : vector<24x256xf32>
    %317 = vector.extract_strided_slice %2 {offsets = [0, 10], sizes = [24, 1], strides = [1, 1]} : vector<24x24xf32> to vector<24x1xf32>
    %318 = vector.extract_strided_slice %257 {offsets = [10, 0], sizes = [1, 256], strides = [1, 1]} : vector<24x256xf32> to vector<1x256xf32>
    %319 = vector.broadcast %317 : vector<24x1xf32> to vector<24x256xf32>
    %320 = vector.broadcast %318 : vector<1x256xf32> to vector<24x256xf32>
    %321 = arith.mulf %319, %320 : vector<24x256xf32>
    %322 = arith.addf %316, %321 : vector<24x256xf32>
    %323 = vector.extract_strided_slice %2 {offsets = [0, 11], sizes = [24, 1], strides = [1, 1]} : vector<24x24xf32> to vector<24x1xf32>
    %324 = vector.extract_strided_slice %257 {offsets = [11, 0], sizes = [1, 256], strides = [1, 1]} : vector<24x256xf32> to vector<1x256xf32>
    %325 = vector.broadcast %323 : vector<24x1xf32> to vector<24x256xf32>
    %326 = vector.broadcast %324 : vector<1x256xf32> to vector<24x256xf32>
    %327 = arith.mulf %325, %326 : vector<24x256xf32>
    %328 = arith.addf %322, %327 : vector<24x256xf32>
    %329 = vector.extract_strided_slice %2 {offsets = [0, 12], sizes = [24, 1], strides = [1, 1]} : vector<24x24xf32> to vector<24x1xf32>
    %330 = vector.extract_strided_slice %257 {offsets = [12, 0], sizes = [1, 256], strides = [1, 1]} : vector<24x256xf32> to vector<1x256xf32>
    %331 = vector.broadcast %329 : vector<24x1xf32> to vector<24x256xf32>
    %332 = vector.broadcast %330 : vector<1x256xf32> to vector<24x256xf32>
    %333 = arith.mulf %331, %332 : vector<24x256xf32>
    %334 = arith.addf %328, %333 : vector<24x256xf32>
    %335 = vector.extract_strided_slice %2 {offsets = [0, 13], sizes = [24, 1], strides = [1, 1]} : vector<24x24xf32> to vector<24x1xf32>
    %336 = vector.extract_strided_slice %257 {offsets = [13, 0], sizes = [1, 256], strides = [1, 1]} : vector<24x256xf32> to vector<1x256xf32>
    %337 = vector.broadcast %335 : vector<24x1xf32> to vector<24x256xf32>
    %338 = vector.broadcast %336 : vector<1x256xf32> to vector<24x256xf32>
    %339 = arith.mulf %337, %338 : vector<24x256xf32>
    %340 = arith.addf %334, %339 : vector<24x256xf32>
    %341 = vector.extract_strided_slice %2 {offsets = [0, 14], sizes = [24, 1], strides = [1, 1]} : vector<24x24xf32> to vector<24x1xf32>
    %342 = vector.extract_strided_slice %257 {offsets = [14, 0], sizes = [1, 256], strides = [1, 1]} : vector<24x256xf32> to vector<1x256xf32>
    %343 = vector.broadcast %341 : vector<24x1xf32> to vector<24x256xf32>
    %344 = vector.broadcast %342 : vector<1x256xf32> to vector<24x256xf32>
    %345 = arith.mulf %343, %344 : vector<24x256xf32>
    %346 = arith.addf %340, %345 : vector<24x256xf32>
    %347 = vector.extract_strided_slice %2 {offsets = [0, 15], sizes = [24, 1], strides = [1, 1]} : vector<24x24xf32> to vector<24x1xf32>
    %348 = vector.extract_strided_slice %257 {offsets = [15, 0], sizes = [1, 256], strides = [1, 1]} : vector<24x256xf32> to vector<1x256xf32>
    %349 = vector.broadcast %347 : vector<24x1xf32> to vector<24x256xf32>
    %350 = vector.broadcast %348 : vector<1x256xf32> to vector<24x256xf32>
    %351 = arith.mulf %349, %350 : vector<24x256xf32>
    %352 = arith.addf %346, %351 : vector<24x256xf32>
    %353 = vector.extract_strided_slice %2 {offsets = [0, 16], sizes = [24, 1], strides = [1, 1]} : vector<24x24xf32> to vector<24x1xf32>
    %354 = vector.extract_strided_slice %257 {offsets = [16, 0], sizes = [1, 256], strides = [1, 1]} : vector<24x256xf32> to vector<1x256xf32>
    %355 = vector.broadcast %353 : vector<24x1xf32> to vector<24x256xf32>
    %356 = vector.broadcast %354 : vector<1x256xf32> to vector<24x256xf32>
    %357 = arith.mulf %355, %356 : vector<24x256xf32>
    %358 = arith.addf %352, %357 : vector<24x256xf32>
    %359 = vector.extract_strided_slice %2 {offsets = [0, 17], sizes = [24, 1], strides = [1, 1]} : vector<24x24xf32> to vector<24x1xf32>
    %360 = vector.extract_strided_slice %257 {offsets = [17, 0], sizes = [1, 256], strides = [1, 1]} : vector<24x256xf32> to vector<1x256xf32>
    %361 = vector.broadcast %359 : vector<24x1xf32> to vector<24x256xf32>
    %362 = vector.broadcast %360 : vector<1x256xf32> to vector<24x256xf32>
    %363 = arith.mulf %361, %362 : vector<24x256xf32>
    %364 = arith.addf %358, %363 : vector<24x256xf32>
    %365 = vector.extract_strided_slice %2 {offsets = [0, 18], sizes = [24, 1], strides = [1, 1]} : vector<24x24xf32> to vector<24x1xf32>
    %366 = vector.extract_strided_slice %257 {offsets = [18, 0], sizes = [1, 256], strides = [1, 1]} : vector<24x256xf32> to vector<1x256xf32>
    %367 = vector.broadcast %365 : vector<24x1xf32> to vector<24x256xf32>
    %368 = vector.broadcast %366 : vector<1x256xf32> to vector<24x256xf32>
    %369 = arith.mulf %367, %368 : vector<24x256xf32>
    %370 = arith.addf %364, %369 : vector<24x256xf32>
    %371 = vector.extract_strided_slice %2 {offsets = [0, 19], sizes = [24, 1], strides = [1, 1]} : vector<24x24xf32> to vector<24x1xf32>
    %372 = vector.extract_strided_slice %257 {offsets = [19, 0], sizes = [1, 256], strides = [1, 1]} : vector<24x256xf32> to vector<1x256xf32>
    %373 = vector.broadcast %371 : vector<24x1xf32> to vector<24x256xf32>
    %374 = vector.broadcast %372 : vector<1x256xf32> to vector<24x256xf32>
    %375 = arith.mulf %373, %374 : vector<24x256xf32>
    %376 = arith.addf %370, %375 : vector<24x256xf32>
    %377 = vector.extract_strided_slice %2 {offsets = [0, 20], sizes = [24, 1], strides = [1, 1]} : vector<24x24xf32> to vector<24x1xf32>
    %378 = vector.extract_strided_slice %257 {offsets = [20, 0], sizes = [1, 256], strides = [1, 1]} : vector<24x256xf32> to vector<1x256xf32>
    %379 = vector.broadcast %377 : vector<24x1xf32> to vector<24x256xf32>
    %380 = vector.broadcast %378 : vector<1x256xf32> to vector<24x256xf32>
    %381 = arith.mulf %379, %380 : vector<24x256xf32>
    %382 = arith.addf %376, %381 : vector<24x256xf32>
    %383 = vector.extract_strided_slice %2 {offsets = [0, 21], sizes = [24, 1], strides = [1, 1]} : vector<24x24xf32> to vector<24x1xf32>
    %384 = vector.extract_strided_slice %257 {offsets = [21, 0], sizes = [1, 256], strides = [1, 1]} : vector<24x256xf32> to vector<1x256xf32>
    %385 = vector.broadcast %383 : vector<24x1xf32> to vector<24x256xf32>
    %386 = vector.broadcast %384 : vector<1x256xf32> to vector<24x256xf32>
    %387 = arith.mulf %385, %386 : vector<24x256xf32>
    %388 = arith.addf %382, %387 : vector<24x256xf32>
    %389 = vector.extract_strided_slice %2 {offsets = [0, 22], sizes = [24, 1], strides = [1, 1]} : vector<24x24xf32> to vector<24x1xf32>
    %390 = vector.extract_strided_slice %257 {offsets = [22, 0], sizes = [1, 256], strides = [1, 1]} : vector<24x256xf32> to vector<1x256xf32>
    %391 = vector.broadcast %389 : vector<24x1xf32> to vector<24x256xf32>
    %392 = vector.broadcast %390 : vector<1x256xf32> to vector<24x256xf32>
    %393 = arith.mulf %391, %392 : vector<24x256xf32>
    %394 = arith.addf %388, %393 : vector<24x256xf32>
    %395 = vector.extract_strided_slice %2 {offsets = [0, 23], sizes = [24, 1], strides = [1, 1]} : vector<24x24xf32> to vector<24x1xf32>
    %396 = vector.extract_strided_slice %257 {offsets = [23, 0], sizes = [1, 256], strides = [1, 1]} : vector<24x256xf32> to vector<1x256xf32>
    %397 = vector.broadcast %395 : vector<24x1xf32> to vector<24x256xf32>
    %398 = vector.broadcast %396 : vector<1x256xf32> to vector<24x256xf32>
    %399 = arith.mulf %397, %398 : vector<24x256xf32>
    %400 = arith.addf %394, %399 : vector<24x256xf32>
    %401 = vector.broadcast %3 : vector<24x1xf32> to vector<24x256xf32>
    %402 = arith.addf %400, %401 : vector<24x256xf32>
    %cst_42 = arith.constant dense<0.000000e+00> : vector<24xf32>
    %403 = vector.multi_reduction <add>, %402, %cst_42 [1] : vector<24x256xf32> to vector<24xf32>
    %404 = vector.shape_cast %403 : vector<24xf32> to vector<24x1xf32>
    %405 = arith.mulf %402, %402 : vector<24x256xf32>
    %cst_43 = arith.constant dense<0.000000e+00> : vector<24xf32>
    %406 = vector.multi_reduction <add>, %405, %cst_43 [1] : vector<24x256xf32> to vector<24xf32>
    %407 = vector.shape_cast %406 : vector<24xf32> to vector<24x1xf32>
    %408 = vector.broadcast %404 : vector<24x1xf32> to vector<24x4xf32>
    %409 = arith.mulf %6, %408 : vector<24x4xf32>
    %cst_44 = arith.constant dense<0.000000e+00> : vector<4xf32>
    %410 = vector.multi_reduction <add>, %409, %cst_44 [0] : vector<24x4xf32> to vector<4xf32>
    %411 = vector.shape_cast %410 : vector<4xf32> to vector<1x4xf32>
    %cst_45 = arith.constant 6.51041686E-4 : f32
    %412 = vector.broadcast %cst_45 : f32 to vector<1x4xf32>
    %413 = arith.mulf %411, %412 : vector<1x4xf32>
    %414 = vector.broadcast %407 : vector<24x1xf32> to vector<24x4xf32>
    %415 = arith.mulf %6, %414 : vector<24x4xf32>
    %cst_46 = arith.constant dense<0.000000e+00> : vector<4xf32>
    %416 = vector.multi_reduction <add>, %415, %cst_46 [0] : vector<24x4xf32> to vector<4xf32>
    %417 = vector.shape_cast %416 : vector<4xf32> to vector<1x4xf32>
    %cst_47 = arith.constant 6.51041686E-4 : f32
    %418 = vector.broadcast %cst_47 : f32 to vector<1x4xf32>
    %419 = arith.mulf %417, %418 : vector<1x4xf32>
    %420 = arith.mulf %413, %413 : vector<1x4xf32>
    %421 = arith.subf %419, %420 : vector<1x4xf32>
    %cst_48 = arith.constant 9.99999974E-6 : f32
    %422 = vector.broadcast %cst_48 : f32 to vector<1x4xf32>
    %423 = arith.addf %421, %422 : vector<1x4xf32>
    %424 = math.rsqrt %423 : vector<1x4xf32>
    %425 = vector.broadcast %413 : vector<1x4xf32> to vector<24x4xf32>
    %426 = arith.mulf %6, %425 : vector<24x4xf32>
    %cst_49 = arith.constant dense<0.000000e+00> : vector<24xf32>
    %427 = vector.multi_reduction <add>, %426, %cst_49 [1] : vector<24x4xf32> to vector<24xf32>
    %428 = vector.shape_cast %427 : vector<24xf32> to vector<24x1xf32>
    %429 = vector.broadcast %424 : vector<1x4xf32> to vector<24x4xf32>
    %430 = arith.mulf %6, %429 : vector<24x4xf32>
    %cst_50 = arith.constant dense<0.000000e+00> : vector<24xf32>
    %431 = vector.multi_reduction <add>, %430, %cst_50 [1] : vector<24x4xf32> to vector<24xf32>
    %432 = vector.shape_cast %431 : vector<24xf32> to vector<24x1xf32>
    %433 = vector.broadcast %428 : vector<24x1xf32> to vector<24x256xf32>
    %434 = arith.subf %402, %433 : vector<24x256xf32>
    %435 = arith.mulf %432, %4 : vector<24x1xf32>
    %436 = vector.broadcast %435 : vector<24x1xf32> to vector<24x256xf32>
    %437 = arith.mulf %434, %436 : vector<24x256xf32>
    %438 = vector.broadcast %5 : vector<24x1xf32> to vector<24x256xf32>
    %439 = arith.addf %437, %438 : vector<24x256xf32>
    %cst_51 = arith.constant 3.000000e+00 : f32
    %440 = vector.broadcast %cst_51 : f32 to vector<24x256xf32>
    %441 = arith.addf %439, %440 : vector<24x256xf32>
    %cst_52 = arith.constant 0.000000e+00 : f32
    %cst_53 = arith.constant 6.000000e+00 : f32
    %442 = vector.broadcast %cst_52 : f32 to vector<24x256xf32>
    %443 = arith.maximumf %442, %441 : vector<24x256xf32>
    %444 = vector.broadcast %cst_53 : f32 to vector<24x256xf32>
    %445 = arith.minimumf %444, %443 : vector<24x256xf32>
    %446 = arith.mulf %439, %445 : vector<24x256xf32>
    %cst_54 = arith.constant 0.166666672 : f32
    %447 = vector.broadcast %cst_54 : f32 to vector<24x256xf32>
    %448 = arith.mulf %446, %447 : vector<24x256xf32>
    %cst_55 = arith.constant 0.000000e+00 : f32
    %cst_56 = arith.constant 6.000000e+00 : f32
    %449 = vector.broadcast %cst_55 : f32 to vector<24x256xf32>
    %450 = arith.maximumf %449, %439 : vector<24x256xf32>
    %451 = vector.broadcast %cst_56 : f32 to vector<24x256xf32>
    %452 = arith.minimumf %451, %450 : vector<24x256xf32>
    %cst_57 = arith.constant 0.000000e+00 : f32
    %453 = vector.broadcast %cst_57 : f32 to vector<24x256xf32>
    %454 = arith.minimumf %439, %453 : vector<24x256xf32>
    %cst_58 = arith.constant 0.00999999977 : f32
    %455 = vector.broadcast %cst_58 : f32 to vector<24x256xf32>
    %456 = arith.mulf %455, %454 : vector<24x256xf32>
    %457 = arith.addf %452, %456 : vector<24x256xf32>
    %cst_59 = arith.constant -3.000000e+00 : f32
    %458 = vector.broadcast %cst_59 : f32 to vector<24x256xf32>
    %459 = arith.cmpf oge, %439, %458 : vector<24x256xf32>
    %cst_60 = arith.constant 3.000000e+00 : f32
    %460 = vector.broadcast %cst_60 : f32 to vector<24x256xf32>
    %461 = arith.cmpf ole, %439, %460 : vector<24x256xf32>
    %462 = arith.andi %459, %461 : vector<24x256xi1>
    %463 = arith.select %462, %448, %457 : vector<24x256xi1>, vector<24x256xf32>
    %cst_61 = arith.constant dense<0.000000e+00> : vector<24xf32>
    %464 = vector.multi_reduction <add>, %463, %cst_61 [1] : vector<24x256xf32> to vector<24xf32>
    %465 = vector.shape_cast %464 : vector<24xf32> to vector<24x1xf32>
    %cst_62 = arith.constant 3.906250e-03 : f32
    %466 = vector.broadcast %cst_62 : f32 to vector<24x1xf32>
    %467 = arith.mulf %465, %466 : vector<24x1xf32>
    %468 = vector.broadcast %467 : vector<24x1xf32> to vector<24x8xf32>
    %469 = arith.mulf %7, %468 : vector<24x8xf32>
    %cst_63 = arith.constant dense<0.000000e+00> : vector<8xf32>
    %470 = vector.multi_reduction <add>, %469, %cst_63 [0] : vector<24x8xf32> to vector<8xf32>
    %471 = vector.shape_cast %470 : vector<8xf32> to vector<1x8xf32>
    %cst_64 = arith.constant 0.000000e+00 : f32
    %472 = vector.broadcast %cst_64 : f32 to vector<1x8xf32>
    %473 = arith.maximumf %471, %472 : vector<1x8xf32>
    %474 = vector.broadcast %473 : vector<1x8xf32> to vector<24x8xf32>
    %475 = arith.mulf %8, %474 : vector<24x8xf32>
    %cst_65 = arith.constant dense<0.000000e+00> : vector<24xf32>
    %476 = vector.multi_reduction <add>, %475, %cst_65 [1] : vector<24x8xf32> to vector<24xf32>
    %477 = vector.shape_cast %476 : vector<24xf32> to vector<24x1xf32>
    %cst_66 = arith.constant 0.166666672 : f32
    %478 = vector.broadcast %cst_66 : f32 to vector<24x1xf32>
    %479 = arith.mulf %477, %478 : vector<24x1xf32>
    %cst_67 = arith.constant 5.000000e-01 : f32
    %480 = vector.broadcast %cst_67 : f32 to vector<24x1xf32>
    %481 = arith.addf %479, %480 : vector<24x1xf32>
    %cst_68 = arith.constant 0.000000e+00 : f32
    %cst_69 = arith.constant 1.000000e+00 : f32
    %482 = vector.broadcast %cst_68 : f32 to vector<24x1xf32>
    %483 = arith.maximumf %482, %481 : vector<24x1xf32>
    %484 = vector.broadcast %cst_69 : f32 to vector<24x1xf32>
    %485 = arith.minimumf %484, %483 : vector<24x1xf32>
    %486 = vector.broadcast %9 : vector<24x1xf32> to vector<24x256xf32>
    %487 = arith.mulf %486, %463 : vector<24x256xf32>
    %cst_70 = arith.constant dense<0.000000e+00> : vector<256xf32>
    %488 = vector.multi_reduction <add>, %487, %cst_70 [0] : vector<24x256xf32> to vector<256xf32>
    %489 = vector.shape_cast %488 : vector<256xf32> to vector<1x256xf32>
    %490 = arith.negf %489 : vector<1x256xf32>
    %491 = math.exp %490 : vector<1x256xf32>
    %cst_71 = arith.constant 1.000000e+00 : f32
    %492 = vector.broadcast %cst_71 : f32 to vector<1x256xf32>
    %493 = arith.addf %492, %491 : vector<1x256xf32>
    %494 = arith.divf %492, %493 : vector<1x256xf32>
    %495 = vector.broadcast %485 : vector<24x1xf32> to vector<24x256xf32>
    %496 = vector.broadcast %494 : vector<1x256xf32> to vector<24x256xf32>
    %497 = arith.addf %495, %496 : vector<24x256xf32>
    %498 = arith.mulf %463, %497 : vector<24x256xf32>
    %c0_72 = arith.constant 0 : index
    %c1_73 = arith.constant 1 : index
    %c0_74 = arith.constant 0 : index
    %c0_75 = arith.constant 0 : index
    %499 = vector.load %arg4[%c0_72, %c1_73, %c0_74, %c0_75] : memref<1x2x24x256xf32, #tpu.memory_space<vmem>>, vector<1x1x24x256xf32>
    %500 = vector.shape_cast %499 : vector<1x1x24x256xf32> to vector<24x256xf32>
    %501 = vector.shape_cast %498 : vector<24x256xf32> to vector<1x1x24x256xf32>
    tpu.vector_store %arg4[%c0_72, %c1_73, %c0_74, %c0_75], %501 {strides = array<i32>} : memref<1x2x24x256xf32, #tpu.memory_space<vmem>>, vector<1x1x24x256xf32>,
    return
  }
  func.func @transform_0(%arg0: i32, %arg1: i32) -> (i32, i32, i32, i32) {
    %c0_i32 = arith.constant 0 : i32
    %c0_i32_0 = arith.constant 0 : i32
    %c0_i32_1 = arith.constant 0 : i32
    return %arg0, %arg1, %c0_i32, %c0_i32_0 : i32, i32, i32, i32
  }
  func.func @transform_1(%arg0: i32, %arg1: i32) -> (i32, i32, i32) {
    %c0_i32 = arith.constant 0 : i32
    %c0_i32_0 = arith.constant 0 : i32
    %c0_i32_1 = arith.constant 0 : i32
    return %arg0, %c0_i32, %c0_i32_0 : i32, i32, i32
  }
  func.func @transform_2(%arg0: i32, %arg1: i32) -> (i32, i32, i32, i32) {
    %c0_i32 = arith.constant 0 : i32
    %c0_i32_0 = arith.constant 0 : i32
    %c0_i32_1 = arith.constant 0 : i32
    return %arg0, %arg1, %c0_i32, %c0_i32_0 : i32, i32, i32, i32
  }
}

</mosaic_0001>

<llo_original>
// kernel: _lambda_.2
$region0: #{_lambda_.2}
  #allocation0 [shape = 'u32[]', space=smem, size = 0x4, offset = 0x4, fixed_abs, tag = 'smem constant byte address 0x4 - core index']
  #allocation1 [shape = 'u32[144,128]{1,0:T(1,128)}', space=vmem, size = 0x12000, scoped, tag = 'internal scratch']
  %s0 = inlined_call_operand.vmem [shape: f32[2,8,256], index: 0, kind: input, shape index: {}]
  %s1 = inlined_call_operand.vmem [shape: f32[3,24,15], index: 1, kind: input, shape index: {}]
  %s2 = inlined_call_operand.vmem [shape: f32[3,2,24,256], index: 2, kind: output, shape index: {}]
  %s3 = sld [smem:[#allocation0]]
  $region41: #{_lambda_.2} parent=0
    _
  %s5 = ssub.s32 1, %s3
  %s6 = scalar_select 0, %s5, %s3
  loop: start=0, step=1, limit=5
  $region2: #{_lambda_.2} parent=0 // loop_pre_header
    _
  $region3: #{_lambda_.2} parent=0 // loop_header
    %s8 = sphi 0, %s12
    %p9 = scmp.ge.s32.totalorder %s8, 5
    %s15 = sphi 0, %s27
    %s16 = sphi 0, %s23
    %s17 = sphi 0, %s15
    %s18 = sphi 0, %s16
    %s19 = sphi 0, %s17
    %s20 = sphi 0, %s18
    %s30 = sphi 0, %s32
    %s33 = sphi 0, %s30
    %s34 = sphi 0, %s33
    %s50 = sphi 0, %s34
    %s56 = sphi 0, %s58
    %s59 = sphi 0, %s56
    %s60 = sphi 0, %s59
    %s76 = sphi 0, %s60
    %s84 = sphi 0, %s86
    %s87 = sphi 0, %s84
    %s88 = sphi 0, %s87
    %s104 = sphi 0, %s88
  $region4: #{_lambda_.2} parent=0 // loop_header_branch
    %11 = sbr.rel (%p9) target = $region8
  $region5: #{_lambda_.2} parent=0 // loop_body
    %s13 = ssub.s32 %s8, 1
    %s14 = ssub.s32 %s8, 2
    %s21 = sadd.s32 1, %s16
    %p22 = scmp.ge.s32.totalorder %s21, 1
    %s23 = scalar_select %p22, 0, %s21
    %s24 = sadd.s32 1, %s15
    %s25 = scalar_select %p22, %s24, %s15
    %p26 = scmp.ge.s32.totalorder %s25, 3
    %s27 = scalar_select %p26, 0, %s25
    %s28 = ssub.s32 %s16, %s23
    %p29 = scmp.eq.s32.totalorder %s28, 0
    %s31 = sadd.s32 %s30, 1
    %s32 = scalar_select %p29, %s30, %s31
    %p35 = pneg %p29
    %p36 = scmp.eq.s32.totalorder %s8, 2
    %p37 = por %p35, %p36
    %p38 = scmp.ne.s32.totalorder %s30, %s33
    %p39 = scmp.eq.s32.totalorder %s8, 0
    %p40 = por %p38, %p39
    %p41 = scmp.ne.s32.totalorder %s30, %s33
    %p42 = scmp.eq.s32.totalorder %s13, 2
    %p43 = por %p41, %p42
    %p44 = scmp.ne.s32.totalorder %s33, %s34
    %p45 = scmp.eq.s32.totalorder %s13, 0
    %p46 = por %p44, %p45
    %p47 = scmp.ne.s32.totalorder %s33, %s34
    %p48 = scmp.eq.s32.totalorder %s14, 2
    %p49 = por %p47, %p48
    %p51 = scmp.ne.s32.totalorder %s34, %s50
    %p52 = scmp.eq.s32.totalorder %s14, 0
    %p53 = por %p51, %p52
    %s54 = ssub.s32 %s15, %s27
    %p55 = scmp.eq.s32.totalorder %s54, 0
    %s57 = sadd.s32 %s56, 1
    %s58 = scalar_select %p55, %s56, %s57
    %p61 = pneg %p55
    %p62 = scmp.eq.s32.totalorder %s8, 2
    %p63 = por %p61, %p62
    %p64 = scmp.ne.s32.totalorder %s56, %s59
    %p65 = scmp.eq.s32.totalorder %s8, 0
    %p66 = por %p64, %p65
    %p67 = scmp.ne.s32.totalorder %s56, %s59
    %p68 = scmp.eq.s32.totalorder %s13, 2
    %p69 = por %p67, %p68
    %p70 = scmp.ne.s32.totalorder %s59, %s60
    %p71 = scmp.eq.s32.totalorder %s13, 0
    %p72 = por %p70, %p71
    %p73 = scmp.ne.s32.totalorder %s59, %s60
    %p74 = scmp.eq.s32.totalorder %s14, 2
    %p75 = por %p73, %p74
    %p77 = scmp.ne.s32.totalorder %s60, %s76
    %p78 = scmp.eq.s32.totalorder %s14, 0
    %p79 = por %p77, %p78
    %s80 = ssub.s32 %s15, %s27
    %s81 = ssub.s32 %s16, %s23
    %s82 = sor.u32 %s80, %s81
    %p83 = scmp.eq.s32.totalorder %s82, 0
    %s85 = sadd.s32 %s84, 1
    %s86 = scalar_select %p83, %s84, %s85
    %p89 = pneg %p83
    %p90 = scmp.eq.s32.totalorder %s8, 2
    %p91 = por %p89, %p90
    %p92 = scmp.ne.s32.totalorder %s84, %s87
    %p93 = scmp.eq.s32.totalorder %s8, 0
    %p94 = por %p92, %p93
    %p95 = scmp.ne.s32.totalorder %s84, %s87
    %p96 = scmp.eq.s32.totalorder %s13, 2
    %p97 = por %p95, %p96
    %p98 = scmp.ne.s32.totalorder %s87, %s88
    %p99 = scmp.eq.s32.totalorder %s13, 0
    %p100 = por %p98, %p99
    %p101 = scmp.ne.s32.totalorder %s87, %s88
    %p102 = scmp.eq.s32.totalorder %s14, 2
    %p103 = por %p101, %p102
    %p105 = scmp.ne.s32.totalorder %s88, %s104
    %p106 = scmp.eq.s32.totalorder %s14, 0
    %p107 = por %p105, %p106
    %p108 = scmp.le.s32.totalorder 1, %s8
    %p109 = scmp.lt.s32.totalorder %s8, 4
    %p110 = pnand %p108, %p109
    %p111 = pneg %p110
    // Predicated region
    $region9: #{_lambda_.2} parent=5 // pred_check
      _
    $region10: #{_lambda_.2} parent=5 // pred_check_branch
      %113 = sbr.rel (%p110) target = $region12
    $region11: #{_lambda_.2} parent=5 // pred_region
      %s114 = ssub.s32 %s8, 1
      // Predicated region
      $region13: #{_lambda_.2} parent=11 // pred_check
        %p115 = pneg %p46
      $region14: #{_lambda_.2} parent=11 // pred_check_branch
        %117 = sbr.rel (%p115) target = $region16
      $region15: #{_lambda_.2} parent=11 // pred_region
        %s118 = smul.u32 2, %s18
        %p119 = scmp.lt.s32.totalorder %s118, 1
        %s120 = scalar_select %p119, %s118, 1
        %s121 = smul.addr %s120, 2
        %s122 = smul.addr %s121, 8
        %s123 = scalar_lea.vmem %s0, %s122
        %s124 = smul.u32 2, %s18
      $region16: #{_lambda_.2} parent=11 // pred_fallthru
        _
    $region12: #{_lambda_.2} parent=5 // pred_fallthru
      _
    %p125 = scmp.lt.s32.totalorder %s8, 3
    // Predicated region
    $region17: #{_lambda_.2} parent=5 // pred_check
      %p126 = pneg %p125
    $region18: #{_lambda_.2} parent=5 // pred_check_branch
      %128 = sbr.rel (%p126) target = $region20
    $region19: #{_lambda_.2} parent=5 // pred_region
      // Predicated region
      $region21: #{_lambda_.2} parent=19 // pred_check
        %p129 = pneg %p66
      $region22: #{_lambda_.2} parent=19 // pred_check_branch
        %131 = sbr.rel (%p129) target = $region24
      $region23: #{_lambda_.2} parent=19 // pred_region
        %p132 = scmp.lt.s32.totalorder %s15, 2
        %s133 = scalar_select %p132, %s15, 2
        %s134 = smul.addr %s133, 3
        %s135 = smul.addr %s134, 8
        %s136 = scalar_lea.vmem %s1, %s135
      $region24: #{_lambda_.2} parent=19 // pred_fallthru
        _
    $region20: #{_lambda_.2} parent=5 // pred_fallthru
      _
    %p137 = scmp.le.s32.totalorder 1, %s8
    %p138 = scmp.lt.s32.totalorder %s8, 4
    %p139 = pnand %p137, %p138
    %p140 = pneg %p139
    // Predicated region
    $region25: #{_lambda_.2} parent=5 // pred_check
      _
    $region26: #{_lambda_.2} parent=5 // pred_check_branch
      %142 = sbr.rel (%p139) target = $region28
    $region27: #{_lambda_.2} parent=5 // pred_region
      %s143 = ssub.s32 %s8, 1
      %s144 = smul.u32 2, %s18
      %p145 = scmp.lt.s32.totalorder %s144, 1
      %s146 = scalar_select %p145, %s144, 1
      %s147 = smul.addr %s146, 2
      %s148 = smul.addr %s147, 8
      %s149 = scalar_lea.vmem %s0, %s148
      %p150 = pneg %p46
      %p151 = pneg %p43
      %p152 = scmp.lt.s32.totalorder %s17, 2
      %s153 = scalar_select %p152, %s17, 2
      %s154 = smul.addr %s153, 3
      %s155 = smul.addr %s154, 8
      %s156 = scalar_lea.vmem %s1, %s155
      %p157 = pneg %p72
      %p158 = pneg %p69
      %p159 = pneg %p100
      %p160 = pneg %p97
      %s161 = smul.u32 2, %s18
      %p162 = scmp.lt.s32.totalorder %s17, 2
      %s163 = scalar_select %p162, %s17, 2
      %p164 = scmp.lt.s32.totalorder %s161, 1
      %s165 = scalar_select %p164, %s161, 1
      %s166 = smul.addr %s165, 6
      %s167 = smul.addr %s163, 12
      %s168 = sadd.s32 %s166, %s167
      %s169 = smul.addr %s168, 8
      %s170 = scalar_lea.vmem %s2, %s169
      %s171 = smul.u32 2, %s18
      %p172 = scmp.lt.s32.totalorder %s171, 1
      %s173 = scalar_select %p172, %s171, 1
      %s174 = smul.addr %s173, 2
      %s175 = smul.addr %s174, 8
      %s176 = scalar_lea.vmem %s0, %s175
      %s177 = smul.u32 2, %s18
      %p178 = scmp.lt.s32.totalorder %s17, 2
      %s179 = scalar_select %p178, %s17, 2
      %s180 = smul.addr %s179, 3
      %s181 = smul.addr %s180, 8
      %s182 = scalar_lea.vmem %s1, %s181
      %s183 = smul.u32 2, %s18
      %p184 = scmp.lt.s32.totalorder %s17, 2
      %s185 = scalar_select %p184, %s17, 2
      %p186 = scmp.lt.s32.totalorder %s183, 1
      %s187 = scalar_select %p186, %s183, 1
      %s188 = smul.addr %s187, 6
      %s189 = smul.addr %s185, 12
      %s190 = sadd.s32 %s188, %s189
      %s191 = smul.addr %s190, 8
      %s192 = scalar_lea.vmem %s2, %s191
      %s193 = smul.u32 2, %s18
      %v194 = vld [vmem:[%s182] sm:$0xff]
      %v195 = vld [vmem:[%s182 + $0x8] sm:$0xff]
      %v196 = vld [vmem:[%s182 + $0x10] sm:$0xff]
      %v197 = vld [vmem:[%s176] sm:$0xff]
      %v198 = vld [vmem:[%s176 + $0x8] sm:$0xff]
      %200 = vset.pattern.permute.xlu0 0
      %201 = vperm.xlu0 %200, %v194
      %v202 = vpop.permute.xlu0 %201
      %205 = vset.pattern.permute.xlu0 0
      %206 = vperm.xlu0 %205, %v195
      %v207 = vpop.permute.xlu0 %206
      %210 = vset.pattern.permute.xlu0 0
      %211 = vperm.xlu0 %210, %v196
      %v212 = vpop.permute.xlu0 %211
      %v214 = vlaneseq
      %v215 = vshrl.u32 %v214, 7
      %v216 = vsub.s32 0, %v215
      %v217 = vrot.slane %v197, %v216
      %v218 = vlaneseq
      %v219 = vshrl.u32 %v218, 7
      %v220 = vsub.s32 0, %v219
      %v221 = vrot.slane %v198, %v220
      %v222 = vmul.f32 %v202, %v217
      %v223 = vmul.f32 %v202, %v221
      %v224 = vmul.f32 %v207, %v217
      %v225 = vmul.f32 %v207, %v221
      %v226 = vmul.f32 %v212, %v217
      %v227 = vmul.f32 %v212, %v221
      %228 = vset.pattern.permute.xlu0 1
      %229 = vperm.xlu0 %228, %v194
      %v230 = vpop.permute.xlu0 %229
      %232 = vset.pattern.permute.xlu0 1
      %233 = vperm.xlu0 %232, %v195
      %v234 = vpop.permute.xlu0 %233
      %236 = vset.pattern.permute.xlu0 1
      %237 = vperm.xlu0 %236, %v196
      %v238 = vpop.permute.xlu0 %237
      %v240 = vlaneseq
      %v241 = vshrl.u32 %v240, 7
      %v242 = vsub.s32 1, %v241
      %v243 = vrot.slane %v197, %v242
      %v244 = vlaneseq
      %v245 = vshrl.u32 %v244, 7
      %v246 = vsub.s32 1, %v245
      %v247 = vrot.slane %v198, %v246
      %v248 = vmul.f32 %v230, %v243
      %v249 = vmul.f32 %v230, %v247
      %v250 = vmul.f32 %v234, %v243
      %v251 = vmul.f32 %v234, %v247
      %v252 = vmul.f32 %v238, %v243
      %v253 = vmul.f32 %v238, %v247
      %v254 = vadd.f32 %v222, %v248
      %v255 = vadd.f32 %v223, %v249
      %v256 = vadd.f32 %v224, %v250
      %v257 = vadd.f32 %v225, %v251
      %v258 = vadd.f32 %v226, %v252
      %v259 = vadd.f32 %v227, %v253
      %260 = vset.pattern.permute.xlu0 2
      %261 = vperm.xlu0 %260, %v194
      %v262 = vpop.permute.xlu0 %261
      %264 = vset.pattern.permute.xlu0 2
      %265 = vperm.xlu0 %264, %v195
      %v266 = vpop.permute.xlu0 %265
      %268 = vset.pattern.permute.xlu0 2
      %269 = vperm.xlu0 %268, %v196
      %v270 = vpop.permute.xlu0 %269
      %v272 = vlaneseq
      %v273 = vshrl.u32 %v272, 7
      %v274 = vsub.s32 2, %v273
      %v275 = vrot.slane %v197, %v274
      %v276 = vlaneseq
      %v277 = vshrl.u32 %v276, 7
      %v278 = vsub.s32 2, %v277
      %v279 = vrot.slane %v198, %v278
      %v280 = vmul.f32 %v262, %v275
      %v281 = vmul.f32 %v262, %v279
      %v282 = vmul.f32 %v266, %v275
      %v283 = vmul.f32 %v266, %v279
      %v284 = vmul.f32 %v270, %v275
      %v285 = vmul.f32 %v270, %v279
      %v286 = vadd.f32 %v254, %v280
      %v287 = vadd.f32 %v255, %v281
      %v288 = vadd.f32 %v256, %v282
      %v289 = vadd.f32 %v257, %v283
      %v290 = vadd.f32 %v258, %v284
      %v291 = vadd.f32 %v259, %v285
      %292 = vset.pattern.permute.xlu0 3
      %293 = vperm.xlu0 %292, %v194
      %v294 = vpop.permute.xlu0 %293
      %296 = vset.pattern.permute.xlu0 3
      %297 = vperm.xlu0 %296, %v195
      %v298 = vpop.permute.xlu0 %297
      %300 = vset.pattern.permute.xlu0 3
      %301 = vperm.xlu0 %300, %v196
      %v302 = vpop.permute.xlu0 %301
      %v304 = vlaneseq
      %v305 = vshrl.u32 %v304, 7
      %v306 = vsub.s32 3, %v305
      %v307 = vrot.slane %v197, %v306
      %v308 = vlaneseq
      %v309 = vshrl.u32 %v308, 7
      %v310 = vsub.s32 3, %v309
      %v311 = vrot.slane %v198, %v310
      %v312 = vmul.f32 %v294, %v307
      %v313 = vmul.f32 %v294, %v311
      %v314 = vmul.f32 %v298, %v307
      %v315 = vmul.f32 %v298, %v311
      %v316 = vmul.f32 %v302, %v307
      %v317 = vmul.f32 %v302, %v311
      %v318 = vadd.f32 %v286, %v312
      %v319 = vadd.f32 %v287, %v313
      %v320 = vadd.f32 %v288, %v314
      %v321 = vadd.f32 %v289, %v315
      %v322 = vadd.f32 %v290, %v316
      %v323 = vadd.f32 %v291, %v317
      %324 = vset.pattern.permute.xlu0 4
      %325 = vperm.xlu0 %324, %v194
      %v326 = vpop.permute.xlu0 %325
      %328 = vset.pattern.permute.xlu0 4
      %329 = vperm.xlu0 %328, %v195
      %v330 = vpop.permute.xlu0 %329
      %332 = vset.pattern.permute.xlu0 4
      %333 = vperm.xlu0 %332, %v196
      %v334 = vpop.permute.xlu0 %333
      %v336 = vlaneseq
      %v337 = vshrl.u32 %v336, 7
      %v338 = vsub.s32 4, %v337
      %v339 = vrot.slane %v197, %v338
      %v340 = vlaneseq
      %v341 = vshrl.u32 %v340, 7
      %v342 = vsub.s32 4, %v341
      %v343 = vrot.slane %v198, %v342
      %v344 = vmul.f32 %v326, %v339
      %v345 = vmul.f32 %v326, %v343
      %v346 = vmul.f32 %v330, %v339
      %v347 = vmul.f32 %v330, %v343
      %v348 = vmul.f32 %v334, %v339
      %v349 = vmul.f32 %v334, %v343
      %v350 = vadd.f32 %v318, %v344
      %v351 = vadd.f32 %v319, %v345
      %v352 = vadd.f32 %v320, %v346
      %v353 = vadd.f32 %v321, %v347
      %v354 = vadd.f32 %v322, %v348
      %v355 = vadd.f32 %v323, %v349
      %356 = vset.pattern.permute.xlu0 5
      %357 = vperm.xlu0 %356, %v194
      %v358 = vpop.permute.xlu0 %357
      %360 = vset.pattern.permute.xlu0 5
      %361 = vperm.xlu0 %360, %v195
      %v362 = vpop.permute.xlu0 %361
      %364 = vset.pattern.permute.xlu0 5
      %365 = vperm.xlu0 %364, %v196
      %v366 = vpop.permute.xlu0 %365
      %v368 = vlaneseq
      %v369 = vshrl.u32 %v368, 7
      %v370 = vsub.s32 5, %v369
      %v371 = vrot.slane %v197, %v370
      %v372 = vlaneseq
      %v373 = vshrl.u32 %v372, 7
      %v374 = vsub.s32 5, %v373
      %v375 = vrot.slane %v198, %v374
      %v376 = vmul.f32 %v358, %v371
      %v377 = vmul.f32 %v358, %v375
      %v378 = vmul.f32 %v362, %v371
      %v379 = vmul.f32 %v362, %v375
      %v380 = vmul.f32 %v366, %v371
      %v381 = vmul.f32 %v366, %v375
      %v382 = vadd.f32 %v350, %v376
      %v383 = vadd.f32 %v351, %v377
      %v384 = vadd.f32 %v352, %v378
      %v385 = vadd.f32 %v353, %v379
      %v386 = vadd.f32 %v354, %v380
      %v387 = vadd.f32 %v355, %v381
      %388 = vset.pattern.permute.xlu0 6
      %389 = vperm.xlu0 %388, %v194
      %v390 = vpop.permute.xlu0 %389
      %392 = vset.pattern.permute.xlu0 6
      %393 = vperm.xlu0 %392, %v195
      %v394 = vpop.permute.xlu0 %393
      %396 = vset.pattern.permute.xlu0 6
      %397 = vperm.xlu0 %396, %v196
      %v398 = vpop.permute.xlu0 %397
      %v400 = vlaneseq
      %v401 = vshrl.u32 %v400, 7
      %v402 = vsub.s32 6, %v401
      %v403 = vrot.slane %v197, %v402
      %v404 = vlaneseq
      %v405 = vshrl.u32 %v404, 7
      %v406 = vsub.s32 6, %v405
      %v407 = vrot.slane %v198, %v406
      %v408 = vmul.f32 %v390, %v403
      %v409 = vmul.f32 %v390, %v407
      %v410 = vmul.f32 %v394, %v403
      %v411 = vmul.f32 %v394, %v407
      %v412 = vmul.f32 %v398, %v403
      %v413 = vmul.f32 %v398, %v407
      %v414 = vadd.f32 %v382, %v408
      %v415 = vadd.f32 %v383, %v409
      %v416 = vadd.f32 %v384, %v410
      %v417 = vadd.f32 %v385, %v411
      %v418 = vadd.f32 %v386, %v412
      %v419 = vadd.f32 %v387, %v413
      %420 = vset.pattern.permute.xlu0 7
      %421 = vperm.xlu0 %420, %v194
      %v422 = vpop.permute.xlu0 %421
      %424 = vset.pattern.permute.xlu0 7
      %425 = vperm.xlu0 %424, %v195
      %v426 = vpop.permute.xlu0 %425
      %428 = vset.pattern.permute.xlu0 7
      %429 = vperm.xlu0 %428, %v196
      %v430 = vpop.permute.xlu0 %429
      %v432 = vlaneseq
      %v433 = vshrl.u32 %v432, 7
      %v434 = vsub.s32 7, %v433
      %v435 = vrot.slane %v197, %v434
      %v436 = vlaneseq
      %v437 = vshrl.u32 %v436, 7
      %v438 = vsub.s32 7, %v437
      %v439 = vrot.slane %v198, %v438
      %v440 = vmul.f32 %v422, %v435
      %v441 = vmul.f32 %v422, %v439
      %v442 = vmul.f32 %v426, %v435
      %v443 = vmul.f32 %v426, %v439
      %v444 = vmul.f32 %v430, %v435
      %v445 = vmul.f32 %v430, %v439
      %v446 = vadd.f32 %v414, %v440
      %v447 = vadd.f32 %v415, %v441
      %v448 = vadd.f32 %v416, %v442
      %v449 = vadd.f32 %v417, %v443
      %v450 = vadd.f32 %v418, %v444
      %v451 = vadd.f32 %v419, %v445
      %452 = vset.pattern.permute.xlu0 8
      %453 = vperm.xlu0 %452, %v194
      %v454 = vpop.permute.xlu0 %453
      %456 = vset.pattern.permute.xlu0 8
      %457 = vperm.xlu0 %456, %v195
      %v458 = vpop.permute.xlu0 %457
      %460 = vset.pattern.permute.xlu0 8
      %461 = vperm.xlu0 %460, %v196
      %v462 = vpop.permute.xlu0 %461
      %v464 = vadd.f32 %v446, %v454
      %v465 = vadd.f32 %v447, %v454
      %v466 = vadd.f32 %v448, %v458
      %v467 = vadd.f32 %v449, %v458
      %v468 = vadd.f32 %v450, %v462
      %v469 = vadd.f32 %v451, %v462
      %v470 = vadd.f32 %v464, %v465
      %471 = vadd.xlane.f32.xlu0 %v470
      %v472 = vpop.xlane.xlu0 %471
      %v473 = vadd.f32 %v466, %v467
      %474 = vadd.xlane.f32.xlu0 %v473
      %v475 = vpop.xlane.xlu0 %474
      %v476 = vadd.f32 %v468, %v469
      %477 = vadd.xlane.f32.xlu0 %v476
      %v478 = vpop.xlane.xlu0 %477
      %v479 = vmul.f32 %v464, %v464
      %v480 = vmul.f32 %v465, %v465
      %v481 = vmul.f32 %v466, %v466
      %v482 = vmul.f32 %v467, %v467
      %v483 = vmul.f32 %v468, %v468
      %v484 = vmul.f32 %v469, %v469
      %v485 = vadd.f32 %v479, %v480
      %486 = vadd.xlane.f32.xlu0 %v485
      %v487 = vpop.xlane.xlu0 %486
      %v488 = vadd.f32 %v481, %v482
      %489 = vadd.xlane.f32.xlu0 %v488
      %v490 = vpop.xlane.xlu0 %489
      %v491 = vadd.f32 %v483, %v484
      %492 = vadd.xlane.f32.xlu0 %v491
      %v493 = vpop.xlane.xlu0 %492
      %v494 = vmul.f32 %v194, %v472
      %v495 = vmul.f32 %v195, %v475
      %v496 = vmul.f32 %v196, %v478
      %vm497 = vcmask 121944
      %v498 = vsel %vm497, %v494, 0.0
      %v499 = vsel %vm497, %v495, 0.0
      %v500 = vadd.f32 %v498, %v499
      %v501 = vsel %vm497, %v496, 0.0
      %v502 = vadd.f32 %v500, %v501
      %v503 = vrot.slane %v502, 4
      %v504 = vadd.f32 %v502, %v503
      %v505 = vrot.slane %v504, 2
      %v506 = vadd.f32 %v504, %v505
      %v507 = vrot.slane %v506, 1
      %v508 = vadd.f32 %v506, %v507
      %v509 = vmul.f32 %v508, 0.0006510417
      %v510 = vmul.f32 %v194, %v487
      %v511 = vmul.f32 %v195, %v490
      %v512 = vmul.f32 %v196, %v493
      %v513 = vsel %vm497, %v510, 0.0
      %v514 = vsel %vm497, %v511, 0.0
      %v515 = vadd.f32 %v513, %v514
      %v516 = vsel %vm497, %v512, 0.0
      %v517 = vadd.f32 %v515, %v516
      %v518 = vrot.slane %v517, 4
      %v519 = vadd.f32 %v517, %v518
      %v520 = vrot.slane %v519, 2
      %v521 = vadd.f32 %v519, %v520
      %v522 = vrot.slane %v521, 1
      %v523 = vadd.f32 %v521, %v522
      %v524 = vmul.f32 %v523, 0.0006510417
      %v525 = vmul.f32 %v509, %v509
      %v526 = vsub.f32 %v524, %v525
      %v527 = vadd.f32 %v526, 1e-05
      %v528 = vrsqrt.pop %v527
      %v529 = vmul.f32 %v194, %v509
      %v530 = vmul.f32 %v195, %v509
      %v531 = vmul.f32 %v196, %v509
      %535 = vrot.lane.b32.xlu0 %v529, 117
      %v536 = vpop.permute.xlu0 %535
      %537 = vrot.lane.b32.xlu0 %v530, 117
      %v538 = vpop.permute.xlu0 %537
      %539 = vrot.lane.b32.xlu0 %v531, 117
      %v540 = vpop.permute.xlu0 %539
      %vm544 = vcmask 31744
      %v545 = vsel %vm544, %v536, 0.0
      %546 = vadd.xlane.f32.xlu0 %v545
      %v547 = vpop.xlane.xlu0 %546
      %v548 = vsel %vm544, %v538, 0.0
      %549 = vadd.xlane.f32.xlu0 %v548
      %v550 = vpop.xlane.xlu0 %549
      %v551 = vsel %vm544, %v540, 0.0
      %552 = vadd.xlane.f32.xlu0 %v551
      %v553 = vpop.xlane.xlu0 %552
      %v554 = vmul.f32 %v194, %v528
      %v555 = vmul.f32 %v195, %v528
      %v556 = vmul.f32 %v196, %v528
      %560 = vrot.lane.b32.xlu0 %v554, 117
      %v561 = vpop.permute.xlu0 %560
      %562 = vrot.lane.b32.xlu0 %v555, 117
      %v563 = vpop.permute.xlu0 %562
      %564 = vrot.lane.b32.xlu0 %v556, 117
      %v565 = vpop.permute.xlu0 %564
      %v569 = vsel %vm544, %v561, 0.0
      %570 = vadd.xlane.f32.xlu0 %v569
      %v571 = vpop.xlane.xlu0 %570
      %v572 = vsel %vm544, %v563, 0.0
      %573 = vadd.xlane.f32.xlu0 %v572
      %v574 = vpop.xlane.xlu0 %573
      %v575 = vsel %vm544, %v565, 0.0
      %576 = vadd.xlane.f32.xlu0 %v575
      %v577 = vpop.xlane.xlu0 %576
      %v578 = vsub.f32 %v464, %v547
      %v579 = vsub.f32 %v465, %v547
      %v580 = vsub.f32 %v466, %v550
      %v581 = vsub.f32 %v467, %v550
      %v582 = vsub.f32 %v468, %v553
      %v583 = vsub.f32 %v469, %v553
      %v584 = vmul.f32 %v571, %v194
      %v585 = vmul.f32 %v574, %v195
      %v586 = vmul.f32 %v577, %v196
      %588 = vset.pattern.permute.xlu0 9
      %589 = vperm.xlu0 %588, %v584
      %v590 = vpop.permute.xlu0 %589
      %593 = vset.pattern.permute.xlu0 9
      %594 = vperm.xlu0 %593, %v585
      %v595 = vpop.permute.xlu0 %594
      %598 = vset.pattern.permute.xlu0 9
      %599 = vperm.xlu0 %598, %v586
      %v600 = vpop.permute.xlu0 %599
      %v602 = vmul.f32 %v578, %v590
      %v603 = vmul.f32 %v579, %v590
      %v604 = vmul.f32 %v580, %v595
      %v605 = vmul.f32 %v581, %v595
      %v606 = vmul.f32 %v582, %v600
      %v607 = vmul.f32 %v583, %v600
      %608 = vset.pattern.permute.xlu0 10
      %609 = vperm.xlu0 %608, %v194
      %v610 = vpop.permute.xlu0 %609
      %612 = vset.pattern.permute.xlu0 10
      %613 = vperm.xlu0 %612, %v195
      %v614 = vpop.permute.xlu0 %613
      %616 = vset.pattern.permute.xlu0 10
      %617 = vperm.xlu0 %616, %v196
      %v618 = vpop.permute.xlu0 %617
      %v620 = vadd.f32 %v602, %v610
      %v621 = vadd.f32 %v603, %v610
      %v622 = vadd.f32 %v604, %v614
      %v623 = vadd.f32 %v605, %v614
      %v624 = vadd.f32 %v606, %v618
      %v625 = vadd.f32 %v607, %v618
      %v626 = vadd.f32 %v620, 3.0
      %v627 = vadd.f32 %v621, 3.0
      %v628 = vadd.f32 %v622, 3.0
      %v629 = vadd.f32 %v623, 3.0
      %v630 = vadd.f32 %v624, 3.0
      %v631 = vadd.f32 %v625, 3.0
      %v632 = vmax.f32 %v626, 0.0
      %v633 = vmax.f32 %v627, 0.0
      %v634 = vmax.f32 %v628, 0.0
      %v635 = vmax.f32 %v629, 0.0
      %v636 = vmax.f32 %v630, 0.0
      %v637 = vmax.f32 %v631, 0.0
      %v638 = vmin.f32 %v632, 6.0
      %v639 = vmin.f32 %v633, 6.0
      %v640 = vmin.f32 %v634, 6.0
      %v641 = vmin.f32 %v635, 6.0
      %v642 = vmin.f32 %v636, 6.0
      %v643 = vmin.f32 %v637, 6.0
      %v644 = vmul.f32 %v620, %v638
      %v645 = vmul.f32 %v621, %v639
      %v646 = vmul.f32 %v622, %v640
      %v647 = vmul.f32 %v623, %v641
      %v648 = vmul.f32 %v624, %v642
      %v649 = vmul.f32 %v625, %v643
      %v650 = vmul.f32 %v644, 0.16666667
      %v651 = vmul.f32 %v645, 0.16666667
      %v652 = vmul.f32 %v646, 0.16666667
      %v653 = vmul.f32 %v647, 0.16666667
      %v654 = vmul.f32 %v648, 0.16666667
      %v655 = vmul.f32 %v649, 0.16666667
      %v656 = vmax.f32 %v620, 0.0
      %v657 = vmax.f32 %v621, 0.0
      %v658 = vmax.f32 %v622, 0.0
      %v659 = vmax.f32 %v623, 0.0
      %v660 = vmax.f32 %v624, 0.0
      %v661 = vmax.f32 %v625, 0.0
      %v662 = vmin.f32 %v656, 6.0
      %v663 = vmin.f32 %v657, 6.0
      %v664 = vmin.f32 %v658, 6.0
      %v665 = vmin.f32 %v659, 6.0
      %v666 = vmin.f32 %v660, 6.0
      %v667 = vmin.f32 %v661, 6.0
      %v668 = vmin.f32 %v620, 0.0
      %v669 = vmin.f32 %v621, 0.0
      %v670 = vmin.f32 %v622, 0.0
      %v671 = vmin.f32 %v623, 0.0
      %v672 = vmin.f32 %v624, 0.0
      %v673 = vmin.f32 %v625, 0.0
      %v674 = vmul.f32 %v668, 0.01
      %v675 = vmul.f32 %v669, 0.01
      %v676 = vmul.f32 %v670, 0.01
      %v677 = vmul.f32 %v671, 0.01
      %v678 = vmul.f32 %v672, 0.01
      %v679 = vmul.f32 %v673, 0.01
      %v680 = vadd.f32 %v662, %v674
      %v681 = vadd.f32 %v663, %v675
      %v682 = vadd.f32 %v664, %v676
      %v683 = vadd.f32 %v665, %v677
      %v684 = vadd.f32 %v666, %v678
      %v685 = vadd.f32 %v667, %v679
      %vm686 = vcmp.ge.f32.partialorder %v620, -3.0
      %vm687 = vcmp.ge.f32.partialorder %v621, -3.0
      %vm688 = vcmp.ge.f32.partialorder %v622, -3.0
      %vm689 = vcmp.ge.f32.partialorder %v623, -3.0
      %vm690 = vcmp.ge.f32.partialorder %v624, -3.0
      %vm691 = vcmp.ge.f32.partialorder %v625, -3.0
      %vm692 = vcmp.le.f32.partialorder %v620, 3.0
      %vm693 = vcmp.le.f32.partialorder %v621, 3.0
      %vm694 = vcmp.le.f32.partialorder %v622, 3.0
      %vm695 = vcmp.le.f32.partialorder %v623, 3.0
      %vm696 = vcmp.le.f32.partialorder %v624, 3.0
      %vm697 = vcmp.le.f32.partialorder %v625, 3.0
      %vm698 = vmand %vm686, %vm692
      %vm699 = vmand %vm687, %vm693
      %vm700 = vmand %vm688, %vm694
      %vm701 = vmand %vm689, %vm695
      %vm702 = vmand %vm690, %vm696
      %vm703 = vmand %vm691, %vm697
      %v704 = vsel %vm698, %v650, %v680
      %v705 = vsel %vm699, %v651, %v681
      %v706 = vsel %vm700, %v652, %v682
      %v707 = vsel %vm701, %v653, %v683
      %v708 = vsel %vm702, %v654, %v684
      %v709 = vsel %vm703, %v655, %v685
      %710 = vst [vmem:[%s192] sm:$0xff] %v704
      %711 = vst [vmem:[%s192 + $0x8] sm:$0xff] %v705
      %712 = vst [vmem:[%s192 + $0x10] sm:$0xff] %v706
      %713 = vst [vmem:[%s192 + $0x18] sm:$0xff] %v707
      %714 = vst [vmem:[%s192 + $0x20] sm:$0xff] %v708
      %715 = vst [vmem:[%s192 + $0x28] sm:$0xff] %v709
      %s716 = scalar_lea.vmem %s176, 16
      %v717 = vld [vmem:[%s716] sm:$0xff]
      %v718 = vld [vmem:[%s716 + $0x8] sm:$0xff]
      %v719 = vlaneseq
      %v720 = vshrl.u32 %v719, 7
      %v721 = vsub.s32 0, %v720
      %v722 = vrot.slane %v717, %v721
      %v723 = vlaneseq
      %v724 = vshrl.u32 %v723, 7
      %v725 = vsub.s32 0, %v724
      %v726 = vrot.slane %v718, %v725
      %v727 = vmul.f32 %v202, %v722
      %v728 = vmul.f32 %v202, %v726
      %v729 = vmul.f32 %v207, %v722
      %v730 = vmul.f32 %v207, %v726
      %v731 = vmul.f32 %v212, %v722
      %v732 = vmul.f32 %v212, %v726
      %v733 = vlaneseq
      %v734 = vshrl.u32 %v733, 7
      %v735 = vsub.s32 1, %v734
      %v736 = vrot.slane %v717, %v735
      %v737 = vlaneseq
      %v738 = vshrl.u32 %v737, 7
      %v739 = vsub.s32 1, %v738
      %v740 = vrot.slane %v718, %v739
      %v741 = vmul.f32 %v230, %v736
      %v742 = vmul.f32 %v230, %v740
      %v743 = vmul.f32 %v234, %v736
      %v744 = vmul.f32 %v234, %v740
      %v745 = vmul.f32 %v238, %v736
      %v746 = vmul.f32 %v238, %v740
      %v747 = vadd.f32 %v727, %v741
      %v748 = vadd.f32 %v728, %v742
      %v749 = vadd.f32 %v729, %v743
      %v750 = vadd.f32 %v730, %v744
      %v751 = vadd.f32 %v731, %v745
      %v752 = vadd.f32 %v732, %v746
      %v753 = vlaneseq
      %v754 = vshrl.u32 %v753, 7
      %v755 = vsub.s32 2, %v754
      %v756 = vrot.slane %v717, %v755
      %v757 = vlaneseq
      %v758 = vshrl.u32 %v757, 7
      %v759 = vsub.s32 2, %v758
      %v760 = vrot.slane %v718, %v759
      %v761 = vmul.f32 %v262, %v756
      %v762 = vmul.f32 %v262, %v760
      %v763 = vmul.f32 %v266, %v756
      %v764 = vmul.f32 %v266, %v760
      %v765 = vmul.f32 %v270, %v756
      %v766 = vmul.f32 %v270, %v760
      %v767 = vadd.f32 %v747, %v761
      %v768 = vadd.f32 %v748, %v762
      %v769 = vadd.f32 %v749, %v763
      %v770 = vadd.f32 %v750, %v764
      %v771 = vadd.f32 %v751, %v765
      %v772 = vadd.f32 %v752, %v766
      %v773 = vlaneseq
      %v774 = vshrl.u32 %v773, 7
      %v775 = vsub.s32 3, %v774
      %v776 = vrot.slane %v717, %v775
      %v777 = vlaneseq
      %v778 = vshrl.u32 %v777, 7
      %v779 = vsub.s32 3, %v778
      %v780 = vrot.slane %v718, %v779
      %v781 = vmul.f32 %v294, %v776
      %v782 = vmul.f32 %v294, %v780
      %v783 = vmul.f32 %v298, %v776
      %v784 = vmul.f32 %v298, %v780
      %v785 = vmul.f32 %v302, %v776
      %v786 = vmul.f32 %v302, %v780
      %v787 = vadd.f32 %v767, %v781
      %v788 = vadd.f32 %v768, %v782
      %v789 = vadd.f32 %v769, %v783
      %v790 = vadd.f32 %v770, %v784
      %v791 = vadd.f32 %v771, %v785
      %v792 = vadd.f32 %v772, %v786
      %v793 = vlaneseq
      %v794 = vshrl.u32 %v793, 7
      %v795 = vsub.s32 4, %v794
      %v796 = vrot.slane %v717, %v795
      %v797 = vlaneseq
      %v798 = vshrl.u32 %v797, 7
      %v799 = vsub.s32 4, %v798
      %v800 = vrot.slane %v718, %v799
      %v801 = vmul.f32 %v326, %v796
      %v802 = vmul.f32 %v326, %v800
      %v803 = vmul.f32 %v330, %v796
      %v804 = vmul.f32 %v330, %v800
      %v805 = vmul.f32 %v334, %v796
      %v806 = vmul.f32 %v334, %v800
      %v807 = vadd.f32 %v787, %v801
      %v808 = vadd.f32 %v788, %v802
      %v809 = vadd.f32 %v789, %v803
      %v810 = vadd.f32 %v790, %v804
      %v811 = vadd.f32 %v791, %v805
      %v812 = vadd.f32 %v792, %v806
      %v813 = vlaneseq
      %v814 = vshrl.u32 %v813, 7
      %v815 = vsub.s32 5, %v814
      %v816 = vrot.slane %v717, %v815
      %v817 = vlaneseq
      %v818 = vshrl.u32 %v817, 7
      %v819 = vsub.s32 5, %v818
      %v820 = vrot.slane %v718, %v819
      %v821 = vmul.f32 %v358, %v816
      %v822 = vmul.f32 %v358, %v820
      %v823 = vmul.f32 %v362, %v816
      %v824 = vmul.f32 %v362, %v820
      %v825 = vmul.f32 %v366, %v816
      %v826 = vmul.f32 %v366, %v820
      %v827 = vadd.f32 %v807, %v821
      %v828 = vadd.f32 %v808, %v822
      %v829 = vadd.f32 %v809, %v823
      %v830 = vadd.f32 %v810, %v824
      %v831 = vadd.f32 %v811, %v825
      %v832 = vadd.f32 %v812, %v826
      %v833 = vlaneseq
      %v834 = vshrl.u32 %v833, 7
      %v835 = vsub.s32 6, %v834
      %v836 = vrot.slane %v717, %v835
      %v837 = vlaneseq
      %v838 = vshrl.u32 %v837, 7
      %v839 = vsub.s32 6, %v838
      %v840 = vrot.slane %v718, %v839
      %v841 = vmul.f32 %v390, %v836
      %v842 = vmul.f32 %v390, %v840
      %v843 = vmul.f32 %v394, %v836
      %v844 = vmul.f32 %v394, %v840
      %v845 = vmul.f32 %v398, %v836
      %v846 = vmul.f32 %v398, %v840
      %v847 = vadd.f32 %v827, %v841
      %v848 = vadd.f32 %v828, %v842
      %v849 = vadd.f32 %v829, %v843
      %v850 = vadd.f32 %v830, %v844
      %v851 = vadd.f32 %v831, %v845
      %v852 = vadd.f32 %v832, %v846
      %v853 = vlaneseq
      %v854 = vshrl.u32 %v853, 7
      %v855 = vsub.s32 7, %v854
      %v856 = vrot.slane %v717, %v855
      %v857 = vlaneseq
      %v858 = vshrl.u32 %v857, 7
      %v859 = vsub.s32 7, %v858
      %v860 = vrot.slane %v718, %v859
      %v861 = vmul.f32 %v422, %v856
      %v862 = vmul.f32 %v422, %v860
      %v863 = vmul.f32 %v426, %v856
      %v864 = vmul.f32 %v426, %v860
      %v865 = vmul.f32 %v430, %v856
      %v866 = vmul.f32 %v430, %v860
      %v867 = vadd.f32 %v847, %v861
      %v868 = vadd.f32 %v848, %v862
      %v869 = vadd.f32 %v849, %v863
      %v870 = vadd.f32 %v850, %v864
      %v871 = vadd.f32 %v851, %v865
      %v872 = vadd.f32 %v852, %v866
      %v873 = vadd.f32 %v867, %v454
      %v874 = vadd.f32 %v868, %v454
      %v875 = vadd.f32 %v869, %v458
      %v876 = vadd.f32 %v870, %v458
      %v877 = vadd.f32 %v871, %v462
      %v878 = vadd.f32 %v872, %v462
      %v879 = vadd.f32 %v873, %v874
      %880 = vadd.xlane.f32.xlu0 %v879
      %v881 = vpop.xlane.xlu0 %880
      %v882 = vadd.f32 %v875, %v876
      %883 = vadd.xlane.f32.xlu0 %v882
      %v884 = vpop.xlane.xlu0 %883
      %v885 = vadd.f32 %v877, %v878
      %886 = vadd.xlane.f32.xlu0 %v885
      %v887 = vpop.xlane.xlu0 %886
      %v888 = vmul.f32 %v873, %v873
      %v889 = vmul.f32 %v874, %v874
      %v890 = vmul.f32 %v875, %v875
      %v891 = vmul.f32 %v876, %v876
      %v892 = vmul.f32 %v877, %v877
      %v893 = vmul.f32 %v878, %v878
      %v894 = vadd.f32 %v888, %v889
      %895 = vadd.xlane.f32.xlu0 %v894
      %v896 = vpop.xlane.xlu0 %895
      %v897 = vadd.f32 %v890, %v891
      %898 = vadd.xlane.f32.xlu0 %v897
      %v899 = vpop.xlane.xlu0 %898
      %v900 = vadd.f32 %v892, %v893
      %901 = vadd.xlane.f32.xlu0 %v900
      %v902 = vpop.xlane.xlu0 %901
      %v903 = vmul.f32 %v194, %v881
      %v904 = vmul.f32 %v195, %v884
      %v905 = vmul.f32 %v196, %v887
      %v906 = vsel %vm497, %v903, 0.0
      %v907 = vsel %vm497, %v904, 0.0
      %v908 = vadd.f32 %v906, %v907
      %v909 = vsel %vm497, %v905, 0.0
      %v910 = vadd.f32 %v908, %v909
      %v911 = vrot.slane %v910, 4
      %v912 = vadd.f32 %v910, %v911
      %v913 = vrot.slane %v912, 2
      %v914 = vadd.f32 %v912, %v913
      %v915 = vrot.slane %v914, 1
      %v916 = vadd.f32 %v914, %v915
      %v917 = vmul.f32 %v916, 0.0006510417
      %v918 = vmul.f32 %v194, %v896
      %v919 = vmul.f32 %v195, %v899
      %v920 = vmul.f32 %v196, %v902
      %v921 = vsel %vm497, %v918, 0.0
      %v922 = vsel %vm497, %v919, 0.0
      %v923 = vadd.f32 %v921, %v922
      %v924 = vsel %vm497, %v920, 0.0
      %v925 = vadd.f32 %v923, %v924
      %v926 = vrot.slane %v925, 4
      %v927 = vadd.f32 %v925, %v926
      %v928 = vrot.slane %v927, 2
      %v929 = vadd.f32 %v927, %v928
      %v930 = vrot.slane %v929, 1
      %v931 = vadd.f32 %v929, %v930
      %v932 = vmul.f32 %v931, 0.0006510417
      %v933 = vmul.f32 %v917, %v917
      %v934 = vsub.f32 %v932, %v933
      %v935 = vadd.f32 %v934, 1e-05
      %v936 = vrsqrt.pop %v935
      %v937 = vmul.f32 %v194, %v917
      %v938 = vmul.f32 %v195, %v917
      %v939 = vmul.f32 %v196, %v917
      %943 = vrot.lane.b32.xlu0 %v937, 117
      %v944 = vpop.permute.xlu0 %943
      %945 = vrot.lane.b32.xlu0 %v938, 117
      %v946 = vpop.permute.xlu0 %945
      %947 = vrot.lane.b32.xlu0 %v939, 117
      %v948 = vpop.permute.xlu0 %947
      %v952 = vsel %vm544, %v944, 0.0
      %953 = vadd.xlane.f32.xlu0 %v952
      %v954 = vpop.xlane.xlu0 %953
      %v955 = vsel %vm544, %v946, 0.0
      %956 = vadd.xlane.f32.xlu0 %v955
      %v957 = vpop.xlane.xlu0 %956
      %v958 = vsel %vm544, %v948, 0.0
      %959 = vadd.xlane.f32.xlu0 %v958
      %v960 = vpop.xlane.xlu0 %959
      %v961 = vmul.f32 %v194, %v936
      %v962 = vmul.f32 %v195, %v936
      %v963 = vmul.f32 %v196, %v936
      %967 = vrot.lane.b32.xlu0 %v961, 117
      %v968 = vpop.permute.xlu0 %967
      %969 = vrot.lane.b32.xlu0 %v962, 117
      %v970 = vpop.permute.xlu0 %969
      %971 = vrot.lane.b32.xlu0 %v963, 117
      %v972 = vpop.permute.xlu0 %971
      %v976 = vsel %vm544, %v968, 0.0
      %977 = vadd.xlane.f32.xlu0 %v976
      %v978 = vpop.xlane.xlu0 %977
      %v979 = vsel %vm544, %v970, 0.0
      %980 = vadd.xlane.f32.xlu0 %v979
      %v981 = vpop.xlane.xlu0 %980
      %v982 = vsel %vm544, %v972, 0.0
      %983 = vadd.xlane.f32.xlu0 %v982
      %v984 = vpop.xlane.xlu0 %983
      %v985 = vsub.f32 %v873, %v954
      %v986 = vsub.f32 %v874, %v954
      %v987 = vsub.f32 %v875, %v957
      %v988 = vsub.f32 %v876, %v957
      %v989 = vsub.f32 %v877, %v960
      %v990 = vsub.f32 %v878, %v960
      %v991 = vmul.f32 %v978, %v194
      %v992 = vmul.f32 %v981, %v195
      %v993 = vmul.f32 %v984, %v196
      %995 = vset.pattern.permute.xlu0 9
      %996 = vperm.xlu0 %995, %v991
      %v997 = vpop.permute.xlu0 %996
      %1000 = vset.pattern.permute.xlu0 9
      %1001 = vperm.xlu0 %1000, %v992
      %v1002 = vpop.permute.xlu0 %1001
      %1005 = vset.pattern.permute.xlu0 9
      %1006 = vperm.xlu0 %1005, %v993
      %v1007 = vpop.permute.xlu0 %1006
      %v1009 = vmul.f32 %v985, %v997
      %v1010 = vmul.f32 %v986, %v997
      %v1011 = vmul.f32 %v987, %v1002
      %v1012 = vmul.f32 %v988, %v1002
      %v1013 = vmul.f32 %v989, %v1007
      %v1014 = vmul.f32 %v990, %v1007
      %v1015 = vadd.f32 %v1009, %v610
      %v1016 = vadd.f32 %v1010, %v610
      %v1017 = vadd.f32 %v1011, %v614
      %v1018 = vadd.f32 %v1012, %v614
      %v1019 = vadd.f32 %v1013, %v618
      %v1020 = vadd.f32 %v1014, %v618
      %v1021 = vadd.f32 %v1015, 3.0
      %v1022 = vadd.f32 %v1016, 3.0
      %v1023 = vadd.f32 %v1017, 3.0
      %v1024 = vadd.f32 %v1018, 3.0
      %v1025 = vadd.f32 %v1019, 3.0
      %v1026 = vadd.f32 %v1020, 3.0
      %v1027 = vmax.f32 %v1021, 0.0
      %v1028 = vmax.f32 %v1022, 0.0
      %v1029 = vmax.f32 %v1023, 0.0
      %v1030 = vmax.f32 %v1024, 0.0
      %v1031 = vmax.f32 %v1025, 0.0
      %v1032 = vmax.f32 %v1026, 0.0
      %v1033 = vmin.f32 %v1027, 6.0
      %v1034 = vmin.f32 %v1028, 6.0
      %v1035 = vmin.f32 %v1029, 6.0
      %v1036 = vmin.f32 %v1030, 6.0
      %v1037 = vmin.f32 %v1031, 6.0
      %v1038 = vmin.f32 %v1032, 6.0
      %v1039 = vmul.f32 %v1015, %v1033
      %v1040 = vmul.f32 %v1016, %v1034
      %v1041 = vmul.f32 %v1017, %v1035
      %v1042 = vmul.f32 %v1018, %v1036
      %v1043 = vmul.f32 %v1019, %v1037
      %v1044 = vmul.f32 %v1020, %v1038
      %v1045 = vmul.f32 %v1039, 0.16666667
      %v1046 = vmul.f32 %v1040, 0.16666667
      %v1047 = vmul.f32 %v1041, 0.16666667
      %v1048 = vmul.f32 %v1042, 0.16666667
      %v1049 = vmul.f32 %v1043, 0.16666667
      %v1050 = vmul.f32 %v1044, 0.16666667
      %v1051 = vmax.f32 %v1015, 0.0
      %v1052 = vmax.f32 %v1016, 0.0
      %v1053 = vmax.f32 %v1017, 0.0
      %v1054 = vmax.f32 %v1018, 0.0
      %v1055 = vmax.f32 %v1019, 0.0
      %v1056 = vmax.f32 %v1020, 0.0
      %v1057 = vmin.f32 %v1051, 6.0
      %v1058 = vmin.f32 %v1052, 6.0
      %v1059 = vmin.f32 %v1053, 6.0
      %v1060 = vmin.f32 %v1054, 6.0
      %v1061 = vmin.f32 %v1055, 6.0
      %v1062 = vmin.f32 %v1056, 6.0
      %v1063 = vmin.f32 %v1015, 0.0
      %v1064 = vmin.f32 %v1016, 0.0
      %v1065 = vmin.f32 %v1017, 0.0
      %v1066 = vmin.f32 %v1018, 0.0
      %v1067 = vmin.f32 %v1019, 0.0
      %v1068 = vmin.f32 %v1020, 0.0
      %v1069 = vmul.f32 %v1063, 0.01
      %v1070 = vmul.f32 %v1064, 0.01
      %v1071 = vmul.f32 %v1065, 0.01
      %v1072 = vmul.f32 %v1066, 0.01
      %v1073 = vmul.f32 %v1067, 0.01
      %v1074 = vmul.f32 %v1068, 0.01
      %v1075 = vadd.f32 %v1057, %v1069
      %v1076 = vadd.f32 %v1058, %v1070
      %v1077 = vadd.f32 %v1059, %v1071
      %v1078 = vadd.f32 %v1060, %v1072
      %v1079 = vadd.f32 %v1061, %v1073
      %v1080 = vadd.f32 %v1062, %v1074
      %vm1081 = vcmp.ge.f32.partialorder %v1015, -3.0
      %vm1082 = vcmp.ge.f32.partialorder %v1016, -3.0
      %vm1083 = vcmp.ge.f32.partialorder %v1017, -3.0
      %vm1084 = vcmp.ge.f32.partialorder %v1018, -3.0
      %vm1085 = vcmp.ge.f32.partialorder %v1019, -3.0
      %vm1086 = vcmp.ge.f32.partialorder %v1020, -3.0
      %vm1087 = vcmp.le.f32.partialorder %v1015, 3.0
      %vm1088 = vcmp.le.f32.partialorder %v1016, 3.0
      %vm1089 = vcmp.le.f32.partialorder %v1017, 3.0
      %vm1090 = vcmp.le.f32.partialorder %v1018, 3.0
      %vm1091 = vcmp.le.f32.partialorder %v1019, 3.0
      %vm1092 = vcmp.le.f32.partialorder %v1020, 3.0
      %vm1093 = vmand %vm1081, %vm1087
      %vm1094 = vmand %vm1082, %vm1088
      %vm1095 = vmand %vm1083, %vm1089
      %vm1096 = vmand %vm1084, %vm1090
      %vm1097 = vmand %vm1085, %vm1091
      %vm1098 = vmand %vm1086, %vm1092
      %v1099 = vsel %vm1093, %v1045, %v1075
      %v1100 = vsel %vm1094, %v1046, %v1076
      %v1101 = vsel %vm1095, %v1047, %v1077
      %v1102 = vsel %vm1096, %v1048, %v1078
      %v1103 = vsel %vm1097, %v1049, %v1079
      %v1104 = vsel %vm1098, %v1050, %v1080
      %s1105 = scalar_lea.vmem %s192, 48
      %1106 = vst [vmem:[%s1105] sm:$0xff] %v1099
      %1107 = vst [vmem:[%s1105 + $0x8] sm:$0xff] %v1100
      %1108 = vst [vmem:[%s1105 + $0x10] sm:$0xff] %v1101
      %1109 = vst [vmem:[%s1105 + $0x18] sm:$0xff] %v1102
      %1110 = vst [vmem:[%s1105 + $0x20] sm:$0xff] %v1103
      %1111 = vst [vmem:[%s1105 + $0x28] sm:$0xff] %v1104
      %s1112 = smul.u32 2, %s18
      %p1113 = scmp.lt.s32.totalorder %s17, 2
      %s1114 = scalar_select %p1113, %s17, 2
      %p1115 = scmp.lt.s32.totalorder %s1112, 1
      %s1116 = scalar_select %p1115, %s1112, 1
      %s1117 = smul.addr %s1116, 6
      %s1118 = smul.addr %s1114, 12
      %s1119 = sadd.s32 %s1117, %s1118
      %s1120 = smul.addr %s1119, 8
      %s1121 = scalar_lea.vmem %s2, %s1120
      // Predicated region
      $region29: #{_lambda_.2} parent=27 // pred_check
        %p1122 = pneg %p97
      $region30: #{_lambda_.2} parent=27 // pred_check_branch
        %1124 = sbr.rel (%p1122) target = $region32
      $region31: #{_lambda_.2} parent=27 // pred_region
        %s1125 = smul.u32 2, %s18
      $region32: #{_lambda_.2} parent=27 // pred_fallthru
        _
    $region28: #{_lambda_.2} parent=5 // pred_fallthru
      _
    %p1126 = scmp.le.s32.totalorder 2, %s8
    // Predicated region
    $region33: #{_lambda_.2} parent=5 // pred_check
      %p1127 = pneg %p1126
    $region34: #{_lambda_.2} parent=5 // pred_check_branch
      %1129 = sbr.rel (%p1127) target = $region36
    $region35: #{_lambda_.2} parent=5 // pred_region
      %s1130 = ssub.s32 %s8, 2
      // Predicated region
      $region37: #{_lambda_.2} parent=35 // pred_check
        %p1131 = pneg %p103
      $region38: #{_lambda_.2} parent=35 // pred_check_branch
        %1133 = sbr.rel (%p1131) target = $region40
      $region39: #{_lambda_.2} parent=35 // pred_region
        %s1134 = smul.u32 2, %s20
        %p1135 = scmp.lt.s32.totalorder %s19, 2
        %s1136 = scalar_select %p1135, %s19, 2
        %p1137 = scmp.lt.s32.totalorder %s1134, 1
        %s1138 = scalar_select %p1137, %s1134, 1
        %s1139 = smul.addr %s1138, 6
        %s1140 = smul.addr %s1136, 12
        %s1141 = sadd.s32 %s1139, %s1140
        %s1142 = smul.addr %s1141, 8
        %s1143 = scalar_lea.vmem %s2, %s1142
      $region40: #{_lambda_.2} parent=35 // pred_fallthru
        _
    $region36: #{_lambda_.2} parent=5 // pred_fallthru
      _
  $region6: #{_lambda_.2} parent=0 // loop_footer
    %s12 = sadd.s32 1, %s8
  $region7: #{_lambda_.2} parent=0 // loop_footer_branch
    %7 = sbr.rel target = $region3
  $region8: #{_lambda_.2} parent=0 // loop_exit
    _

// kernel: _lambda_.3
$region0: #{_lambda_.3}
  #allocation0 [shape = 'u32[]', space=smem, size = 0x4, offset = 0x4, fixed_abs, tag = 'smem constant byte address 0x4 - core index']
  #allocation1 [shape = 'u32[144,128]{1,0:T(1,128)}', space=vmem, size = 0x12000, scoped, tag = 'internal scratch']
  %s0 = inlined_call_operand.vmem [shape: f32[3,2,24,256], index: 0, kind: input, shape index: {}]
  %s1 = inlined_call_operand.vmem [shape: f32[3,24,48], index: 1, kind: input, shape index: {}]
  %s2 = inlined_call_operand.vmem [shape: f32[3,2,24,256], index: 2, kind: output, shape index: {}]
  %s3 = sld [smem:[#allocation0]]
  $region41: #{_lambda_.3} parent=0
    _
  %s5 = ssub.s32 1, %s3
  %s6 = scalar_select 0, %s5, %s3
  loop: start=0, step=1, limit=5
  $region2: #{_lambda_.3} parent=0 // loop_pre_header
    _
  $region3: #{_lambda_.3} parent=0 // loop_header
    %s8 = sphi 0, %s12
    %p9 = scmp.ge.s32.totalorder %s8, 5
    %s15 = sphi 0, %s27
    %s16 = sphi 0, %s23
    %s17 = sphi 0, %s15
    %s18 = sphi 0, %s16
    %s19 = sphi 0, %s17
    %s20 = sphi 0, %s18
    %s32 = sphi 0, %s34
    %s35 = sphi 0, %s32
    %s36 = sphi 0, %s35
    %s52 = sphi 0, %s36
    %s58 = sphi 0, %s60
    %s61 = sphi 0, %s58
    %s62 = sphi 0, %s61
    %s78 = sphi 0, %s62
    %s86 = sphi 0, %s88
    %s89 = sphi 0, %s86
    %s90 = sphi 0, %s89
    %s106 = sphi 0, %s90
  $region4: #{_lambda_.3} parent=0 // loop_header_branch
    %11 = sbr.rel (%p9) target = $region8
  $region5: #{_lambda_.3} parent=0 // loop_body
    %s13 = ssub.s32 %s8, 1
    %s14 = ssub.s32 %s8, 2
    %s21 = sadd.s32 1, %s16
    %p22 = scmp.ge.s32.totalorder %s21, 1
    %s23 = scalar_select %p22, 0, %s21
    %s24 = sadd.s32 1, %s15
    %s25 = scalar_select %p22, %s24, %s15
    %p26 = scmp.ge.s32.totalorder %s25, 3
    %s27 = scalar_select %p26, 0, %s25
    %s28 = ssub.s32 %s15, %s27
    %s29 = ssub.s32 %s16, %s23
    %s30 = sor.u32 %s28, %s29
    %p31 = scmp.eq.s32.totalorder %s30, 0
    %s33 = sadd.s32 %s32, 1
    %s34 = scalar_select %p31, %s32, %s33
    %p37 = pneg %p31
    %p38 = scmp.eq.s32.totalorder %s8, 2
    %p39 = por %p37, %p38
    %p40 = scmp.ne.s32.totalorder %s32, %s35
    %p41 = scmp.eq.s32.totalorder %s8, 0
    %p42 = por %p40, %p41
    %p43 = scmp.ne.s32.totalorder %s32, %s35
    %p44 = scmp.eq.s32.totalorder %s13, 2
    %p45 = por %p43, %p44
    %p46 = scmp.ne.s32.totalorder %s35, %s36
    %p47 = scmp.eq.s32.totalorder %s13, 0
    %p48 = por %p46, %p47
    %p49 = scmp.ne.s32.totalorder %s35, %s36
    %p50 = scmp.eq.s32.totalorder %s14, 2
    %p51 = por %p49, %p50
    %p53 = scmp.ne.s32.totalorder %s36, %s52
    %p54 = scmp.eq.s32.totalorder %s14, 0
    %p55 = por %p53, %p54
    %s56 = ssub.s32 %s15, %s27
    %p57 = scmp.eq.s32.totalorder %s56, 0
    %s59 = sadd.s32 %s58, 1
    %s60 = scalar_select %p57, %s58, %s59
    %p63 = pneg %p57
    %p64 = scmp.eq.s32.totalorder %s8, 2
    %p65 = por %p63, %p64
    %p66 = scmp.ne.s32.totalorder %s58, %s61
    %p67 = scmp.eq.s32.totalorder %s8, 0
    %p68 = por %p66, %p67
    %p69 = scmp.ne.s32.totalorder %s58, %s61
    %p70 = scmp.eq.s32.totalorder %s13, 2
    %p71 = por %p69, %p70
    %p72 = scmp.ne.s32.totalorder %s61, %s62
    %p73 = scmp.eq.s32.totalorder %s13, 0
    %p74 = por %p72, %p73
    %p75 = scmp.ne.s32.totalorder %s61, %s62
    %p76 = scmp.eq.s32.totalorder %s14, 2
    %p77 = por %p75, %p76
    %p79 = scmp.ne.s32.totalorder %s62, %s78
    %p80 = scmp.eq.s32.totalorder %s14, 0
    %p81 = por %p79, %p80
    %s82 = ssub.s32 %s15, %s27
    %s83 = ssub.s32 %s16, %s23
    %s84 = sor.u32 %s82, %s83
    %p85 = scmp.eq.s32.totalorder %s84, 0
    %s87 = sadd.s32 %s86, 1
    %s88 = scalar_select %p85, %s86, %s87
    %p91 = pneg %p85
    %p92 = scmp.eq.s32.totalorder %s8, 2
    %p93 = por %p91, %p92
    %p94 = scmp.ne.s32.totalorder %s86, %s89
    %p95 = scmp.eq.s32.totalorder %s8, 0
    %p96 = por %p94, %p95
    %p97 = scmp.ne.s32.totalorder %s86, %s89
    %p98 = scmp.eq.s32.totalorder %s13, 2
    %p99 = por %p97, %p98
    %p100 = scmp.ne.s32.totalorder %s89, %s90
    %p101 = scmp.eq.s32.totalorder %s13, 0
    %p102 = por %p100, %p101
    %p103 = scmp.ne.s32.totalorder %s89, %s90
    %p104 = scmp.eq.s32.totalorder %s14, 2
    %p105 = por %p103, %p104
    %p107 = scmp.ne.s32.totalorder %s90, %s106
    %p108 = scmp.eq.s32.totalorder %s14, 0
    %p109 = por %p107, %p108
    %p110 = scmp.le.s32.totalorder 1, %s8
    %p111 = scmp.lt.s32.totalorder %s8, 4
    %p112 = pnand %p110, %p111
    %p113 = pneg %p112
    // Predicated region
    $region9: #{_lambda_.3} parent=5 // pred_check
      _
    $region10: #{_lambda_.3} parent=5 // pred_check_branch
      %115 = sbr.rel (%p112) target = $region12
    $region11: #{_lambda_.3} parent=5 // pred_region
      %s116 = ssub.s32 %s8, 1
    $region12: #{_lambda_.3} parent=5 // pred_fallthru
      _
    %p117 = scmp.lt.s32.totalorder %s8, 3
    // Predicated region
    $region13: #{_lambda_.3} parent=5 // pred_check
      %p118 = pneg %p117
    $region14: #{_lambda_.3} parent=5 // pred_check_branch
      %120 = sbr.rel (%p118) target = $region16
    $region15: #{_lambda_.3} parent=5 // pred_region
      // Predicated region
      $region17: #{_lambda_.3} parent=15 // pred_check
        %p121 = pneg %p42
      $region18: #{_lambda_.3} parent=15 // pred_check_branch
        %123 = sbr.rel (%p121) target = $region20
      $region19: #{_lambda_.3} parent=15 // pred_region
        %s124 = smul.u32 2, %s16
        %p125 = scmp.lt.s32.totalorder %s15, 2
        %s126 = scalar_select %p125, %s15, 2
        %p127 = scmp.lt.s32.totalorder %s124, 1
        %s128 = scalar_select %p127, %s124, 1
        %s129 = smul.addr %s128, 6
        %s130 = smul.addr %s126, 12
        %s131 = sadd.s32 %s129, %s130
        %s132 = smul.addr %s131, 8
        %s133 = scalar_lea.vmem %s0, %s132
        %s134 = smul.u32 2, %s16
      $region20: #{_lambda_.3} parent=15 // pred_fallthru
        _
      // Predicated region
      $region21: #{_lambda_.3} parent=15 // pred_check
        %p135 = pneg %p68
      $region22: #{_lambda_.3} parent=15 // pred_check_branch
        %137 = sbr.rel (%p135) target = $region24
      $region23: #{_lambda_.3} parent=15 // pred_region
        %p138 = scmp.lt.s32.totalorder %s15, 2
        %s139 = scalar_select %p138, %s15, 2
        %s140 = smul.addr %s139, 3
        %s141 = smul.addr %s140, 8
        %s142 = scalar_lea.vmem %s1, %s141
      $region24: #{_lambda_.3} parent=15 // pred_fallthru
        _
    $region16: #{_lambda_.3} parent=5 // pred_fallthru
      _
    %p143 = scmp.le.s32.totalorder 1, %s8
    %p144 = scmp.lt.s32.totalorder %s8, 4
    %p145 = pnand %p143, %p144
    %p146 = pneg %p145
    // Predicated region
    $region25: #{_lambda_.3} parent=5 // pred_check
      _
    $region26: #{_lambda_.3} parent=5 // pred_check_branch
      %148 = sbr.rel (%p145) target = $region28
    $region27: #{_lambda_.3} parent=5 // pred_region
      %s149 = ssub.s32 %s8, 1
      %s150 = smul.u32 2, %s18
      %p151 = scmp.lt.s32.totalorder %s17, 2
      %s152 = scalar_select %p151, %s17, 2
      %p153 = scmp.lt.s32.totalorder %s150, 1
      %s154 = scalar_select %p153, %s150, 1
      %s155 = smul.addr %s154, 6
      %s156 = smul.addr %s152, 12
      %s157 = sadd.s32 %s155, %s156
      %s158 = smul.addr %s157, 8
      %s159 = scalar_lea.vmem %s0, %s158
      %p160 = pneg %p48
      %p161 = pneg %p45
      %p162 = scmp.lt.s32.totalorder %s17, 2
      %s163 = scalar_select %p162, %s17, 2
      %s164 = smul.addr %s163, 3
      %s165 = smul.addr %s164, 8
      %s166 = scalar_lea.vmem %s1, %s165
      %p167 = pneg %p74
      %p168 = pneg %p71
      %p169 = pneg %p102
      %p170 = pneg %p99
      %s171 = smul.u32 2, %s18
      %p172 = scmp.lt.s32.totalorder %s17, 2
      %s173 = scalar_select %p172, %s17, 2
      %p174 = scmp.lt.s32.totalorder %s171, 1
      %s175 = scalar_select %p174, %s171, 1
      %s176 = smul.addr %s175, 6
      %s177 = smul.addr %s173, 12
      %s178 = sadd.s32 %s176, %s177
      %s179 = smul.addr %s178, 8
      %s180 = scalar_lea.vmem %s2, %s179
      %s181 = smul.u32 2, %s18
      %p182 = scmp.lt.s32.totalorder %s17, 2
      %s183 = scalar_select %p182, %s17, 2
      %p184 = scmp.lt.s32.totalorder %s181, 1
      %s185 = scalar_select %p184, %s181, 1
      %s186 = smul.addr %s185, 6
      %s187 = smul.addr %s183, 12
      %s188 = sadd.s32 %s186, %s187
      %s189 = smul.addr %s188, 8
      %s190 = scalar_lea.vmem %s0, %s189
      %s191 = smul.u32 2, %s18
      %p192 = scmp.lt.s32.totalorder %s17, 2
      %s193 = scalar_select %p192, %s17, 2
      %s194 = smul.addr %s193, 3
      %s195 = smul.addr %s194, 8
      %s196 = scalar_lea.vmem %s1, %s195
      %s197 = smul.u32 2, %s18
      %p198 = scmp.lt.s32.totalorder %s17, 2
      %s199 = scalar_select %p198, %s17, 2
      %p200 = scmp.lt.s32.totalorder %s197, 1
      %s201 = scalar_select %p200, %s197, 1
      %s202 = smul.addr %s201, 6
      %s203 = smul.addr %s199, 12
      %s204 = sadd.s32 %s202, %s203
      %s205 = smul.addr %s204, 8
      %s206 = scalar_lea.vmem %s2, %s205
      %s207 = smul.u32 2, %s18
      %v208 = vld [vmem:[%s196] sm:$0xff]
      %v209 = vld [vmem:[%s196 + $0x8] sm:$0xff]
      %v210 = vld [vmem:[%s196 + $0x10] sm:$0xff]
      %v211 = vld [vmem:[%s190] sm:$0xff]
      %v212 = vld [vmem:[%s190 + $0x8] sm:$0xff]
      %v213 = vld [vmem:[%s190 + $0x10] sm:$0xff]
      %v214 = vld [vmem:[%s190 + $0x18] sm:$0xff]
      %v215 = vld [vmem:[%s190 + $0x20] sm:$0xff]
      %v216 = vld [vmem:[%s190 + $0x28] sm:$0xff]
      %218 = vset.pattern.permute.xlu0 0
      %219 = vperm.xlu0 %218, %v208
      %v220 = vpop.permute.xlu0 %219
      %223 = vset.pattern.permute.xlu0 0
      %224 = vperm.xlu0 %223, %v209
      %v225 = vpop.permute.xlu0 %224
      %228 = vset.pattern.permute.xlu0 0
      %229 = vperm.xlu0 %228, %v210
      %v230 = vpop.permute.xlu0 %229
      %v232 = vlaneseq
      %v233 = vshrl.u32 %v232, 7
      %v234 = vsub.s32 0, %v233
      %v235 = vrot.slane %v211, %v234
      %v236 = vlaneseq
      %v237 = vshrl.u32 %v236, 7
      %v238 = vsub.s32 0, %v237
      %v239 = vrot.slane %v212, %v238
      %v240 = vmul.f32 %v220, %v235
      %v241 = vmul.f32 %v220, %v239
      %v242 = vmul.f32 %v225, %v235
      %v243 = vmul.f32 %v225, %v239
      %v244 = vmul.f32 %v230, %v235
      %v245 = vmul.f32 %v230, %v239
      %246 = vset.pattern.permute.xlu0 1
      %247 = vperm.xlu0 %246, %v208
      %v248 = vpop.permute.xlu0 %247
      %250 = vset.pattern.permute.xlu0 1
      %251 = vperm.xlu0 %250, %v209
      %v252 = vpop.permute.xlu0 %251
      %254 = vset.pattern.permute.xlu0 1
      %255 = vperm.xlu0 %254, %v210
      %v256 = vpop.permute.xlu0 %255
      %v258 = vlaneseq
      %v259 = vshrl.u32 %v258, 7
      %v260 = vsub.s32 1, %v259
      %v261 = vrot.slane %v211, %v260
      %v262 = vlaneseq
      %v263 = vshrl.u32 %v262, 7
      %v264 = vsub.s32 1, %v263
      %v265 = vrot.slane %v212, %v264
      %v266 = vmul.f32 %v248, %v261
      %v267 = vmul.f32 %v248, %v265
      %v268 = vmul.f32 %v252, %v261
      %v269 = vmul.f32 %v252, %v265
      %v270 = vmul.f32 %v256, %v261
      %v271 = vmul.f32 %v256, %v265
      %v272 = vadd.f32 %v240, %v266
      %v273 = vadd.f32 %v241, %v267
      %v274 = vadd.f32 %v242, %v268
      %v275 = vadd.f32 %v243, %v269
      %v276 = vadd.f32 %v244, %v270
      %v277 = vadd.f32 %v245, %v271
      %278 = vset.pattern.permute.xlu0 2
      %279 = vperm.xlu0 %278, %v208
      %v280 = vpop.permute.xlu0 %279
      %282 = vset.pattern.permute.xlu0 2
      %283 = vperm.xlu0 %282, %v209
      %v284 = vpop.permute.xlu0 %283
      %286 = vset.pattern.permute.xlu0 2
      %287 = vperm.xlu0 %286, %v210
      %v288 = vpop.permute.xlu0 %287
      %v290 = vlaneseq
      %v291 = vshrl.u32 %v290, 7
      %v292 = vsub.s32 2, %v291
      %v293 = vrot.slane %v211, %v292
      %v294 = vlaneseq
      %v295 = vshrl.u32 %v294, 7
      %v296 = vsub.s32 2, %v295
      %v297 = vrot.slane %v212, %v296
      %v298 = vmul.f32 %v280, %v293
      %v299 = vmul.f32 %v280, %v297
      %v300 = vmul.f32 %v284, %v293
      %v301 = vmul.f32 %v284, %v297
      %v302 = vmul.f32 %v288, %v293
      %v303 = vmul.f32 %v288, %v297
      %v304 = vadd.f32 %v272, %v298
      %v305 = vadd.f32 %v273, %v299
      %v306 = vadd.f32 %v274, %v300
      %v307 = vadd.f32 %v275, %v301
      %v308 = vadd.f32 %v276, %v302
      %v309 = vadd.f32 %v277, %v303
      %310 = vset.pattern.permute.xlu0 3
      %311 = vperm.xlu0 %310, %v208
      %v312 = vpop.permute.xlu0 %311
      %314 = vset.pattern.permute.xlu0 3
      %315 = vperm.xlu0 %314, %v209
      %v316 = vpop.permute.xlu0 %315
      %318 = vset.pattern.permute.xlu0 3
      %319 = vperm.xlu0 %318, %v210
      %v320 = vpop.permute.xlu0 %319
      %v322 = vlaneseq
      %v323 = vshrl.u32 %v322, 7
      %v324 = vsub.s32 3, %v323
      %v325 = vrot.slane %v211, %v324
      %v326 = vlaneseq
      %v327 = vshrl.u32 %v326, 7
      %v328 = vsub.s32 3, %v327
      %v329 = vrot.slane %v212, %v328
      %v330 = vmul.f32 %v312, %v325
      %v331 = vmul.f32 %v312, %v329
      %v332 = vmul.f32 %v316, %v325
      %v333 = vmul.f32 %v316, %v329
      %v334 = vmul.f32 %v320, %v325
      %v335 = vmul.f32 %v320, %v329
      %v336 = vadd.f32 %v304, %v330
      %v337 = vadd.f32 %v305, %v331
      %v338 = vadd.f32 %v306, %v332
      %v339 = vadd.f32 %v307, %v333
      %v340 = vadd.f32 %v308, %v334
      %v341 = vadd.f32 %v309, %v335
      %342 = vset.pattern.permute.xlu0 4
      %343 = vperm.xlu0 %342, %v208
      %v344 = vpop.permute.xlu0 %343
      %346 = vset.pattern.permute.xlu0 4
      %347 = vperm.xlu0 %346, %v209
      %v348 = vpop.permute.xlu0 %347
      %350 = vset.pattern.permute.xlu0 4
      %351 = vperm.xlu0 %350, %v210
      %v352 = vpop.permute.xlu0 %351
      %v354 = vlaneseq
      %v355 = vshrl.u32 %v354, 7
      %v356 = vsub.s32 4, %v355
      %v357 = vrot.slane %v211, %v356
      %v358 = vlaneseq
      %v359 = vshrl.u32 %v358, 7
      %v360 = vsub.s32 4, %v359
      %v361 = vrot.slane %v212, %v360
      %v362 = vmul.f32 %v344, %v357
      %v363 = vmul.f32 %v344, %v361
      %v364 = vmul.f32 %v348, %v357
      %v365 = vmul.f32 %v348, %v361
      %v366 = vmul.f32 %v352, %v357
      %v367 = vmul.f32 %v352, %v361
      %v368 = vadd.f32 %v336, %v362
      %v369 = vadd.f32 %v337, %v363
      %v370 = vadd.f32 %v338, %v364
      %v371 = vadd.f32 %v339, %v365
      %v372 = vadd.f32 %v340, %v366
      %v373 = vadd.f32 %v341, %v367
      %374 = vset.pattern.permute.xlu0 5
      %375 = vperm.xlu0 %374, %v208
      %v376 = vpop.permute.xlu0 %375
      %378 = vset.pattern.permute.xlu0 5
      %379 = vperm.xlu0 %378, %v209
      %v380 = vpop.permute.xlu0 %379
      %382 = vset.pattern.permute.xlu0 5
      %383 = vperm.xlu0 %382, %v210
      %v384 = vpop.permute.xlu0 %383
      %v386 = vlaneseq
      %v387 = vshrl.u32 %v386, 7
      %v388 = vsub.s32 5, %v387
      %v389 = vrot.slane %v211, %v388
      %v390 = vlaneseq
      %v391 = vshrl.u32 %v390, 7
      %v392 = vsub.s32 5, %v391
      %v393 = vrot.slane %v212, %v392
      %v394 = vmul.f32 %v376, %v389
      %v395 = vmul.f32 %v376, %v393
      %v396 = vmul.f32 %v380, %v389
      %v397 = vmul.f32 %v380, %v393
      %v398 = vmul.f32 %v384, %v389
      %v399 = vmul.f32 %v384, %v393
      %v400 = vadd.f32 %v368, %v394
      %v401 = vadd.f32 %v369, %v395
      %v402 = vadd.f32 %v370, %v396
      %v403 = vadd.f32 %v371, %v397
      %v404 = vadd.f32 %v372, %v398
      %v405 = vadd.f32 %v373, %v399
      %406 = vset.pattern.permute.xlu0 6
      %407 = vperm.xlu0 %406, %v208
      %v408 = vpop.permute.xlu0 %407
      %410 = vset.pattern.permute.xlu0 6
      %411 = vperm.xlu0 %410, %v209
      %v412 = vpop.permute.xlu0 %411
      %414 = vset.pattern.permute.xlu0 6
      %415 = vperm.xlu0 %414, %v210
      %v416 = vpop.permute.xlu0 %415
      %v418 = vlaneseq
      %v419 = vshrl.u32 %v418, 7
      %v420 = vsub.s32 6, %v419
      %v421 = vrot.slane %v211, %v420
      %v422 = vlaneseq
      %v423 = vshrl.u32 %v422, 7
      %v424 = vsub.s32 6, %v423
      %v425 = vrot.slane %v212, %v424
      %v426 = vmul.f32 %v408, %v421
      %v427 = vmul.f32 %v408, %v425
      %v428 = vmul.f32 %v412, %v421
      %v429 = vmul.f32 %v412, %v425
      %v430 = vmul.f32 %v416, %v421
      %v431 = vmul.f32 %v416, %v425
      %v432 = vadd.f32 %v400, %v426
      %v433 = vadd.f32 %v401, %v427
      %v434 = vadd.f32 %v402, %v428
      %v435 = vadd.f32 %v403, %v429
      %v436 = vadd.f32 %v404, %v430
      %v437 = vadd.f32 %v405, %v431
      %438 = vset.pattern.permute.xlu0 7
      %439 = vperm.xlu0 %438, %v208
      %v440 = vpop.permute.xlu0 %439
      %442 = vset.pattern.permute.xlu0 7
      %443 = vperm.xlu0 %442, %v209
      %v444 = vpop.permute.xlu0 %443
      %446 = vset.pattern.permute.xlu0 7
      %447 = vperm.xlu0 %446, %v210
      %v448 = vpop.permute.xlu0 %447
      %v450 = vlaneseq
      %v451 = vshrl.u32 %v450, 7
      %v452 = vsub.s32 7, %v451
      %v453 = vrot.slane %v211, %v452
      %v454 = vlaneseq
      %v455 = vshrl.u32 %v454, 7
      %v456 = vsub.s32 7, %v455
      %v457 = vrot.slane %v212, %v456
      %v458 = vmul.f32 %v440, %v453
      %v459 = vmul.f32 %v440, %v457
      %v460 = vmul.f32 %v444, %v453
      %v461 = vmul.f32 %v444, %v457
      %v462 = vmul.f32 %v448, %v453
      %v463 = vmul.f32 %v448, %v457
      %v464 = vadd.f32 %v432, %v458
      %v465 = vadd.f32 %v433, %v459
      %v466 = vadd.f32 %v434, %v460
      %v467 = vadd.f32 %v435, %v461
      %v468 = vadd.f32 %v436, %v462
      %v469 = vadd.f32 %v437, %v463
      %470 = vset.pattern.permute.xlu0 8
      %471 = vperm.xlu0 %470, %v208
      %v472 = vpop.permute.xlu0 %471
      %474 = vset.pattern.permute.xlu0 8
      %475 = vperm.xlu0 %474, %v209
      %v476 = vpop.permute.xlu0 %475
      %478 = vset.pattern.permute.xlu0 8
      %479 = vperm.xlu0 %478, %v210
      %v480 = vpop.permute.xlu0 %479
      %v482 = vlaneseq
      %v483 = vshrl.u32 %v482, 7
      %v484 = vsub.s32 0, %v483
      %v485 = vrot.slane %v213, %v484
      %v486 = vlaneseq
      %v487 = vshrl.u32 %v486, 7
      %v488 = vsub.s32 0, %v487
      %v489 = vrot.slane %v214, %v488
      %v490 = vmul.f32 %v472, %v485
      %v491 = vmul.f32 %v472, %v489
      %v492 = vmul.f32 %v476, %v485
      %v493 = vmul.f32 %v476, %v489
      %v494 = vmul.f32 %v480, %v485
      %v495 = vmul.f32 %v480, %v489
      %v496 = vadd.f32 %v464, %v490
      %v497 = vadd.f32 %v465, %v491
      %v498 = vadd.f32 %v466, %v492
      %v499 = vadd.f32 %v467, %v493
      %v500 = vadd.f32 %v468, %v494
      %v501 = vadd.f32 %v469, %v495
      %502 = vset.pattern.permute.xlu0 9
      %503 = vperm.xlu0 %502, %v208
      %v504 = vpop.permute.xlu0 %503
      %506 = vset.pattern.permute.xlu0 9
      %507 = vperm.xlu0 %506, %v209
      %v508 = vpop.permute.xlu0 %507
      %510 = vset.pattern.permute.xlu0 9
      %511 = vperm.xlu0 %510, %v210
      %v512 = vpop.permute.xlu0 %511
      %v514 = vlaneseq
      %v515 = vshrl.u32 %v514, 7
      %v516 = vsub.s32 1, %v515
      %v517 = vrot.slane %v213, %v516
      %v518 = vlaneseq
      %v519 = vshrl.u32 %v518, 7
      %v520 = vsub.s32 1, %v519
      %v521 = vrot.slane %v214, %v520
      %v522 = vmul.f32 %v504, %v517
      %v523 = vmul.f32 %v504, %v521
      %v524 = vmul.f32 %v508, %v517
      %v525 = vmul.f32 %v508, %v521
      %v526 = vmul.f32 %v512, %v517
      %v527 = vmul.f32 %v512, %v521
      %v528 = vadd.f32 %v496, %v522
      %v529 = vadd.f32 %v497, %v523
      %v530 = vadd.f32 %v498, %v524
      %v531 = vadd.f32 %v499, %v525
      %v532 = vadd.f32 %v500, %v526
      %v533 = vadd.f32 %v501, %v527
      %534 = vset.pattern.permute.xlu0 10
      %535 = vperm.xlu0 %534, %v208
      %v536 = vpop.permute.xlu0 %535
      %538 = vset.pattern.permute.xlu0 10
      %539 = vperm.xlu0 %538, %v209
      %v540 = vpop.permute.xlu0 %539
      %542 = vset.pattern.permute.xlu0 10
      %543 = vperm.xlu0 %542, %v210
      %v544 = vpop.permute.xlu0 %543
      %v546 = vlaneseq
      %v547 = vshrl.u32 %v546, 7
      %v548 = vsub.s32 2, %v547
      %v549 = vrot.slane %v213, %v548
      %v550 = vlaneseq
      %v551 = vshrl.u32 %v550, 7
      %v552 = vsub.s32 2, %v551
      %v553 = vrot.slane %v214, %v552
      %v554 = vmul.f32 %v536, %v549
      %v555 = vmul.f32 %v536, %v553
      %v556 = vmul.f32 %v540, %v549
      %v557 = vmul.f32 %v540, %v553
      %v558 = vmul.f32 %v544, %v549
      %v559 = vmul.f32 %v544, %v553
      %v560 = vadd.f32 %v528, %v554
      %v561 = vadd.f32 %v529, %v555
      %v562 = vadd.f32 %v530, %v556
      %v563 = vadd.f32 %v531, %v557
      %v564 = vadd.f32 %v532, %v558
      %v565 = vadd.f32 %v533, %v559
      %566 = vset.pattern.permute.xlu0 11
      %567 = vperm.xlu0 %566, %v208
      %v568 = vpop.permute.xlu0 %567
      %570 = vset.pattern.permute.xlu0 11
      %571 = vperm.xlu0 %570, %v209
      %v572 = vpop.permute.xlu0 %571
      %574 = vset.pattern.permute.xlu0 11
      %575 = vperm.xlu0 %574, %v210
      %v576 = vpop.permute.xlu0 %575
      %v578 = vlaneseq
      %v579 = vshrl.u32 %v578, 7
      %v580 = vsub.s32 3, %v579
      %v581 = vrot.slane %v213, %v580
      %v582 = vlaneseq
      %v583 = vshrl.u32 %v582, 7
      %v584 = vsub.s32 3, %v583
      %v585 = vrot.slane %v214, %v584
      %v586 = vmul.f32 %v568, %v581
      %v587 = vmul.f32 %v568, %v585
      %v588 = vmul.f32 %v572, %v581
      %v589 = vmul.f32 %v572, %v585
      %v590 = vmul.f32 %v576, %v581
      %v591 = vmul.f32 %v576, %v585
      %v592 = vadd.f32 %v560, %v586
      %v593 = vadd.f32 %v561, %v587
      %v594 = vadd.f32 %v562, %v588
      %v595 = vadd.f32 %v563, %v589
      %v596 = vadd.f32 %v564, %v590
      %v597 = vadd.f32 %v565, %v591
      %598 = vset.pattern.permute.xlu0 12
      %599 = vperm.xlu0 %598, %v208
      %v600 = vpop.permute.xlu0 %599
      %602 = vset.pattern.permute.xlu0 12
      %603 = vperm.xlu0 %602, %v209
      %v604 = vpop.permute.xlu0 %603
      %606 = vset.pattern.permute.xlu0 12
      %607 = vperm.xlu0 %606, %v210
      %v608 = vpop.permute.xlu0 %607
      %v610 = vlaneseq
      %v611 = vshrl.u32 %v610, 7
      %v612 = vsub.s32 4, %v611
      %v613 = vrot.slane %v213, %v612
      %v614 = vlaneseq
      %v615 = vshrl.u32 %v614, 7
      %v616 = vsub.s32 4, %v615
      %v617 = vrot.slane %v214, %v616
      %v618 = vmul.f32 %v600, %v613
      %v619 = vmul.f32 %v600, %v617
      %v620 = vmul.f32 %v604, %v613
      %v621 = vmul.f32 %v604, %v617
      %v622 = vmul.f32 %v608, %v613
      %v623 = vmul.f32 %v608, %v617
      %v624 = vadd.f32 %v592, %v618
      %v625 = vadd.f32 %v593, %v619
      %v626 = vadd.f32 %v594, %v620
      %v627 = vadd.f32 %v595, %v621
      %v628 = vadd.f32 %v596, %v622
      %v629 = vadd.f32 %v597, %v623
      %630 = vset.pattern.permute.xlu0 13
      %631 = vperm.xlu0 %630, %v208
      %v632 = vpop.permute.xlu0 %631
      %634 = vset.pattern.permute.xlu0 13
      %635 = vperm.xlu0 %634, %v209
      %v636 = vpop.permute.xlu0 %635
      %638 = vset.pattern.permute.xlu0 13
      %639 = vperm.xlu0 %638, %v210
      %v640 = vpop.permute.xlu0 %639
      %v642 = vlaneseq
      %v643 = vshrl.u32 %v642, 7
      %v644 = vsub.s32 5, %v643
      %v645 = vrot.slane %v213, %v644
      %v646 = vlaneseq
      %v647 = vshrl.u32 %v646, 7
      %v648 = vsub.s32 5, %v647
      %v649 = vrot.slane %v214, %v648
      %v650 = vmul.f32 %v632, %v645
      %v651 = vmul.f32 %v632, %v649
      %v652 = vmul.f32 %v636, %v645
      %v653 = vmul.f32 %v636, %v649
      %v654 = vmul.f32 %v640, %v645
      %v655 = vmul.f32 %v640, %v649
      %v656 = vadd.f32 %v624, %v650
      %v657 = vadd.f32 %v625, %v651
      %v658 = vadd.f32 %v626, %v652
      %v659 = vadd.f32 %v627, %v653
      %v660 = vadd.f32 %v628, %v654
      %v661 = vadd.f32 %v629, %v655
      %662 = vset.pattern.permute.xlu0 14
      %663 = vperm.xlu0 %662, %v208
      %v664 = vpop.permute.xlu0 %663
      %666 = vset.pattern.permute.xlu0 14
      %667 = vperm.xlu0 %666, %v209
      %v668 = vpop.permute.xlu0 %667
      %670 = vset.pattern.permute.xlu0 14
      %671 = vperm.xlu0 %670, %v210
      %v672 = vpop.permute.xlu0 %671
      %v674 = vlaneseq
      %v675 = vshrl.u32 %v674, 7
      %v676 = vsub.s32 6, %v675
      %v677 = vrot.slane %v213, %v676
      %v678 = vlaneseq
      %v679 = vshrl.u32 %v678, 7
      %v680 = vsub.s32 6, %v679
      %v681 = vrot.slane %v214, %v680
      %v682 = vmul.f32 %v664, %v677
      %v683 = vmul.f32 %v664, %v681
      %v684 = vmul.f32 %v668, %v677
      %v685 = vmul.f32 %v668, %v681
      %v686 = vmul.f32 %v672, %v677
      %v687 = vmul.f32 %v672, %v681
      %v688 = vadd.f32 %v656, %v682
      %v689 = vadd.f32 %v657, %v683
      %v690 = vadd.f32 %v658, %v684
      %v691 = vadd.f32 %v659, %v685
      %v692 = vadd.f32 %v660, %v686
      %v693 = vadd.f32 %v661, %v687
      %694 = vset.pattern.permute.xlu0 15
      %695 = vperm.xlu0 %694, %v208
      %v696 = vpop.permute.xlu0 %695
      %698 = vset.pattern.permute.xlu0 15
      %699 = vperm.xlu0 %698, %v209
      %v700 = vpop.permute.xlu0 %699
      %702 = vset.pattern.permute.xlu0 15
      %703 = vperm.xlu0 %702, %v210
      %v704 = vpop.permute.xlu0 %703
      %v706 = vlaneseq
      %v707 = vshrl.u32 %v706, 7
      %v708 = vsub.s32 7, %v707
      %v709 = vrot.slane %v213, %v708
      %v710 = vlaneseq
      %v711 = vshrl.u32 %v710, 7
      %v712 = vsub.s32 7, %v711
      %v713 = vrot.slane %v214, %v712
      %v714 = vmul.f32 %v696, %v709
      %v715 = vmul.f32 %v696, %v713
      %v716 = vmul.f32 %v700, %v709
      %v717 = vmul.f32 %v700, %v713
      %v718 = vmul.f32 %v704, %v709
      %v719 = vmul.f32 %v704, %v713
      %v720 = vadd.f32 %v688, %v714
      %v721 = vadd.f32 %v689, %v715
      %v722 = vadd.f32 %v690, %v716
      %v723 = vadd.f32 %v691, %v717
      %v724 = vadd.f32 %v692, %v718
      %v725 = vadd.f32 %v693, %v719
      %726 = vset.pattern.permute.xlu0 16
      %727 = vperm.xlu0 %726, %v208
      %v728 = vpop.permute.xlu0 %727
      %730 = vset.pattern.permute.xlu0 16
      %731 = vperm.xlu0 %730, %v209
      %v732 = vpop.permute.xlu0 %731
      %734 = vset.pattern.permute.xlu0 16
      %735 = vperm.xlu0 %734, %v210
      %v736 = vpop.permute.xlu0 %735
      %v738 = vlaneseq
      %v739 = vshrl.u32 %v738, 7
      %v740 = vsub.s32 0, %v739
      %v741 = vrot.slane %v215, %v740
      %v742 = vlaneseq
      %v743 = vshrl.u32 %v742, 7
      %v744 = vsub.s32 0, %v743
      %v745 = vrot.slane %v216, %v744
      %v746 = vmul.f32 %v728, %v741
      %v747 = vmul.f32 %v728, %v745
      %v748 = vmul.f32 %v732, %v741
      %v749 = vmul.f32 %v732, %v745
      %v750 = vmul.f32 %v736, %v741
      %v751 = vmul.f32 %v736, %v745
      %v752 = vadd.f32 %v720, %v746
      %v753 = vadd.f32 %v721, %v747
      %v754 = vadd.f32 %v722, %v748
      %v755 = vadd.f32 %v723, %v749
      %v756 = vadd.f32 %v724, %v750
      %v757 = vadd.f32 %v725, %v751
      %758 = vset.pattern.permute.xlu0 17
      %759 = vperm.xlu0 %758, %v208
      %v760 = vpop.permute.xlu0 %759
      %762 = vset.pattern.permute.xlu0 17
      %763 = vperm.xlu0 %762, %v209
      %v764 = vpop.permute.xlu0 %763
      %766 = vset.pattern.permute.xlu0 17
      %767 = vperm.xlu0 %766, %v210
      %v768 = vpop.permute.xlu0 %767
      %v770 = vlaneseq
      %v771 = vshrl.u32 %v770, 7
      %v772 = vsub.s32 1, %v771
      %v773 = vrot.slane %v215, %v772
      %v774 = vlaneseq
      %v775 = vshrl.u32 %v774, 7
      %v776 = vsub.s32 1, %v775
      %v777 = vrot.slane %v216, %v776
      %v778 = vmul.f32 %v760, %v773
      %v779 = vmul.f32 %v760, %v777
      %v780 = vmul.f32 %v764, %v773
      %v781 = vmul.f32 %v764, %v777
      %v782 = vmul.f32 %v768, %v773
      %v783 = vmul.f32 %v768, %v777
      %v784 = vadd.f32 %v752, %v778
      %v785 = vadd.f32 %v753, %v779
      %v786 = vadd.f32 %v754, %v780
      %v787 = vadd.f32 %v755, %v781
      %v788 = vadd.f32 %v756, %v782
      %v789 = vadd.f32 %v757, %v783
      %790 = vset.pattern.permute.xlu0 18
      %791 = vperm.xlu0 %790, %v208
      %v792 = vpop.permute.xlu0 %791
      %794 = vset.pattern.permute.xlu0 18
      %795 = vperm.xlu0 %794, %v209
      %v796 = vpop.permute.xlu0 %795
      %798 = vset.pattern.permute.xlu0 18
      %799 = vperm.xlu0 %798, %v210
      %v800 = vpop.permute.xlu0 %799
      %v802 = vlaneseq
      %v803 = vshrl.u32 %v802, 7
      %v804 = vsub.s32 2, %v803
      %v805 = vrot.slane %v215, %v804
      %v806 = vlaneseq
      %v807 = vshrl.u32 %v806, 7
      %v808 = vsub.s32 2, %v807
      %v809 = vrot.slane %v216, %v808
      %v810 = vmul.f32 %v792, %v805
      %v811 = vmul.f32 %v792, %v809
      %v812 = vmul.f32 %v796, %v805
      %v813 = vmul.f32 %v796, %v809
      %v814 = vmul.f32 %v800, %v805
      %v815 = vmul.f32 %v800, %v809
      %v816 = vadd.f32 %v784, %v810
      %v817 = vadd.f32 %v785, %v811
      %v818 = vadd.f32 %v786, %v812
      %v819 = vadd.f32 %v787, %v813
      %v820 = vadd.f32 %v788, %v814
      %v821 = vadd.f32 %v789, %v815
      %822 = vset.pattern.permute.xlu0 19
      %823 = vperm.xlu0 %822, %v208
      %v824 = vpop.permute.xlu0 %823
      %826 = vset.pattern.permute.xlu0 19
      %827 = vperm.xlu0 %826, %v209
      %v828 = vpop.permute.xlu0 %827
      %830 = vset.pattern.permute.xlu0 19
      %831 = vperm.xlu0 %830, %v210
      %v832 = vpop.permute.xlu0 %831
      %v834 = vlaneseq
      %v835 = vshrl.u32 %v834, 7
      %v836 = vsub.s32 3, %v835
      %v837 = vrot.slane %v215, %v836
      %v838 = vlaneseq
      %v839 = vshrl.u32 %v838, 7
      %v840 = vsub.s32 3, %v839
      %v841 = vrot.slane %v216, %v840
      %v842 = vmul.f32 %v824, %v837
      %v843 = vmul.f32 %v824, %v841
      %v844 = vmul.f32 %v828, %v837
      %v845 = vmul.f32 %v828, %v841
      %v846 = vmul.f32 %v832, %v837
      %v847 = vmul.f32 %v832, %v841
      %v848 = vadd.f32 %v816, %v842
      %v849 = vadd.f32 %v817, %v843
      %v850 = vadd.f32 %v818, %v844
      %v851 = vadd.f32 %v819, %v845
      %v852 = vadd.f32 %v820, %v846
      %v853 = vadd.f32 %v821, %v847
      %854 = vset.pattern.permute.xlu0 20
      %855 = vperm.xlu0 %854, %v208
      %v856 = vpop.permute.xlu0 %855
      %858 = vset.pattern.permute.xlu0 20
      %859 = vperm.xlu0 %858, %v209
      %v860 = vpop.permute.xlu0 %859
      %862 = vset.pattern.permute.xlu0 20
      %863 = vperm.xlu0 %862, %v210
      %v864 = vpop.permute.xlu0 %863
      %v866 = vlaneseq
      %v867 = vshrl.u32 %v866, 7
      %v868 = vsub.s32 4, %v867
      %v869 = vrot.slane %v215, %v868
      %v870 = vlaneseq
      %v871 = vshrl.u32 %v870, 7
      %v872 = vsub.s32 4, %v871
      %v873 = vrot.slane %v216, %v872
      %v874 = vmul.f32 %v856, %v869
      %v875 = vmul.f32 %v856, %v873
      %v876 = vmul.f32 %v860, %v869
      %v877 = vmul.f32 %v860, %v873
      %v878 = vmul.f32 %v864, %v869
      %v879 = vmul.f32 %v864, %v873
      %v880 = vadd.f32 %v848, %v874
      %v881 = vadd.f32 %v849, %v875
      %v882 = vadd.f32 %v850, %v876
      %v883 = vadd.f32 %v851, %v877
      %v884 = vadd.f32 %v852, %v878
      %v885 = vadd.f32 %v853, %v879
      %886 = vset.pattern.permute.xlu0 21
      %887 = vperm.xlu0 %886, %v208
      %v888 = vpop.permute.xlu0 %887
      %890 = vset.pattern.permute.xlu0 21
      %891 = vperm.xlu0 %890, %v209
      %v892 = vpop.permute.xlu0 %891
      %894 = vset.pattern.permute.xlu0 21
      %895 = vperm.xlu0 %894, %v210
      %v896 = vpop.permute.xlu0 %895
      %v898 = vlaneseq
      %v899 = vshrl.u32 %v898, 7
      %v900 = vsub.s32 5, %v899
      %v901 = vrot.slane %v215, %v900
      %v902 = vlaneseq
      %v903 = vshrl.u32 %v902, 7
      %v904 = vsub.s32 5, %v903
      %v905 = vrot.slane %v216, %v904
      %v906 = vmul.f32 %v888, %v901
      %v907 = vmul.f32 %v888, %v905
      %v908 = vmul.f32 %v892, %v901
      %v909 = vmul.f32 %v892, %v905
      %v910 = vmul.f32 %v896, %v901
      %v911 = vmul.f32 %v896, %v905
      %v912 = vadd.f32 %v880, %v906
      %v913 = vadd.f32 %v881, %v907
      %v914 = vadd.f32 %v882, %v908
      %v915 = vadd.f32 %v883, %v909
      %v916 = vadd.f32 %v884, %v910
      %v917 = vadd.f32 %v885, %v911
      %918 = vset.pattern.permute.xlu0 22
      %919 = vperm.xlu0 %918, %v208
      %v920 = vpop.permute.xlu0 %919
      %922 = vset.pattern.permute.xlu0 22
      %923 = vperm.xlu0 %922, %v209
      %v924 = vpop.permute.xlu0 %923
      %926 = vset.pattern.permute.xlu0 22
      %927 = vperm.xlu0 %926, %v210
      %v928 = vpop.permute.xlu0 %927
      %v930 = vlaneseq
      %v931 = vshrl.u32 %v930, 7
      %v932 = vsub.s32 6, %v931
      %v933 = vrot.slane %v215, %v932
      %v934 = vlaneseq
      %v935 = vshrl.u32 %v934, 7
      %v936 = vsub.s32 6, %v935
      %v937 = vrot.slane %v216, %v936
      %v938 = vmul.f32 %v920, %v933
      %v939 = vmul.f32 %v920, %v937
      %v940 = vmul.f32 %v924, %v933
      %v941 = vmul.f32 %v924, %v937
      %v942 = vmul.f32 %v928, %v933
      %v943 = vmul.f32 %v928, %v937
      %v944 = vadd.f32 %v912, %v938
      %v945 = vadd.f32 %v913, %v939
      %v946 = vadd.f32 %v914, %v940
      %v947 = vadd.f32 %v915, %v941
      %v948 = vadd.f32 %v916, %v942
      %v949 = vadd.f32 %v917, %v943
      %950 = vset.pattern.permute.xlu0 23
      %951 = vperm.xlu0 %950, %v208
      %v952 = vpop.permute.xlu0 %951
      %954 = vset.pattern.permute.xlu0 23
      %955 = vperm.xlu0 %954, %v209
      %v956 = vpop.permute.xlu0 %955
      %958 = vset.pattern.permute.xlu0 23
      %959 = vperm.xlu0 %958, %v210
      %v960 = vpop.permute.xlu0 %959
      %v962 = vlaneseq
      %v963 = vshrl.u32 %v962, 7
      %v964 = vsub.s32 7, %v963
      %v965 = vrot.slane %v215, %v964
      %v966 = vlaneseq
      %v967 = vshrl.u32 %v966, 7
      %v968 = vsub.s32 7, %v967
      %v969 = vrot.slane %v216, %v968
      %v970 = vmul.f32 %v952, %v965
      %v971 = vmul.f32 %v952, %v969
      %v972 = vmul.f32 %v956, %v965
      %v973 = vmul.f32 %v956, %v969
      %v974 = vmul.f32 %v960, %v965
      %v975 = vmul.f32 %v960, %v969
      %v976 = vadd.f32 %v944, %v970
      %v977 = vadd.f32 %v945, %v971
      %v978 = vadd.f32 %v946, %v972
      %v979 = vadd.f32 %v947, %v973
      %v980 = vadd.f32 %v948, %v974
      %v981 = vadd.f32 %v949, %v975
      %982 = vset.pattern.permute.xlu0 24
      %983 = vperm.xlu0 %982, %v208
      %v984 = vpop.permute.xlu0 %983
      %986 = vset.pattern.permute.xlu0 24
      %987 = vperm.xlu0 %986, %v209
      %v988 = vpop.permute.xlu0 %987
      %990 = vset.pattern.permute.xlu0 24
      %991 = vperm.xlu0 %990, %v210
      %v992 = vpop.permute.xlu0 %991
      %v994 = vadd.f32 %v976, %v984
      %v995 = vadd.f32 %v977, %v984
      %v996 = vadd.f32 %v978, %v988
      %v997 = vadd.f32 %v979, %v988
      %v998 = vadd.f32 %v980, %v992
      %v999 = vadd.f32 %v981, %v992
      %v1000 = vadd.f32 %v994, %v995
      %1001 = vadd.xlane.f32.xlu0 %v1000
      %v1002 = vpop.xlane.xlu0 %1001
      %v1003 = vadd.f32 %v996, %v997
      %1004 = vadd.xlane.f32.xlu0 %v1003
      %v1005 = vpop.xlane.xlu0 %1004
      %v1006 = vadd.f32 %v998, %v999
      %1007 = vadd.xlane.f32.xlu0 %v1006
      %v1008 = vpop.xlane.xlu0 %1007
      %v1009 = vmul.f32 %v994, %v994
      %v1010 = vmul.f32 %v995, %v995
      %v1011 = vmul.f32 %v996, %v996
      %v1012 = vmul.f32 %v997, %v997
      %v1013 = vmul.f32 %v998, %v998
      %v1014 = vmul.f32 %v999, %v999
      %v1015 = vadd.f32 %v1009, %v1010
      %1016 = vadd.xlane.f32.xlu0 %v1015
      %v1017 = vpop.xlane.xlu0 %1016
      %v1018 = vadd.f32 %v1011, %v1012
      %1019 = vadd.xlane.f32.xlu0 %v1018
      %v1020 = vpop.xlane.xlu0 %1019
      %v1021 = vadd.f32 %v1013, %v1014
      %1022 = vadd.xlane.f32.xlu0 %v1021
      %v1023 = vpop.xlane.xlu0 %1022
      %v1024 = vmul.f32 %v208, %v1002
      %v1025 = vmul.f32 %v209, %v1005
      %v1026 = vmul.f32 %v210, %v1008
      %vm1027 = vcmask 253144
      %v1028 = vsel %vm1027, %v1024, 0.0
      %v1029 = vsel %vm1027, %v1025, 0.0
      %v1030 = vadd.f32 %v1028, %v1029
      %v1031 = vsel %vm1027, %v1026, 0.0
      %v1032 = vadd.f32 %v1030, %v1031
      %v1033 = vrot.slane %v1032, 4
      %v1034 = vadd.f32 %v1032, %v1033
      %v1035 = vrot.slane %v1034, 2
      %v1036 = vadd.f32 %v1034, %v1035
      %v1037 = vrot.slane %v1036, 1
      %v1038 = vadd.f32 %v1036, %v1037
      %v1039 = vmul.f32 %v1038, 0.0006510417
      %v1040 = vmul.f32 %v208, %v1017
      %v1041 = vmul.f32 %v209, %v1020
      %v1042 = vmul.f32 %v210, %v1023
      %v1043 = vsel %vm1027, %v1040, 0.0
      %v1044 = vsel %vm1027, %v1041, 0.0
      %v1045 = vadd.f32 %v1043, %v1044
      %v1046 = vsel %vm1027, %v1042, 0.0
      %v1047 = vadd.f32 %v1045, %v1046
      %v1048 = vrot.slane %v1047, 4
      %v1049 = vadd.f32 %v1047, %v1048
      %v1050 = vrot.slane %v1049, 2
      %v1051 = vadd.f32 %v1049, %v1050
      %v1052 = vrot.slane %v1051, 1
      %v1053 = vadd.f32 %v1051, %v1052
      %v1054 = vmul.f32 %v1053, 0.0006510417
      %v1055 = vmul.f32 %v1039, %v1039
      %v1056 = vsub.f32 %v1054, %v1055
      %v1057 = vadd.f32 %v1056, 1e-05
      %v1058 = vrsqrt.pop %v1057
      %v1059 = vmul.f32 %v208, %v1039
      %v1060 = vmul.f32 %v209, %v1039
      %v1061 = vmul.f32 %v210, %v1039
      %1065 = vrot.lane.b32.xlu0 %v1059, 101
      %v1066 = vpop.permute.xlu0 %1065
      %1067 = vrot.lane.b32.xlu0 %v1060, 101
      %v1068 = vpop.permute.xlu0 %1067
      %1069 = vrot.lane.b32.xlu0 %v1061, 101
      %v1070 = vpop.permute.xlu0 %1069
      %vm1074 = vcmask 31744
      %v1075 = vsel %vm1074, %v1066, 0.0
      %1076 = vadd.xlane.f32.xlu0 %v1075
      %v1077 = vpop.xlane.xlu0 %1076
      %v1078 = vsel %vm1074, %v1068, 0.0
      %1079 = vadd.xlane.f32.xlu0 %v1078
      %v1080 = vpop.xlane.xlu0 %1079
      %v1081 = vsel %vm1074, %v1070, 0.0
      %1082 = vadd.xlane.f32.xlu0 %v1081
      %v1083 = vpop.xlane.xlu0 %1082
      %v1084 = vmul.f32 %v208, %v1058
      %v1085 = vmul.f32 %v209, %v1058
      %v1086 = vmul.f32 %v210, %v1058
      %1090 = vrot.lane.b32.xlu0 %v1084, 101
      %v1091 = vpop.permute.xlu0 %1090
      %1092 = vrot.lane.b32.xlu0 %v1085, 101
      %v1093 = vpop.permute.xlu0 %1092
      %1094 = vrot.lane.b32.xlu0 %v1086, 101
      %v1095 = vpop.permute.xlu0 %1094
      %v1099 = vsel %vm1074, %v1091, 0.0
      %1100 = vadd.xlane.f32.xlu0 %v1099
      %v1101 = vpop.xlane.xlu0 %1100
      %v1102 = vsel %vm1074, %v1093, 0.0
      %1103 = vadd.xlane.f32.xlu0 %v1102
      %v1104 = vpop.xlane.xlu0 %1103
      %v1105 = vsel %vm1074, %v1095, 0.0
      %1106 = vadd.xlane.f32.xlu0 %v1105
      %v1107 = vpop.xlane.xlu0 %1106
      %v1108 = vsub.f32 %v994, %v1077
      %v1109 = vsub.f32 %v995, %v1077
      %v1110 = vsub.f32 %v996, %v1080
      %v1111 = vsub.f32 %v997, %v1080
      %v1112 = vsub.f32 %v998, %v1083
      %v1113 = vsub.f32 %v999, %v1083
      %v1114 = vmul.f32 %v1101, %v208
      %v1115 = vmul.f32 %v1104, %v209
      %v1116 = vmul.f32 %v1107, %v210
      %1118 = vset.pattern.permute.xlu0 25
      %1119 = vperm.xlu0 %1118, %v1114
      %v1120 = vpop.permute.xlu0 %1119
      %1123 = vset.pattern.permute.xlu0 25
      %1124 = vperm.xlu0 %1123, %v1115
      %v1125 = vpop.permute.xlu0 %1124
      %1128 = vset.pattern.permute.xlu0 25
      %1129 = vperm.xlu0 %1128, %v1116
      %v1130 = vpop.permute.xlu0 %1129
      %v1132 = vmul.f32 %v1108, %v1120
      %v1133 = vmul.f32 %v1109, %v1120
      %v1134 = vmul.f32 %v1110, %v1125
      %v1135 = vmul.f32 %v1111, %v1125
      %v1136 = vmul.f32 %v1112, %v1130
      %v1137 = vmul.f32 %v1113, %v1130
      %1138 = vset.pattern.permute.xlu0 26
      %1139 = vperm.xlu0 %1138, %v208
      %v1140 = vpop.permute.xlu0 %1139
      %1142 = vset.pattern.permute.xlu0 26
      %1143 = vperm.xlu0 %1142, %v209
      %v1144 = vpop.permute.xlu0 %1143
      %1146 = vset.pattern.permute.xlu0 26
      %1147 = vperm.xlu0 %1146, %v210
      %v1148 = vpop.permute.xlu0 %1147
      %v1150 = vadd.f32 %v1132, %v1140
      %v1151 = vadd.f32 %v1133, %v1140
      %v1152 = vadd.f32 %v1134, %v1144
      %v1153 = vadd.f32 %v1135, %v1144
      %v1154 = vadd.f32 %v1136, %v1148
      %v1155 = vadd.f32 %v1137, %v1148
      %v1156 = vadd.f32 %v1150, 3.0
      %v1157 = vadd.f32 %v1151, 3.0
      %v1158 = vadd.f32 %v1152, 3.0
      %v1159 = vadd.f32 %v1153, 3.0
      %v1160 = vadd.f32 %v1154, 3.0
      %v1161 = vadd.f32 %v1155, 3.0
      %v1162 = vmax.f32 %v1156, 0.0
      %v1163 = vmax.f32 %v1157, 0.0
      %v1164 = vmax.f32 %v1158, 0.0
      %v1165 = vmax.f32 %v1159, 0.0
      %v1166 = vmax.f32 %v1160, 0.0
      %v1167 = vmax.f32 %v1161, 0.0
      %v1168 = vmin.f32 %v1162, 6.0
      %v1169 = vmin.f32 %v1163, 6.0
      %v1170 = vmin.f32 %v1164, 6.0
      %v1171 = vmin.f32 %v1165, 6.0
      %v1172 = vmin.f32 %v1166, 6.0
      %v1173 = vmin.f32 %v1167, 6.0
      %v1174 = vmul.f32 %v1150, %v1168
      %v1175 = vmul.f32 %v1151, %v1169
      %v1176 = vmul.f32 %v1152, %v1170
      %v1177 = vmul.f32 %v1153, %v1171
      %v1178 = vmul.f32 %v1154, %v1172
      %v1179 = vmul.f32 %v1155, %v1173
      %v1180 = vmul.f32 %v1174, 0.16666667
      %v1181 = vmul.f32 %v1175, 0.16666667
      %v1182 = vmul.f32 %v1176, 0.16666667
      %v1183 = vmul.f32 %v1177, 0.16666667
      %v1184 = vmul.f32 %v1178, 0.16666667
      %v1185 = vmul.f32 %v1179, 0.16666667
      %v1186 = vmax.f32 %v1150, 0.0
      %v1187 = vmax.f32 %v1151, 0.0
      %v1188 = vmax.f32 %v1152, 0.0
      %v1189 = vmax.f32 %v1153, 0.0
      %v1190 = vmax.f32 %v1154, 0.0
      %v1191 = vmax.f32 %v1155, 0.0
      %v1192 = vmin.f32 %v1186, 6.0
      %v1193 = vmin.f32 %v1187, 6.0
      %v1194 = vmin.f32 %v1188, 6.0
      %v1195 = vmin.f32 %v1189, 6.0
      %v1196 = vmin.f32 %v1190, 6.0
      %v1197 = vmin.f32 %v1191, 6.0
      %v1198 = vmin.f32 %v1150, 0.0
      %v1199 = vmin.f32 %v1151, 0.0
      %v1200 = vmin.f32 %v1152, 0.0
      %v1201 = vmin.f32 %v1153, 0.0
      %v1202 = vmin.f32 %v1154, 0.0
      %v1203 = vmin.f32 %v1155, 0.0
      %v1204 = vmul.f32 %v1198, 0.01
      %v1205 = vmul.f32 %v1199, 0.01
      %v1206 = vmul.f32 %v1200, 0.01
      %v1207 = vmul.f32 %v1201, 0.01
      %v1208 = vmul.f32 %v1202, 0.01
      %v1209 = vmul.f32 %v1203, 0.01
      %v1210 = vadd.f32 %v1192, %v1204
      %v1211 = vadd.f32 %v1193, %v1205
      %v1212 = vadd.f32 %v1194, %v1206
      %v1213 = vadd.f32 %v1195, %v1207
      %v1214 = vadd.f32 %v1196, %v1208
      %v1215 = vadd.f32 %v1197, %v1209
      %vm1216 = vcmp.ge.f32.partialorder %v1150, -3.0
      %vm1217 = vcmp.ge.f32.partialorder %v1151, -3.0
      %vm1218 = vcmp.ge.f32.partialorder %v1152, -3.0
      %vm1219 = vcmp.ge.f32.partialorder %v1153, -3.0
      %vm1220 = vcmp.ge.f32.partialorder %v1154, -3.0
      %vm1221 = vcmp.ge.f32.partialorder %v1155, -3.0
      %vm1222 = vcmp.le.f32.partialorder %v1150, 3.0
      %vm1223 = vcmp.le.f32.partialorder %v1151, 3.0
      %vm1224 = vcmp.le.f32.partialorder %v1152, 3.0
      %vm1225 = vcmp.le.f32.partialorder %v1153, 3.0
      %vm1226 = vcmp.le.f32.partialorder %v1154, 3.0
      %vm1227 = vcmp.le.f32.partialorder %v1155, 3.0
      %vm1228 = vmand %vm1216, %vm1222
      %vm1229 = vmand %vm1217, %vm1223
      %vm1230 = vmand %vm1218, %vm1224
      %vm1231 = vmand %vm1219, %vm1225
      %vm1232 = vmand %vm1220, %vm1226
      %vm1233 = vmand %vm1221, %vm1227
      %v1234 = vsel %vm1228, %v1180, %v1210
      %v1235 = vsel %vm1229, %v1181, %v1211
      %v1236 = vsel %vm1230, %v1182, %v1212
      %v1237 = vsel %vm1231, %v1183, %v1213
      %v1238 = vsel %vm1232, %v1184, %v1214
      %v1239 = vsel %vm1233, %v1185, %v1215
      %v1240 = vadd.f32 %v1234, %v1235
      %1241 = vadd.xlane.f32.xlu0 %v1240
      %v1242 = vpop.xlane.xlu0 %1241
      %v1243 = vadd.f32 %v1236, %v1237
      %1244 = vadd.xlane.f32.xlu0 %v1243
      %v1245 = vpop.xlane.xlu0 %1244
      %v1246 = vadd.f32 %v1238, %v1239
      %1247 = vadd.xlane.f32.xlu0 %v1246
      %v1248 = vpop.xlane.xlu0 %1247
      %v1249 = vmul.f32 %v1242, 0.00390625
      %v1250 = vmul.f32 %v1245, 0.00390625
      %v1251 = vmul.f32 %v1248, 0.00390625
      %v1252 = vmul.f32 %v208, %v1249
      %v1253 = vmul.f32 %v209, %v1250
      %v1254 = vmul.f32 %v210, %v1251
      %vm1255 = vcmask 318712
      %v1256 = vsel %vm1255, %v1252, 0.0
      %v1257 = vsel %vm1255, %v1253, 0.0
      %v1258 = vadd.f32 %v1256, %v1257
      %v1259 = vsel %vm1255, %v1254, 0.0
      %v1260 = vadd.f32 %v1258, %v1259
      %v1261 = vrot.slane %v1260, 4
      %v1262 = vadd.f32 %v1260, %v1261
      %v1263 = vrot.slane %v1262, 2
      %v1264 = vadd.f32 %v1262, %v1263
      %v1265 = vrot.slane %v1264, 1
      %v1266 = vadd.f32 %v1264, %v1265
      %v1267 = vmax.f32 %v1266, 0.0
      %1269 = vrot.lane.b32.xlu0 %v1267, 8
      %v1270 = vpop.permute.xlu0 %1269
      %v1272 = vmul.f32 %v208, %v1270
      %v1273 = vmul.f32 %v209, %v1270
      %v1274 = vmul.f32 %v210, %v1270
      %1278 = vrot.lane.b32.xlu0 %v1272, 89
      %v1279 = vpop.permute.xlu0 %1278
      %1280 = vrot.lane.b32.xlu0 %v1273, 89
      %v1281 = vpop.permute.xlu0 %1280
      %1282 = vrot.lane.b32.xlu0 %v1274, 89
      %v1283 = vpop.permute.xlu0 %1282
      %vm1287 = vcmask 64512
      %v1288 = vsel %vm1287, %v1279, 0.0
      %1289 = vadd.xlane.f32.xlu0 %v1288
      %v1290 = vpop.xlane.xlu0 %1289
      %v1291 = vsel %vm1287, %v1281, 0.0
      %1292 = vadd.xlane.f32.xlu0 %v1291
      %v1293 = vpop.xlane.xlu0 %1292
      %v1294 = vsel %vm1287, %v1283, 0.0
      %1295 = vadd.xlane.f32.xlu0 %v1294
      %v1296 = vpop.xlane.xlu0 %1295
      %v1297 = vmul.f32 %v1290, 0.16666667
      %v1298 = vmul.f32 %v1293, 0.16666667
      %v1299 = vmul.f32 %v1296, 0.16666667
      %v1300 = vadd.f32 %v1297, 0.5
      %v1301 = vadd.f32 %v1298, 0.5
      %v1302 = vadd.f32 %v1299, 0.5
      %v1303 = vmax.f32 %v1300, 0.0
      %v1304 = vmax.f32 %v1301, 0.0
      %v1305 = vmax.f32 %v1302, 0.0
      %v1306 = vmin.f32 %v1303, 1.0
      %v1307 = vmin.f32 %v1304, 1.0
      %v1308 = vmin.f32 %v1305, 1.0
      %1309 = vset.pattern.permute.xlu0 47
      %1310 = vperm.xlu0 %1309, %v208
      %v1311 = vpop.permute.xlu0 %1310
      %1313 = vset.pattern.permute.xlu0 47
      %1314 = vperm.xlu0 %1313, %v209
      %v1315 = vpop.permute.xlu0 %1314
      %1317 = vset.pattern.permute.xlu0 47
      %1318 = vperm.xlu0 %1317, %v210
      %v1319 = vpop.permute.xlu0 %1318
      %v1321 = vmul.f32 %v1311, %v1234
      %v1322 = vmul.f32 %v1311, %v1235
      %v1323 = vmul.f32 %v1315, %v1236
      %v1324 = vmul.f32 %v1315, %v1237
      %v1325 = vmul.f32 %v1319, %v1238
      %v1326 = vmul.f32 %v1319, %v1239
      %v1327 = vadd.f32 %v1321, %v1323
      %v1328 = vadd.f32 %v1327, %v1325
      %v1329 = vrot.slane %v1328, 4
      %v1330 = vadd.f32 %v1328, %v1329
      %v1331 = vrot.slane %v1330, 2
      %v1332 = vadd.f32 %v1330, %v1331
      %v1333 = vrot.slane %v1332, 1
      %v1334 = vadd.f32 %v1332, %v1333
      %v1335 = vadd.f32 %v1322, %v1324
      %v1336 = vadd.f32 %v1335, %v1326
      %v1337 = vrot.slane %v1336, 4
      %v1338 = vadd.f32 %v1336, %v1337
      %v1339 = vrot.slane %v1338, 2
      %v1340 = vadd.f32 %v1338, %v1339
      %v1341 = vrot.slane %v1340, 1
      %v1342 = vadd.f32 %v1340, %v1341
      %v1343 = vxor.u32 %v1334, 2147483648
      %v1344 = vxor.u32 %v1342, 2147483648
      %v1345 = vmul.f32 %v1343, 1.442695
      %v1346 = vpow.pop %v1345
      %v1347 = vmul.f32 %v1344, 1.442695
      %v1348 = vpow.pop %v1347
      %v1349 = vadd.f32 %v1346, 1.0
      %v1350 = vadd.f32 %v1348, 1.0
      %v1351 = vrcp.pop %v1349
      %v1352 = vmul.f32 1.0, %v1351
      %v1353 = vrcp.pop %v1350
      %v1354 = vmul.f32 1.0, %v1353
      %v1355 = vadd.f32 %v1306, %v1352
      %v1356 = vadd.f32 %v1306, %v1354
      %v1357 = vadd.f32 %v1307, %v1352
      %v1358 = vadd.f32 %v1307, %v1354
      %v1359 = vadd.f32 %v1308, %v1352
      %v1360 = vadd.f32 %v1308, %v1354
      %v1361 = vmul.f32 %v1234, %v1355
      %v1362 = vmul.f32 %v1235, %v1356
      %v1363 = vmul.f32 %v1236, %v1357
      %v1364 = vmul.f32 %v1237, %v1358
      %v1365 = vmul.f32 %v1238, %v1359
      %v1366 = vmul.f32 %v1239, %v1360
      %1367 = vst [vmem:[%s206] sm:$0xff] %v1361
      %1368 = vst [vmem:[%s206 + $0x8] sm:$0xff] %v1362
      %1369 = vst [vmem:[%s206 + $0x10] sm:$0xff] %v1363
      %1370 = vst [vmem:[%s206 + $0x18] sm:$0xff] %v1364
      %1371 = vst [vmem:[%s206 + $0x20] sm:$0xff] %v1365
      %1372 = vst [vmem:[%s206 + $0x28] sm:$0xff] %v1366
      %s1373 = scalar_lea.vmem %s190, 48
      %v1374 = vld [vmem:[%s1373] sm:$0xff]
      %v1375 = vld [vmem:[%s1373 + $0x8] sm:$0xff]
      %v1376 = vld [vmem:[%s1373 + $0x10] sm:$0xff]
      %v1377 = vld [vmem:[%s1373 + $0x18] sm:$0xff]
      %v1378 = vld [vmem:[%s1373 + $0x20] sm:$0xff]
      %v1379 = vld [vmem:[%s1373 + $0x28] sm:$0xff]
      %v1380 = vlaneseq
      %v1381 = vshrl.u32 %v1380, 7
      %v1382 = vsub.s32 0, %v1381
      %v1383 = vrot.slane %v1374, %v1382
      %v1384 = vlaneseq
      %v1385 = vshrl.u32 %v1384, 7
      %v1386 = vsub.s32 0, %v1385
      %v1387 = vrot.slane %v1375, %v1386
      %v1388 = vmul.f32 %v220, %v1383
      %v1389 = vmul.f32 %v220, %v1387
      %v1390 = vmul.f32 %v225, %v1383
      %v1391 = vmul.f32 %v225, %v1387
      %v1392 = vmul.f32 %v230, %v1383
      %v1393 = vmul.f32 %v230, %v1387
      %v1394 = vlaneseq
      %v1395 = vshrl.u32 %v1394, 7
      %v1396 = vsub.s32 1, %v1395
      %v1397 = vrot.slane %v1374, %v1396
      %v1398 = vlaneseq
      %v1399 = vshrl.u32 %v1398, 7
      %v1400 = vsub.s32 1, %v1399
      %v1401 = vrot.slane %v1375, %v1400
      %v1402 = vmul.f32 %v248, %v1397
      %v1403 = vmul.f32 %v248, %v1401
      %v1404 = vmul.f32 %v252, %v1397
      %v1405 = vmul.f32 %v252, %v1401
      %v1406 = vmul.f32 %v256, %v1397
      %v1407 = vmul.f32 %v256, %v1401
      %v1408 = vadd.f32 %v1388, %v1402
      %v1409 = vadd.f32 %v1389, %v1403
      %v1410 = vadd.f32 %v1390, %v1404
      %v1411 = vadd.f32 %v1391, %v1405
      %v1412 = vadd.f32 %v1392, %v1406
      %v1413 = vadd.f32 %v1393, %v1407
      %v1414 = vlaneseq
      %v1415 = vshrl.u32 %v1414, 7
      %v1416 = vsub.s32 2, %v1415
      %v1417 = vrot.slane %v1374, %v1416
      %v1418 = vlaneseq
      %v1419 = vshrl.u32 %v1418, 7
      %v1420 = vsub.s32 2, %v1419
      %v1421 = vrot.slane %v1375, %v1420
      %v1422 = vmul.f32 %v280, %v1417
      %v1423 = vmul.f32 %v280, %v1421
      %v1424 = vmul.f32 %v284, %v1417
      %v1425 = vmul.f32 %v284, %v1421
      %v1426 = vmul.f32 %v288, %v1417
      %v1427 = vmul.f32 %v288, %v1421
      %v1428 = vadd.f32 %v1408, %v1422
      %v1429 = vadd.f32 %v1409, %v1423
      %v1430 = vadd.f32 %v1410, %v1424
      %v1431 = vadd.f32 %v1411, %v1425
      %v1432 = vadd.f32 %v1412, %v1426
      %v1433 = vadd.f32 %v1413, %v1427
      %v1434 = vlaneseq
      %v1435 = vshrl.u32 %v1434, 7
      %v1436 = vsub.s32 3, %v1435
      %v1437 = vrot.slane %v1374, %v1436
      %v1438 = vlaneseq
      %v1439 = vshrl.u32 %v1438, 7
      %v1440 = vsub.s32 3, %v1439
      %v1441 = vrot.slane %v1375, %v1440
      %v1442 = vmul.f32 %v312, %v1437
      %v1443 = vmul.f32 %v312, %v1441
      %v1444 = vmul.f32 %v316, %v1437
      %v1445 = vmul.f32 %v316, %v1441
      %v1446 = vmul.f32 %v320, %v1437
      %v1447 = vmul.f32 %v320, %v1441
      %v1448 = vadd.f32 %v1428, %v1442
      %v1449 = vadd.f32 %v1429, %v1443
      %v1450 = vadd.f32 %v1430, %v1444
      %v1451 = vadd.f32 %v1431, %v1445
      %v1452 = vadd.f32 %v1432, %v1446
      %v1453 = vadd.f32 %v1433, %v1447
      %v1454 = vlaneseq
      %v1455 = vshrl.u32 %v1454, 7
      %v1456 = vsub.s32 4, %v1455
      %v1457 = vrot.slane %v1374, %v1456
      %v1458 = vlaneseq
      %v1459 = vshrl.u32 %v1458, 7
      %v1460 = vsub.s32 4, %v1459
      %v1461 = vrot.slane %v1375, %v1460
      %v1462 = vmul.f32 %v344, %v1457
      %v1463 = vmul.f32 %v344, %v1461
      %v1464 = vmul.f32 %v348, %v1457
      %v1465 = vmul.f32 %v348, %v1461
      %v1466 = vmul.f32 %v352, %v1457
      %v1467 = vmul.f32 %v352, %v1461
      %v1468 = vadd.f32 %v1448, %v1462
      %v1469 = vadd.f32 %v1449, %v1463
      %v1470 = vadd.f32 %v1450, %v1464
      %v1471 = vadd.f32 %v1451, %v1465
      %v1472 = vadd.f32 %v1452, %v1466
      %v1473 = vadd.f32 %v1453, %v1467
      %v1474 = vlaneseq
      %v1475 = vshrl.u32 %v1474, 7
      %v1476 = vsub.s32 5, %v1475
      %v1477 = vrot.slane %v1374, %v1476
      %v1478 = vlaneseq
      %v1479 = vshrl.u32 %v1478, 7
      %v1480 = vsub.s32 5, %v1479
      %v1481 = vrot.slane %v1375, %v1480
      %v1482 = vmul.f32 %v376, %v1477
      %v1483 = vmul.f32 %v376, %v1481
      %v1484 = vmul.f32 %v380, %v1477
      %v1485 = vmul.f32 %v380, %v1481
      %v1486 = vmul.f32 %v384, %v1477
      %v1487 = vmul.f32 %v384, %v1481
      %v1488 = vadd.f32 %v1468, %v1482
      %v1489 = vadd.f32 %v1469, %v1483
      %v1490 = vadd.f32 %v1470, %v1484
      %v1491 = vadd.f32 %v1471, %v1485
      %v1492 = vadd.f32 %v1472, %v1486
      %v1493 = vadd.f32 %v1473, %v1487
      %v1494 = vlaneseq
      %v1495 = vshrl.u32 %v1494, 7
      %v1496 = vsub.s32 6, %v1495
      %v1497 = vrot.slane %v1374, %v1496
      %v1498 = vlaneseq
      %v1499 = vshrl.u32 %v1498, 7
      %v1500 = vsub.s32 6, %v1499
      %v1501 = vrot.slane %v1375, %v1500
      %v1502 = vmul.f32 %v408, %v1497
      %v1503 = vmul.f32 %v408, %v1501
      %v1504 = vmul.f32 %v412, %v1497
      %v1505 = vmul.f32 %v412, %v1501
      %v1506 = vmul.f32 %v416, %v1497
      %v1507 = vmul.f32 %v416, %v1501
      %v1508 = vadd.f32 %v1488, %v1502
      %v1509 = vadd.f32 %v1489, %v1503
      %v1510 = vadd.f32 %v1490, %v1504
      %v1511 = vadd.f32 %v1491, %v1505
      %v1512 = vadd.f32 %v1492, %v1506
      %v1513 = vadd.f32 %v1493, %v1507
      %v1514 = vlaneseq
      %v1515 = vshrl.u32 %v1514, 7
      %v1516 = vsub.s32 7, %v1515
      %v1517 = vrot.slane %v1374, %v1516
      %v1518 = vlaneseq
      %v1519 = vshrl.u32 %v1518, 7
      %v1520 = vsub.s32 7, %v1519
      %v1521 = vrot.slane %v1375, %v1520
      %v1522 = vmul.f32 %v440, %v1517
      %v1523 = vmul.f32 %v440, %v1521
      %v1524 = vmul.f32 %v444, %v1517
      %v1525 = vmul.f32 %v444, %v1521
      %v1526 = vmul.f32 %v448, %v1517
      %v1527 = vmul.f32 %v448, %v1521
      %v1528 = vadd.f32 %v1508, %v1522
      %v1529 = vadd.f32 %v1509, %v1523
      %v1530 = vadd.f32 %v1510, %v1524
      %v1531 = vadd.f32 %v1511, %v1525
      %v1532 = vadd.f32 %v1512, %v1526
      %v1533 = vadd.f32 %v1513, %v1527
      %v1534 = vlaneseq
      %v1535 = vshrl.u32 %v1534, 7
      %v1536 = vsub.s32 0, %v1535
      %v1537 = vrot.slane %v1376, %v1536
      %v1538 = vlaneseq
      %v1539 = vshrl.u32 %v1538, 7
      %v1540 = vsub.s32 0, %v1539
      %v1541 = vrot.slane %v1377, %v1540
      %v1542 = vmul.f32 %v472, %v1537
      %v1543 = vmul.f32 %v472, %v1541
      %v1544 = vmul.f32 %v476, %v1537
      %v1545 = vmul.f32 %v476, %v1541
      %v1546 = vmul.f32 %v480, %v1537
      %v1547 = vmul.f32 %v480, %v1541
      %v1548 = vadd.f32 %v1528, %v1542
      %v1549 = vadd.f32 %v1529, %v1543
      %v1550 = vadd.f32 %v1530, %v1544
      %v1551 = vadd.f32 %v1531, %v1545
      %v1552 = vadd.f32 %v1532, %v1546
      %v1553 = vadd.f32 %v1533, %v1547
      %v1554 = vlaneseq
      %v1555 = vshrl.u32 %v1554, 7
      %v1556 = vsub.s32 1, %v1555
      %v1557 = vrot.slane %v1376, %v1556
      %v1558 = vlaneseq
      %v1559 = vshrl.u32 %v1558, 7
      %v1560 = vsub.s32 1, %v1559
      %v1561 = vrot.slane %v1377, %v1560
      %v1562 = vmul.f32 %v504, %v1557
      %v1563 = vmul.f32 %v504, %v1561
      %v1564 = vmul.f32 %v508, %v1557
      %v1565 = vmul.f32 %v508, %v1561
      %v1566 = vmul.f32 %v512, %v1557
      %v1567 = vmul.f32 %v512, %v1561
      %v1568 = vadd.f32 %v1548, %v1562
      %v1569 = vadd.f32 %v1549, %v1563
      %v1570 = vadd.f32 %v1550, %v1564
      %v1571 = vadd.f32 %v1551, %v1565
      %v1572 = vadd.f32 %v1552, %v1566
      %v1573 = vadd.f32 %v1553, %v1567
      %v1574 = vlaneseq
      %v1575 = vshrl.u32 %v1574, 7
      %v1576 = vsub.s32 2, %v1575
      %v1577 = vrot.slane %v1376, %v1576
      %v1578 = vlaneseq
      %v1579 = vshrl.u32 %v1578, 7
      %v1580 = vsub.s32 2, %v1579
      %v1581 = vrot.slane %v1377, %v1580
      %v1582 = vmul.f32 %v536, %v1577
      %v1583 = vmul.f32 %v536, %v1581
      %v1584 = vmul.f32 %v540, %v1577
      %v1585 = vmul.f32 %v540, %v1581
      %v1586 = vmul.f32 %v544, %v1577
      %v1587 = vmul.f32 %v544, %v1581
      %v1588 = vadd.f32 %v1568, %v1582
      %v1589 = vadd.f32 %v1569, %v1583
      %v1590 = vadd.f32 %v1570, %v1584
      %v1591 = vadd.f32 %v1571, %v1585
      %v1592 = vadd.f32 %v1572, %v1586
      %v1593 = vadd.f32 %v1573, %v1587
      %v1594 = vlaneseq
      %v1595 = vshrl.u32 %v1594, 7
      %v1596 = vsub.s32 3, %v1595
      %v1597 = vrot.slane %v1376, %v1596
      %v1598 = vlaneseq
      %v1599 = vshrl.u32 %v1598, 7
      %v1600 = vsub.s32 3, %v1599
      %v1601 = vrot.slane %v1377, %v1600
      %v1602 = vmul.f32 %v568, %v1597
      %v1603 = vmul.f32 %v568, %v1601
      %v1604 = vmul.f32 %v572, %v1597
      %v1605 = vmul.f32 %v572, %v1601
      %v1606 = vmul.f32 %v576, %v1597
      %v1607 = vmul.f32 %v576, %v1601
      %v1608 = vadd.f32 %v1588, %v1602
      %v1609 = vadd.f32 %v1589, %v1603
      %v1610 = vadd.f32 %v1590, %v1604
      %v1611 = vadd.f32 %v1591, %v1605
      %v1612 = vadd.f32 %v1592, %v1606
      %v1613 = vadd.f32 %v1593, %v1607
      %v1614 = vlaneseq
      %v1615 = vshrl.u32 %v1614, 7
      %v1616 = vsub.s32 4, %v1615
      %v1617 = vrot.slane %v1376, %v1616
      %v1618 = vlaneseq
      %v1619 = vshrl.u32 %v1618, 7
      %v1620 = vsub.s32 4, %v1619
      %v1621 = vrot.slane %v1377, %v1620
      %v1622 = vmul.f32 %v600, %v1617
      %v1623 = vmul.f32 %v600, %v1621
      %v1624 = vmul.f32 %v604, %v1617
      %v1625 = vmul.f32 %v604, %v1621
      %v1626 = vmul.f32 %v608, %v1617
      %v1627 = vmul.f32 %v608, %v1621
      %v1628 = vadd.f32 %v1608, %v1622
      %v1629 = vadd.f32 %v1609, %v1623
      %v1630 = vadd.f32 %v1610, %v1624
      %v1631 = vadd.f32 %v1611, %v1625
      %v1632 = vadd.f32 %v1612, %v1626
      %v1633 = vadd.f32 %v1613, %v1627
      %v1634 = vlaneseq
      %v1635 = vshrl.u32 %v1634, 7
      %v1636 = vsub.s32 5, %v1635
      %v1637 = vrot.slane %v1376, %v1636
      %v1638 = vlaneseq
      %v1639 = vshrl.u32 %v1638, 7
      %v1640 = vsub.s32 5, %v1639
      %v1641 = vrot.slane %v1377, %v1640
      %v1642 = vmul.f32 %v632, %v1637
      %v1643 = vmul.f32 %v632, %v1641
      %v1644 = vmul.f32 %v636, %v1637
      %v1645 = vmul.f32 %v636, %v1641
      %v1646 = vmul.f32 %v640, %v1637
      %v1647 = vmul.f32 %v640, %v1641
      %v1648 = vadd.f32 %v1628, %v1642
      %v1649 = vadd.f32 %v1629, %v1643
      %v1650 = vadd.f32 %v1630, %v1644
      %v1651 = vadd.f32 %v1631, %v1645
      %v1652 = vadd.f32 %v1632, %v1646
      %v1653 = vadd.f32 %v1633, %v1647
      %v1654 = vlaneseq
      %v1655 = vshrl.u32 %v1654, 7
      %v1656 = vsub.s32 6, %v1655
      %v1657 = vrot.slane %v1376, %v1656
      %v1658 = vlaneseq
      %v1659 = vshrl.u32 %v1658, 7
      %v1660 = vsub.s32 6, %v1659
      %v1661 = vrot.slane %v1377, %v1660
      %v1662 = vmul.f32 %v664, %v1657
      %v1663 = vmul.f32 %v664, %v1661
      %v1664 = vmul.f32 %v668, %v1657
      %v1665 = vmul.f32 %v668, %v1661
      %v1666 = vmul.f32 %v672, %v1657
      %v1667 = vmul.f32 %v672, %v1661
      %v1668 = vadd.f32 %v1648, %v1662
      %v1669 = vadd.f32 %v1649, %v1663
      %v1670 = vadd.f32 %v1650, %v1664
      %v1671 = vadd.f32 %v1651, %v1665
      %v1672 = vadd.f32 %v1652, %v1666
      %v1673 = vadd.f32 %v1653, %v1667
      %v1674 = vlaneseq
      %v1675 = vshrl.u32 %v1674, 7
      %v1676 = vsub.s32 7, %v1675
      %v1677 = vrot.slane %v1376, %v1676
      %v1678 = vlaneseq
      %v1679 = vshrl.u32 %v1678, 7
      %v1680 = vsub.s32 7, %v1679
      %v1681 = vrot.slane %v1377, %v1680
      %v1682 = vmul.f32 %v696, %v1677
      %v1683 = vmul.f32 %v696, %v1681
      %v1684 = vmul.f32 %v700, %v1677
      %v1685 = vmul.f32 %v700, %v1681
      %v1686 = vmul.f32 %v704, %v1677
      %v1687 = vmul.f32 %v704, %v1681
      %v1688 = vadd.f32 %v1668, %v1682
      %v1689 = vadd.f32 %v1669, %v1683
      %v1690 = vadd.f32 %v1670, %v1684
      %v1691 = vadd.f32 %v1671, %v1685
      %v1692 = vadd.f32 %v1672, %v1686
      %v1693 = vadd.f32 %v1673, %v1687
      %v1694 = vlaneseq
      %v1695 = vshrl.u32 %v1694, 7
      %v1696 = vsub.s32 0, %v1695
      %v1697 = vrot.slane %v1378, %v1696
      %v1698 = vlaneseq
      %v1699 = vshrl.u32 %v1698, 7
      %v1700 = vsub.s32 0, %v1699
      %v1701 = vrot.slane %v1379, %v1700
      %v1702 = vmul.f32 %v728, %v1697
      %v1703 = vmul.f32 %v728, %v1701
      %v1704 = vmul.f32 %v732, %v1697
      %v1705 = vmul.f32 %v732, %v1701
      %v1706 = vmul.f32 %v736, %v1697
      %v1707 = vmul.f32 %v736, %v1701
      %v1708 = vadd.f32 %v1688, %v1702
      %v1709 = vadd.f32 %v1689, %v1703
      %v1710 = vadd.f32 %v1690, %v1704
      %v1711 = vadd.f32 %v1691, %v1705
      %v1712 = vadd.f32 %v1692, %v1706
      %v1713 = vadd.f32 %v1693, %v1707
      %v1714 = vlaneseq
      %v1715 = vshrl.u32 %v1714, 7
      %v1716 = vsub.s32 1, %v1715
      %v1717 = vrot.slane %v1378, %v1716
      %v1718 = vlaneseq
      %v1719 = vshrl.u32 %v1718, 7
      %v1720 = vsub.s32 1, %v1719
      %v1721 = vrot.slane %v1379, %v1720
      %v1722 = vmul.f32 %v760, %v1717
      %v1723 = vmul.f32 %v760, %v1721
      %v1724 = vmul.f32 %v764, %v1717
      %v1725 = vmul.f32 %v764, %v1721
      %v1726 = vmul.f32 %v768, %v1717
      %v1727 = vmul.f32 %v768, %v1721
      %v1728 = vadd.f32 %v1708, %v1722
      %v1729 = vadd.f32 %v1709, %v1723
      %v1730 = vadd.f32 %v1710, %v1724
      %v1731 = vadd.f32 %v1711, %v1725
      %v1732 = vadd.f32 %v1712, %v1726
      %v1733 = vadd.f32 %v1713, %v1727
      %v1734 = vlaneseq
      %v1735 = vshrl.u32 %v1734, 7
      %v1736 = vsub.s32 2, %v1735
      %v1737 = vrot.slane %v1378, %v1736
      %v1738 = vlaneseq
      %v1739 = vshrl.u32 %v1738, 7
      %v1740 = vsub.s32 2, %v1739
      %v1741 = vrot.slane %v1379, %v1740
      %v1742 = vmul.f32 %v792, %v1737
      %v1743 = vmul.f32 %v792, %v1741
      %v1744 = vmul.f32 %v796, %v1737
      %v1745 = vmul.f32 %v796, %v1741
      %v1746 = vmul.f32 %v800, %v1737
      %v1747 = vmul.f32 %v800, %v1741
      %v1748 = vadd.f32 %v1728, %v1742
      %v1749 = vadd.f32 %v1729, %v1743
      %v1750 = vadd.f32 %v1730, %v1744
      %v1751 = vadd.f32 %v1731, %v1745
      %v1752 = vadd.f32 %v1732, %v1746
      %v1753 = vadd.f32 %v1733, %v1747
      %v1754 = vlaneseq
      %v1755 = vshrl.u32 %v1754, 7
      %v1756 = vsub.s32 3, %v1755
      %v1757 = vrot.slane %v1378, %v1756
      %v1758 = vlaneseq
      %v1759 = vshrl.u32 %v1758, 7
      %v1760 = vsub.s32 3, %v1759
      %v1761 = vrot.slane %v1379, %v1760
      %v1762 = vmul.f32 %v824, %v1757
      %v1763 = vmul.f32 %v824, %v1761
      %v1764 = vmul.f32 %v828, %v1757
      %v1765 = vmul.f32 %v828, %v1761
      %v1766 = vmul.f32 %v832, %v1757
      %v1767 = vmul.f32 %v832, %v1761
      %v1768 = vadd.f32 %v1748, %v1762
      %v1769 = vadd.f32 %v1749, %v1763
      %v1770 = vadd.f32 %v1750, %v1764
      %v1771 = vadd.f32 %v1751, %v1765
      %v1772 = vadd.f32 %v1752, %v1766
      %v1773 = vadd.f32 %v1753, %v1767
      %v1774 = vlaneseq
      %v1775 = vshrl.u32 %v1774, 7
      %v1776 = vsub.s32 4, %v1775
      %v1777 = vrot.slane %v1378, %v1776
      %v1778 = vlaneseq
      %v1779 = vshrl.u32 %v1778, 7
      %v1780 = vsub.s32 4, %v1779
      %v1781 = vrot.slane %v1379, %v1780
      %v1782 = vmul.f32 %v856, %v1777
      %v1783 = vmul.f32 %v856, %v1781
      %v1784 = vmul.f32 %v860, %v1777
      %v1785 = vmul.f32 %v860, %v1781
      %v1786 = vmul.f32 %v864, %v1777
      %v1787 = vmul.f32 %v864, %v1781
      %v1788 = vadd.f32 %v1768, %v1782
      %v1789 = vadd.f32 %v1769, %v1783
      %v1790 = vadd.f32 %v1770, %v1784
      %v1791 = vadd.f32 %v1771, %v1785
      %v1792 = vadd.f32 %v1772, %v1786
      %v1793 = vadd.f32 %v1773, %v1787
      %v1794 = vlaneseq
      %v1795 = vshrl.u32 %v1794, 7
      %v1796 = vsub.s32 5, %v1795
      %v1797 = vrot.slane %v1378, %v1796
      %v1798 = vlaneseq
      %v1799 = vshrl.u32 %v1798, 7
      %v1800 = vsub.s32 5, %v1799
      %v1801 = vrot.slane %v1379, %v1800
      %v1802 = vmul.f32 %v888, %v1797
      %v1803 = vmul.f32 %v888, %v1801
      %v1804 = vmul.f32 %v892, %v1797
      %v1805 = vmul.f32 %v892, %v1801
      %v1806 = vmul.f32 %v896, %v1797
      %v1807 = vmul.f32 %v896, %v1801
      %v1808 = vadd.f32 %v1788, %v1802
      %v1809 = vadd.f32 %v1789, %v1803
      %v1810 = vadd.f32 %v1790, %v1804
      %v1811 = vadd.f32 %v1791, %v1805
      %v1812 = vadd.f32 %v1792, %v1806
      %v1813 = vadd.f32 %v1793, %v1807
      %v1814 = vlaneseq
      %v1815 = vshrl.u32 %v1814, 7
      %v1816 = vsub.s32 6, %v1815
      %v1817 = vrot.slane %v1378, %v1816
      %v1818 = vlaneseq
      %v1819 = vshrl.u32 %v1818, 7
      %v1820 = vsub.s32 6, %v1819
      %v1821 = vrot.slane %v1379, %v1820
      %v1822 = vmul.f32 %v920, %v1817
      %v1823 = vmul.f32 %v920, %v1821
      %v1824 = vmul.f32 %v924, %v1817
      %v1825 = vmul.f32 %v924, %v1821
      %v1826 = vmul.f32 %v928, %v1817
      %v1827 = vmul.f32 %v928, %v1821
      %v1828 = vadd.f32 %v1808, %v1822
      %v1829 = vadd.f32 %v1809, %v1823
      %v1830 = vadd.f32 %v1810, %v1824
      %v1831 = vadd.f32 %v1811, %v1825
      %v1832 = vadd.f32 %v1812, %v1826
      %v1833 = vadd.f32 %v1813, %v1827
      %v1834 = vlaneseq
      %v1835 = vshrl.u32 %v1834, 7
      %v1836 = vsub.s32 7, %v1835
      %v1837 = vrot.slane %v1378, %v1836
      %v1838 = vlaneseq
      %v1839 = vshrl.u32 %v1838, 7
      %v1840 = vsub.s32 7, %v1839
      %v1841 = vrot.slane %v1379, %v1840
      %v1842 = vmul.f32 %v952, %v1837
      %v1843 = vmul.f32 %v952, %v1841
      %v1844 = vmul.f32 %v956, %v1837
      %v1845 = vmul.f32 %v956, %v1841
      %v1846 = vmul.f32 %v960, %v1837
      %v1847 = vmul.f32 %v960, %v1841
      %v1848 = vadd.f32 %v1828, %v1842
      %v1849 = vadd.f32 %v1829, %v1843
      %v1850 = vadd.f32 %v1830, %v1844
      %v1851 = vadd.f32 %v1831, %v1845
      %v1852 = vadd.f32 %v1832, %v1846
      %v1853 = vadd.f32 %v1833, %v1847
      %v1854 = vadd.f32 %v1848, %v984
      %v1855 = vadd.f32 %v1849, %v984
      %v1856 = vadd.f32 %v1850, %v988
      %v1857 = vadd.f32 %v1851, %v988
      %v1858 = vadd.f32 %v1852, %v992
      %v1859 = vadd.f32 %v1853, %v992
      %v1860 = vadd.f32 %v1854, %v1855
      %1861 = vadd.xlane.f32.xlu0 %v1860
      %v1862 = vpop.xlane.xlu0 %1861
      %v1863 = vadd.f32 %v1856, %v1857
      %1864 = vadd.xlane.f32.xlu0 %v1863
      %v1865 = vpop.xlane.xlu0 %1864
      %v1866 = vadd.f32 %v1858, %v1859
      %1867 = vadd.xlane.f32.xlu0 %v1866
      %v1868 = vpop.xlane.xlu0 %1867
      %v1869 = vmul.f32 %v1854, %v1854
      %v1870 = vmul.f32 %v1855, %v1855
      %v1871 = vmul.f32 %v1856, %v1856
      %v1872 = vmul.f32 %v1857, %v1857
      %v1873 = vmul.f32 %v1858, %v1858
      %v1874 = vmul.f32 %v1859, %v1859
      %v1875 = vadd.f32 %v1869, %v1870
      %1876 = vadd.xlane.f32.xlu0 %v1875
      %v1877 = vpop.xlane.xlu0 %1876
      %v1878 = vadd.f32 %v1871, %v1872
      %1879 = vadd.xlane.f32.xlu0 %v1878
      %v1880 = vpop.xlane.xlu0 %1879
      %v1881 = vadd.f32 %v1873, %v1874
      %1882 = vadd.xlane.f32.xlu0 %v1881
      %v1883 = vpop.xlane.xlu0 %1882
      %v1884 = vmul.f32 %v208, %v1862
      %v1885 = vmul.f32 %v209, %v1865
      %v1886 = vmul.f32 %v210, %v1868
      %v1887 = vsel %vm1027, %v1884, 0.0
      %v1888 = vsel %vm1027, %v1885, 0.0
      %v1889 = vadd.f32 %v1887, %v1888
      %v1890 = vsel %vm1027, %v1886, 0.0
      %v1891 = vadd.f32 %v1889, %v1890
      %v1892 = vrot.slane %v1891, 4
      %v1893 = vadd.f32 %v1891, %v1892
      %v1894 = vrot.slane %v1893, 2
      %v1895 = vadd.f32 %v1893, %v1894
      %v1896 = vrot.slane %v1895, 1
      %v1897 = vadd.f32 %v1895, %v1896
      %v1898 = vmul.f32 %v1897, 0.0006510417
      %v1899 = vmul.f32 %v208, %v1877
      %v1900 = vmul.f32 %v209, %v1880
      %v1901 = vmul.f32 %v210, %v1883
      %v1902 = vsel %vm1027, %v1899, 0.0
      %v1903 = vsel %vm1027, %v1900, 0.0
      %v1904 = vadd.f32 %v1902, %v1903
      %v1905 = vsel %vm1027, %v1901, 0.0
      %v1906 = vadd.f32 %v1904, %v1905
      %v1907 = vrot.slane %v1906, 4
      %v1908 = vadd.f32 %v1906, %v1907
      %v1909 = vrot.slane %v1908, 2
      %v1910 = vadd.f32 %v1908, %v1909
      %v1911 = vrot.slane %v1910, 1
      %v1912 = vadd.f32 %v1910, %v1911
      %v1913 = vmul.f32 %v1912, 0.0006510417
      %v1914 = vmul.f32 %v1898, %v1898
      %v1915 = vsub.f32 %v1913, %v1914
      %v1916 = vadd.f32 %v1915, 1e-05
      %v1917 = vrsqrt.pop %v1916
      %v1918 = vmul.f32 %v208, %v1898
      %v1919 = vmul.f32 %v209, %v1898
      %v1920 = vmul.f32 %v210, %v1898
      %1924 = vrot.lane.b32.xlu0 %v1918, 101
      %v1925 = vpop.permute.xlu0 %1924
      %1926 = vrot.lane.b32.xlu0 %v1919, 101
      %v1927 = vpop.permute.xlu0 %1926
      %1928 = vrot.lane.b32.xlu0 %v1920, 101
      %v1929 = vpop.permute.xlu0 %1928
      %v1933 = vsel %vm1074, %v1925, 0.0
      %1934 = vadd.xlane.f32.xlu0 %v1933
      %v1935 = vpop.xlane.xlu0 %1934
      %v1936 = vsel %vm1074, %v1927, 0.0
      %1937 = vadd.xlane.f32.xlu0 %v1936
      %v1938 = vpop.xlane.xlu0 %1937
      %v1939 = vsel %vm1074, %v1929, 0.0
      %1940 = vadd.xlane.f32.xlu0 %v1939
      %v1941 = vpop.xlane.xlu0 %1940
      %v1942 = vmul.f32 %v208, %v1917
      %v1943 = vmul.f32 %v209, %v1917
      %v1944 = vmul.f32 %v210, %v1917
      %1948 = vrot.lane.b32.xlu0 %v1942, 101
      %v1949 = vpop.permute.xlu0 %1948
      %1950 = vrot.lane.b32.xlu0 %v1943, 101
      %v1951 = vpop.permute.xlu0 %1950
      %1952 = vrot.lane.b32.xlu0 %v1944, 101
      %v1953 = vpop.permute.xlu0 %1952
      %v1957 = vsel %vm1074, %v1949, 0.0
      %1958 = vadd.xlane.f32.xlu0 %v1957
      %v1959 = vpop.xlane.xlu0 %1958
      %v1960 = vsel %vm1074, %v1951, 0.0
      %1961 = vadd.xlane.f32.xlu0 %v1960
      %v1962 = vpop.xlane.xlu0 %1961
      %v1963 = vsel %vm1074, %v1953, 0.0
      %1964 = vadd.xlane.f32.xlu0 %v1963
      %v1965 = vpop.xlane.xlu0 %1964
      %v1966 = vsub.f32 %v1854, %v1935
      %v1967 = vsub.f32 %v1855, %v1935
      %v1968 = vsub.f32 %v1856, %v1938
      %v1969 = vsub.f32 %v1857, %v1938
      %v1970 = vsub.f32 %v1858, %v1941
      %v1971 = vsub.f32 %v1859, %v1941
      %v1972 = vmul.f32 %v1959, %v208
      %v1973 = vmul.f32 %v1962, %v209
      %v1974 = vmul.f32 %v1965, %v210
      %1976 = vset.pattern.permute.xlu0 25
      %1977 = vperm.xlu0 %1976, %v1972
      %v1978 = vpop.permute.xlu0 %1977
      %1981 = vset.pattern.permute.xlu0 25
      %1982 = vperm.xlu0 %1981, %v1973
      %v1983 = vpop.permute.xlu0 %1982
      %1986 = vset.pattern.permute.xlu0 25
      %1987 = vperm.xlu0 %1986, %v1974
      %v1988 = vpop.permute.xlu0 %1987
      %v1990 = vmul.f32 %v1966, %v1978
      %v1991 = vmul.f32 %v1967, %v1978
      %v1992 = vmul.f32 %v1968, %v1983
      %v1993 = vmul.f32 %v1969, %v1983
      %v1994 = vmul.f32 %v1970, %v1988
      %v1995 = vmul.f32 %v1971, %v1988
      %v1996 = vadd.f32 %v1990, %v1140
      %v1997 = vadd.f32 %v1991, %v1140
      %v1998 = vadd.f32 %v1992, %v1144
      %v1999 = vadd.f32 %v1993, %v1144
      %v2000 = vadd.f32 %v1994, %v1148
      %v2001 = vadd.f32 %v1995, %v1148
      %v2002 = vadd.f32 %v1996, 3.0
      %v2003 = vadd.f32 %v1997, 3.0
      %v2004 = vadd.f32 %v1998, 3.0
      %v2005 = vadd.f32 %v1999, 3.0
      %v2006 = vadd.f32 %v2000, 3.0
      %v2007 = vadd.f32 %v2001, 3.0
      %v2008 = vmax.f32 %v2002, 0.0
      %v2009 = vmax.f32 %v2003, 0.0
      %v2010 = vmax.f32 %v2004, 0.0
      %v2011 = vmax.f32 %v2005, 0.0
      %v2012 = vmax.f32 %v2006, 0.0
      %v2013 = vmax.f32 %v2007, 0.0
      %v2014 = vmin.f32 %v2008, 6.0
      %v2015 = vmin.f32 %v2009, 6.0
      %v2016 = vmin.f32 %v2010, 6.0
      %v2017 = vmin.f32 %v2011, 6.0
      %v2018 = vmin.f32 %v2012, 6.0
      %v2019 = vmin.f32 %v2013, 6.0
      %v2020 = vmul.f32 %v1996, %v2014
      %v2021 = vmul.f32 %v1997, %v2015
      %v2022 = vmul.f32 %v1998, %v2016
      %v2023 = vmul.f32 %v1999, %v2017
      %v2024 = vmul.f32 %v2000, %v2018
      %v2025 = vmul.f32 %v2001, %v2019
      %v2026 = vmul.f32 %v2020, 0.16666667
      %v2027 = vmul.f32 %v2021, 0.16666667
      %v2028 = vmul.f32 %v2022, 0.16666667
      %v2029 = vmul.f32 %v2023, 0.16666667
      %v2030 = vmul.f32 %v2024, 0.16666667
      %v2031 = vmul.f32 %v2025, 0.16666667
      %v2032 = vmax.f32 %v1996, 0.0
      %v2033 = vmax.f32 %v1997, 0.0
      %v2034 = vmax.f32 %v1998, 0.0
      %v2035 = vmax.f32 %v1999, 0.0
      %v2036 = vmax.f32 %v2000, 0.0
      %v2037 = vmax.f32 %v2001, 0.0
      %v2038 = vmin.f32 %v2032, 6.0
      %v2039 = vmin.f32 %v2033, 6.0
      %v2040 = vmin.f32 %v2034, 6.0
      %v2041 = vmin.f32 %v2035, 6.0
      %v2042 = vmin.f32 %v2036, 6.0
      %v2043 = vmin.f32 %v2037, 6.0
      %v2044 = vmin.f32 %v1996, 0.0
      %v2045 = vmin.f32 %v1997, 0.0
      %v2046 = vmin.f32 %v1998, 0.0
      %v2047 = vmin.f32 %v1999, 0.0
      %v2048 = vmin.f32 %v2000, 0.0
      %v2049 = vmin.f32 %v2001, 0.0
      %v2050 = vmul.f32 %v2044, 0.01
      %v2051 = vmul.f32 %v2045, 0.01
      %v2052 = vmul.f32 %v2046, 0.01
      %v2053 = vmul.f32 %v2047, 0.01
      %v2054 = vmul.f32 %v2048, 0.01
      %v2055 = vmul.f32 %v2049, 0.01
      %v2056 = vadd.f32 %v2038, %v2050
      %v2057 = vadd.f32 %v2039, %v2051
      %v2058 = vadd.f32 %v2040, %v2052
      %v2059 = vadd.f32 %v2041, %v2053
      %v2060 = vadd.f32 %v2042, %v2054
      %v2061 = vadd.f32 %v2043, %v2055
      %vm2062 = vcmp.ge.f32.partialorder %v1996, -3.0
      %vm2063 = vcmp.ge.f32.partialorder %v1997, -3.0
      %vm2064 = vcmp.ge.f32.partialorder %v1998, -3.0
      %vm2065 = vcmp.ge.f32.partialorder %v1999, -3.0
      %vm2066 = vcmp.ge.f32.partialorder %v2000, -3.0
      %vm2067 = vcmp.ge.f32.partialorder %v2001, -3.0
      %vm2068 = vcmp.le.f32.partialorder %v1996, 3.0
      %vm2069 = vcmp.le.f32.partialorder %v1997, 3.0
      %vm2070 = vcmp.le.f32.partialorder %v1998, 3.0
      %vm2071 = vcmp.le.f32.partialorder %v1999, 3.0
      %vm2072 = vcmp.le.f32.partialorder %v2000, 3.0
      %vm2073 = vcmp.le.f32.partialorder %v2001, 3.0
      %vm2074 = vmand %vm2062, %vm2068
      %vm2075 = vmand %vm2063, %vm2069
      %vm2076 = vmand %vm2064, %vm2070
      %vm2077 = vmand %vm2065, %vm2071
      %vm2078 = vmand %vm2066, %vm2072
      %vm2079 = vmand %vm2067, %vm2073
      %v2080 = vsel %vm2074, %v2026, %v2056
      %v2081 = vsel %vm2075, %v2027, %v2057
      %v2082 = vsel %vm2076, %v2028, %v2058
      %v2083 = vsel %vm2077, %v2029, %v2059
      %v2084 = vsel %vm2078, %v2030, %v2060
      %v2085 = vsel %vm2079, %v2031, %v2061
      %v2086 = vadd.f32 %v2080, %v2081
      %2087 = vadd.xlane.f32.xlu0 %v2086
      %v2088 = vpop.xlane.xlu0 %2087
      %v2089 = vadd.f32 %v2082, %v2083
      %2090 = vadd.xlane.f32.xlu0 %v2089
      %v2091 = vpop.xlane.xlu0 %2090
      %v2092 = vadd.f32 %v2084, %v2085
      %2093 = vadd.xlane.f32.xlu0 %v2092
      %v2094 = vpop.xlane.xlu0 %2093
      %v2095 = vmul.f32 %v2088, 0.00390625
      %v2096 = vmul.f32 %v2091, 0.00390625
      %v2097 = vmul.f32 %v2094, 0.00390625
      %v2098 = vmul.f32 %v208, %v2095
      %v2099 = vmul.f32 %v209, %v2096
      %v2100 = vmul.f32 %v210, %v2097
      %v2101 = vsel %vm1255, %v2098, 0.0
      %v2102 = vsel %vm1255, %v2099, 0.0
      %v2103 = vadd.f32 %v2101, %v2102
      %v2104 = vsel %vm1255, %v2100, 0.0
      %v2105 = vadd.f32 %v2103, %v2104
      %v2106 = vrot.slane %v2105, 4
      %v2107 = vadd.f32 %v2105, %v2106
      %v2108 = vrot.slane %v2107, 2
      %v2109 = vadd.f32 %v2107, %v2108
      %v2110 = vrot.slane %v2109, 1
      %v2111 = vadd.f32 %v2109, %v2110
      %v2112 = vmax.f32 %v2111, 0.0
      %2114 = vrot.lane.b32.xlu0 %v2112, 8
      %v2115 = vpop.permute.xlu0 %2114
      %v2117 = vmul.f32 %v208, %v2115
      %v2118 = vmul.f32 %v209, %v2115
      %v2119 = vmul.f32 %v210, %v2115
      %2123 = vrot.lane.b32.xlu0 %v2117, 89
      %v2124 = vpop.permute.xlu0 %2123
      %2125 = vrot.lane.b32.xlu0 %v2118, 89
      %v2126 = vpop.permute.xlu0 %2125
      %2127 = vrot.lane.b32.xlu0 %v2119, 89
      %v2128 = vpop.permute.xlu0 %2127
      %v2132 = vsel %vm1287, %v2124, 0.0
      %2133 = vadd.xlane.f32.xlu0 %v2132
      %v2134 = vpop.xlane.xlu0 %2133
      %v2135 = vsel %vm1287, %v2126, 0.0
      %2136 = vadd.xlane.f32.xlu0 %v2135
      %v2137 = vpop.xlane.xlu0 %2136
      %v2138 = vsel %vm1287, %v2128, 0.0
      %2139 = vadd.xlane.f32.xlu0 %v2138
      %v2140 = vpop.xlane.xlu0 %2139
      %v2141 = vmul.f32 %v2134, 0.16666667
      %v2142 = vmul.f32 %v2137, 0.16666667
      %v2143 = vmul.f32 %v2140, 0.16666667
      %v2144 = vadd.f32 %v2141, 0.5
      %v2145 = vadd.f32 %v2142, 0.5
      %v2146 = vadd.f32 %v2143, 0.5
      %v2147 = vmax.f32 %v2144, 0.0
      %v2148 = vmax.f32 %v2145, 0.0
      %v2149 = vmax.f32 %v2146, 0.0
      %v2150 = vmin.f32 %v2147, 1.0
      %v2151 = vmin.f32 %v2148, 1.0
      %v2152 = vmin.f32 %v2149, 1.0
      %v2153 = vmul.f32 %v1311, %v2080
      %v2154 = vmul.f32 %v1311, %v2081
      %v2155 = vmul.f32 %v1315, %v2082
      %v2156 = vmul.f32 %v1315, %v2083
      %v2157 = vmul.f32 %v1319, %v2084
      %v2158 = vmul.f32 %v1319, %v2085
      %v2159 = vadd.f32 %v2153, %v2155
      %v2160 = vadd.f32 %v2159, %v2157
      %v2161 = vrot.slane %v2160, 4
      %v2162 = vadd.f32 %v2160, %v2161
      %v2163 = vrot.slane %v2162, 2
      %v2164 = vadd.f32 %v2162, %v2163
      %v2165 = vrot.slane %v2164, 1
      %v2166 = vadd.f32 %v2164, %v2165
      %v2167 = vadd.f32 %v2154, %v2156
      %v2168 = vadd.f32 %v2167, %v2158
      %v2169 = vrot.slane %v2168, 4
      %v2170 = vadd.f32 %v2168, %v2169
      %v2171 = vrot.slane %v2170, 2
      %v2172 = vadd.f32 %v2170, %v2171
      %v2173 = vrot.slane %v2172, 1
      %v2174 = vadd.f32 %v2172, %v2173
      %v2175 = vxor.u32 %v2166, 2147483648
      %v2176 = vxor.u32 %v2174, 2147483648
      %v2177 = vmul.f32 %v2175, 1.442695
      %v2178 = vpow.pop %v2177
      %v2179 = vmul.f32 %v2176, 1.442695
      %v2180 = vpow.pop %v2179
      %v2181 = vadd.f32 %v2178, 1.0
      %v2182 = vadd.f32 %v2180, 1.0
      %v2183 = vrcp.pop %v2181
      %v2184 = vmul.f32 1.0, %v2183
      %v2185 = vrcp.pop %v2182
      %v2186 = vmul.f32 1.0, %v2185
      %v2187 = vadd.f32 %v2150, %v2184
      %v2188 = vadd.f32 %v2150, %v2186
      %v2189 = vadd.f32 %v2151, %v2184
      %v2190 = vadd.f32 %v2151, %v2186
      %v2191 = vadd.f32 %v2152, %v2184
      %v2192 = vadd.f32 %v2152, %v2186
      %v2193 = vmul.f32 %v2080, %v2187
      %v2194 = vmul.f32 %v2081, %v2188
      %v2195 = vmul.f32 %v2082, %v2189
      %v2196 = vmul.f32 %v2083, %v2190
      %v2197 = vmul.f32 %v2084, %v2191
      %v2198 = vmul.f32 %v2085, %v2192
      %s2199 = scalar_lea.vmem %s206, 48
      %2200 = vst [vmem:[%s2199] sm:$0xff] %v2193
      %2201 = vst [vmem:[%s2199 + $0x8] sm:$0xff] %v2194
      %2202 = vst [vmem:[%s2199 + $0x10] sm:$0xff] %v2195
      %2203 = vst [vmem:[%s2199 + $0x18] sm:$0xff] %v2196
      %2204 = vst [vmem:[%s2199 + $0x20] sm:$0xff] %v2197
      %2205 = vst [vmem:[%s2199 + $0x28] sm:$0xff] %v2198
      %s2206 = smul.u32 2, %s18
      %p2207 = scmp.lt.s32.totalorder %s17, 2
      %s2208 = scalar_select %p2207, %s17, 2
      %p2209 = scmp.lt.s32.totalorder %s2206, 1
      %s2210 = scalar_select %p2209, %s2206, 1
      %s2211 = smul.addr %s2210, 6
      %s2212 = smul.addr %s2208, 12
      %s2213 = sadd.s32 %s2211, %s2212
      %s2214 = smul.addr %s2213, 8
      %s2215 = scalar_lea.vmem %s2, %s2214
      // Predicated region
      $region29: #{_lambda_.3} parent=27 // pred_check
        %p2216 = pneg %p99
      $region30: #{_lambda_.3} parent=27 // pred_check_branch
        %2218 = sbr.rel (%p2216) target = $region32
      $region31: #{_lambda_.3} parent=27 // pred_region
        %s2219 = smul.u32 2, %s18
      $region32: #{_lambda_.3} parent=27 // pred_fallthru
        _
    $region28: #{_lambda_.3} parent=5 // pred_fallthru
      _
    %p2220 = scmp.le.s32.totalorder 2, %s8
    // Predicated region
    $region33: #{_lambda_.3} parent=5 // pred_check
      %p2221 = pneg %p2220
    $region34: #{_lambda_.3} parent=5 // pred_check_branch
      %2223 = sbr.rel (%p2221) target = $region36
    $region35: #{_lambda_.3} parent=5 // pred_region
      %s2224 = ssub.s32 %s8, 2
      // Predicated region
      $region37: #{_lambda_.3} parent=35 // pred_check
        %p2225 = pneg %p105
      $region38: #{_lambda_.3} parent=35 // pred_check_branch
        %2227 = sbr.rel (%p2225) target = $region40
      $region39: #{_lambda_.3} parent=35 // pred_region
        %s2228 = smul.u32 2, %s20
        %p2229 = scmp.lt.s32.totalorder %s19, 2
        %s2230 = scalar_select %p2229, %s19, 2
        %p2231 = scmp.lt.s32.totalorder %s2228, 1
        %s2232 = scalar_select %p2231, %s2228, 1
        %s2233 = smul.addr %s2232, 6
        %s2234 = smul.addr %s2230, 12
        %s2235 = sadd.s32 %s2233, %s2234
        %s2236 = smul.addr %s2235, 8
        %s2237 = scalar_lea.vmem %s2, %s2236
      $region40: #{_lambda_.3} parent=35 // pred_fallthru
        _
    $region36: #{_lambda_.3} parent=5 // pred_fallthru
      _
  $region6: #{_lambda_.3} parent=0 // loop_footer
    %s12 = sadd.s32 1, %s8
  $region7: #{_lambda_.3} parent=0 // loop_footer_branch
    %7 = sbr.rel target = $region3
  $region8: #{_lambda_.3} parent=0 // loop_exit
    _

</llo_original>
